<compile_context>
chip_gen: v7x
topology: tpu7x:2x2x1
jax: 0.10.0
libtpu: 0.0.40
codegen_flags: <defaults>
</compile_context>

<pallas_src>
import jax
import jax.numpy as jnp
from jax.experimental import pallas as pl
from jax.experimental.pallas import tpu as pltpu

# ---------------- config (small synthetic BERT) ----------------
VOCAB = 100
MAX_POS = 64
HIDDEN = 32
NUM_HEADS = 4
HEAD_DIM = HIDDEN // NUM_HEADS
INTER = 64
NUM_LAYERS = 2
PRE_SEQ_LEN = 4
NUM_CLASS = 3
LN_EPS = 1e-12
MASK_BIAS = -1e9  # HF uses finfo.min / -10000; any large negative masks keys

SLAB_W = 128  # lane width of the packed slabs

# ---- bf16 weight-slab row layout (static, per layer: wqkv | wo | w1 | w2) ----
W_QKV_OFF = 0
W_WO_OFF = HIDDEN
W_W1_OFF = 2 * HIDDEN
W_W2_OFF = 3 * HIDDEN
W_LAYER_ROWS = 3 * HIDDEN + INTER
W_POOL_OFF = NUM_LAYERS * W_LAYER_ROWS
W_FC_OFF = W_POOL_OFF + HIDDEN
W_ROWS = W_FC_OFF + HIDDEN


def _round8(n):
    return ((n + 7) // 8) * 8


def _vslab_layout(B, S):
    """Row offsets inside the f32 constant slab (all blocks start 8-aligned)."""
    L = PRE_SEQ_LEN + S
    BL = B * L
    BLP = _round8(BL)
    lay = {}
    r = 0
    lay["embln"] = r; r += 8                 # rows 0..1: emb LN gamma, beta
    lay["place"] = r; r += BLP               # [BL,H] pos+tok at raw slots, 0 at prompt slots
    lay["base2"] = r; r += BLP               # [BL,H] (prefix-beta)+pos+tok / pos+tok
    lay["rowcode"] = r; r += BLP             # [BL,1] batch id per flattened row
    lay["firstsel"] = r; r += _round8(B)     # [B,BL] 0/1 selector of row b*L+P
    lay["layer"] = r; r += 8 * NUM_LAYERS    # 8 rows per layer (biases + LN vecs)
    lay["pool"] = r; r += 8                  # poolb, fcb
    lay["rows"] = _round8(r)
    return lay


# ---------------- in-kernel helpers ----------------
def _layer_norm(x, g, b):
    mu = jnp.mean(x, axis=-1, keepdims=True)
    var = jnp.mean((x - mu) ** 2, axis=-1, keepdims=True)
    return (x - mu) * jax.lax.rsqrt(var + LN_EPS) * g + b


def _gelu(x):
    # TODO(synk): HF BERT uses exact erf-based gelu; tanh approximation used for robust lowering.
    c = 0.7978845608028654  # sqrt(2/pi)
    return 0.5 * x * (1.0 + jnp.tanh(c * (x + 0.044715 * x * x * x)))


def _dot(a, b):
    """MXU matmul with bf16 operands and f32 accumulation."""
    return jnp.dot(a.astype(jnp.bfloat16), b.astype(jnp.bfloat16),
                   preferred_element_type=jnp.float32)


# ---------------- fused forward kernel (built per static (B, S)) ----------------
def _make_kernel(B, S):
    P = PRE_SEQ_LEN
    L = P + S
    BL = B * L
    H = HIDDEN
    lay = _vslab_layout(B, S)
    scale = 1.0 / (HEAD_DIM ** 0.5)

    def kernel(xw_ref, key_ref, wslab_ref, vslab_ref, o_ref):
        # xw_ref   : [BL, H]       f32  word embeddings placed at raw slots (prompt rows 0)
        # key_ref  : [1, BL]       f32  key code: batch id for valid keys, -1 for padding
        # wslab_ref: [W_ROWS, 128] bf16 packed weight matrices
        # vslab_ref: [V_ROWS, 128] f32  packed vectors / static constants
        # o_ref    : [B, C]        f32  class probabilities

        embln = vslab_ref[lay["embln"]:lay["embln"] + 2, :H]
        g_e, b_e = embln[0:1, :], embln[1:2, :]

        place = vslab_ref[lay["place"]:lay["place"] + BL, :H]
        base2 = vslab_ref[lay["base2"]:lay["base2"] + BL, :H]

        # --- BertEmbeddings(input_ids): word + pos + tok -> LayerNorm.
        # Prompt rows of (xw + place) are exactly zero -> LN == beta; beta is
        # pre-subtracted from the prompt rows of base2, so the concat([prompts, raw])
        # + pos + tok -> LayerNorm of the second embedding pass is exact.
        raw = _layer_norm(xw_ref[...] + place, g_e, b_e)
        x = _layer_norm(raw + base2, g_e, b_e)
        # TODO(synk): embedding dropout omitted (inference => identity)

        # --- additive attention bias: same-batch keys with mask==1 get 0, else -1e9 ---
        rowcode = vslab_ref[lay["rowcode"]:lay["rowcode"] + BL, 0:1]    # [BL, 1]
        bias = jnp.where(rowcode == key_ref[...], 0.0, MASK_BIAS)       # [BL, BL]

        # --- BertEncoder (layers unrolled, weights resident in VMEM) ---
        for layer in range(NUM_LAYERS):
            wb = layer * W_LAYER_ROWS
            wqkv = wslab_ref[wb + W_QKV_OFF:wb + W_QKV_OFF + H, :3 * H]
            wo = wslab_ref[wb + W_WO_OFF:wb + W_WO_OFF + H, :H]
            w1 = wslab_ref[wb + W_W1_OFF:wb + W_W1_OFF + H, :INTER]
            w2 = wslab_ref[wb + W_W2_OFF:wb + W_W2_OFF + INTER, :H]

            lvec = vslab_ref[lay["layer"] + 8 * layer:lay["layer"] + 8 * layer + 8, :]
            bqkv = lvec[0:1, :3 * H]
            b1 = lvec[1:2, :INTER]
            bo = lvec[2:3, :H]
            g1, be1 = lvec[3:4, :H], lvec[4:5, :H]
            b2 = lvec[5:6, :H]
            g2, be2 = lvec[6:7, :H], lvec[7:8, :H]

            qkv = _dot(x, wqkv) + bqkv                                   # [BL, 3H] f32
            q = (qkv[:, 0 * H:1 * H] * scale).astype(jnp.bfloat16)       # cast once
            k = qkv[:, 1 * H:2 * H].astype(jnp.bfloat16)
            v = qkv[:, 2 * H:3 * H].astype(jnp.bfloat16)

            ctx_heads = []
            for h in range(NUM_HEADS):
                sl = slice(h * HEAD_DIM, (h + 1) * HEAD_DIM)
                # scores over the whole flattened batch; cross-batch / padded
                # entries are masked by the additive bias
                s = jax.lax.dot_general(q[:, sl], k[:, sl],
                                        (((1,), (1,)), ((), ())),
                                        preferred_element_type=jnp.float32)
                s = s + bias
                s = s - jnp.max(s, axis=-1, keepdims=True)
                p = jnp.exp(s)
                p = p * pl.reciprocal(jnp.sum(p, axis=-1, keepdims=True),
                                      approx=True)
                # TODO(synk): attention-probs dropout omitted (inference => identity)
                ctx_heads.append(_dot(p, v[:, sl]))                      # [BL, HD]
            ctx = jnp.concatenate(ctx_heads, axis=1)                     # [BL, H]
            attn = _dot(ctx, wo) + bo                                    # single W_o matmul
            h1 = _layer_norm(x + attn, g1, be1)

            inter = _gelu(_dot(h1, w1) + b1)                             # [BL, INTER]
            ffn = _dot(inter, w2) + b2                                   # [BL, H]
            x = _layer_norm(h1 + ffn, g2, be2)

        # --- hidden state at sequence position pre_seq_len, pooler, fc, softmax ---
        firstsel = vslab_ref[lay["firstsel"]:lay["firstsel"] + B, :BL]   # [B, BL] 0/1
        first = _dot(firstsel, x)                                        # [B, H]

        pool = vslab_ref[lay["pool"]:lay["pool"] + 2, :]
        poolb = pool[0:1, :H]
        fcb = pool[1:2, :NUM_CLASS]
        poolw = wslab_ref[W_POOL_OFF:W_POOL_OFF + H, :H]
        fcw = wslab_ref[W_FC_OFF:W_FC_OFF + H, :NUM_CLASS]

        pooled = jnp.tanh(_dot(first, poolw) + poolb)
        # TODO(synk): hidden dropout omitted (inference => identity)
        logits = _dot(pooled, fcw) + fcb
        m = jnp.max(logits, axis=-1, keepdims=True)
        e = jnp.exp(logits - m)
        o_ref[...] = e / jnp.sum(e, axis=-1, keepdims=True)

    return kernel


# ---------------- one-time packing (hoisted out of the per-call path) ----------------
def _pack_params(params, B, S):
    f32, bf16 = jnp.float32, jnp.bfloat16
    P = PRE_SEQ_LEN
    L = P + S
    BL = B * L
    lay = _vslab_layout(B, S)

    def put(slab, r, mat):
        mat = jnp.asarray(mat, f32)
        if mat.ndim == 1:
            mat = mat[None, :]
        rr, cc = mat.shape
        return slab.at[r:r + rr, :cc].set(mat)

    # ---- bf16 weight slab: [W_ROWS, 128] ----
    w = jnp.zeros((W_ROWS, SLAB_W), f32)
    for i, lp in enumerate(params["layers"]):
        base = i * W_LAYER_ROWS
        wqkv = jnp.concatenate([lp["wq"], lp["wk"], lp["wv"]], axis=1)   # [H, 3H]
        w = put(w, base + W_QKV_OFF, wqkv)
        w = put(w, base + W_WO_OFF, lp["wo"])
        w = put(w, base + W_W1_OFF, lp["w1"])
        w = put(w, base + W_W2_OFF, lp["w2"])
    w = put(w, W_POOL_OFF, params["pool_w"])
    w = put(w, W_FC_OFF, params["fc_w"])
    wslab = w.astype(bf16)

    # ---- f32 constant slab: [V_ROWS, 128] ----
    v = jnp.zeros((lay["rows"], SLAB_W), f32)
    v = put(v, lay["embln"], jnp.stack([params["emb_ln_g"], params["emb_ln_b"]]))

    pos = params["pos_emb"]
    tok0 = params["tok_emb"][0][None, :]                                 # [1, H]

    # pos+tok at raw slots, zero at prompt slots (added before the 1st LayerNorm)
    place_one = jnp.concatenate(
        [jnp.zeros((P, HIDDEN), f32), pos[:S] + tok0], axis=0)           # [L, H]
    v = put(v, lay["place"], jnp.tile(place_one, (B, 1)))

    # second-pass additive constant: prefix+pos+tok at prompt rows (minus emb LN beta,
    # compensating LN(zero row)==beta from the first pass), pos+tok at raw rows
    prefix_rows = jnp.concatenate(
        [params["prefix_emb"] - params["emb_ln_b"][None, :],
         jnp.zeros((S, HIDDEN), f32)], axis=0)                           # [L, H]
    v = put(v, lay["base2"], jnp.tile(prefix_rows + pos[:L] + tok0, (B, 1)))

    # batch id per flattened row
    rowcode = (jnp.arange(BL) // L).astype(f32)[:, None]                 # [BL, 1]
    v = put(v, lay["rowcode"], rowcode)

    # 0/1 selector of the hidden state at sequence position pre_seq_len per batch
    firstsel = (jnp.arange(BL)[None, :] ==
                (jnp.arange(B) * L + P)[:, None]).astype(f32)            # [B, BL]
    v = put(v, lay["firstsel"], firstsel)

    for i, lp in enumerate(params["layers"]):
        base = lay["layer"] + 8 * i
        v = put(v, base + 0, jnp.concatenate([lp["bq"], lp["bk"], lp["bv"]]))
        v = put(v, base + 1, lp["b1"])
        v = put(v, base + 2, lp["bo"])
        v = put(v, base + 3, lp["ln1_g"])
        v = put(v, base + 4, lp["ln1_b"])
        v = put(v, base + 5, lp["b2"])
        v = put(v, base + 6, lp["ln2_g"])
        v = put(v, base + 7, lp["ln2_b"])

    v = put(v, lay["pool"] + 0, params["pool_b"])
    v = put(v, lay["pool"] + 1, params["fc_b"])

    return dict(word_table=params["word_emb"], wslab=wslab, vslab=v)


# ---------------- forward builder (packing once, light per-call wrapper) ----------------
def build_forward(params, B, S):
    f32 = jnp.float32
    P = PRE_SEQ_LEN
    L = P + S
    BL = B * L

    packed = _pack_params(params, B, S)
    kernel = _make_kernel(B, S)
    batch_ids = jnp.tile(jnp.arange(B, dtype=f32)[:, None], (1, L))      # [B, L] static

    def _full_spec(shape):
        nd = len(shape)
        return pl.BlockSpec(shape, lambda i: (0,) * nd)

    @jax.jit
    def forward(word_table, wslab, vslab, input_ids, input_mask):
        # token-id embedding gather stays in plain JAX; place raw tokens at slots P..L-1
        word = word_table[input_ids]                                     # [B, S, H]
        xw = jnp.pad(word, ((0, 0), (P, 0), (0, 0))).reshape(BL, HIDDEN)

        # key code per flattened key: batch id if the key is attendable (prompt or
        # unmasked token), -1 if padded out
        full = jnp.concatenate(
            [jnp.ones((B, P), f32), input_mask.astype(f32)], axis=1)     # [B, L]
        keycode = jnp.where(full > 0.5, batch_ids, -1.0).reshape(1, BL)

        args = (xw, keycode, wslab, vslab)
        return pl.pallas_call(
            kernel,
            out_shape=jax.ShapeDtypeStruct((B, NUM_CLASS), f32),
            grid=(1,),
            in_specs=[_full_spec(a.shape) for a in args],
            out_specs=_full_spec((B, NUM_CLASS)),
            compiler_params=pltpu.CompilerParams(
                dimension_semantics=("arbitrary",)),
        )(*args)

    def fwd(input_ids, input_mask, segment_ids=None):
        # segment_ids unused: token_type_ids defaults to None -> zeros in the reference
        del segment_ids
        return forward(packed["word_table"], packed["wslab"], packed["vslab"],
                       input_ids, input_mask)

    return fwd


# ---------------- parameters ----------------
def init_params(key):
    keys = jax.random.split(key, 6 + 6 * NUM_LAYERS)
    it = iter(range(len(keys)))

    def nrm(shape):
        return (0.02 * jax.random.normal(keys[next(it)], shape)).astype(jnp.float32)

    params = dict(
        word_emb=nrm((VOCAB, HIDDEN)),
        pos_emb=nrm((MAX_POS, HIDDEN)),
        tok_emb=nrm((2, HIDDEN)),
        emb_ln_g=jnp.ones((HIDDEN,), jnp.float32),
        emb_ln_b=jnp.zeros((HIDDEN,), jnp.float32),
        prefix_emb=nrm((PRE_SEQ_LEN, HIDDEN)),
        pool_w=nrm((HIDDEN, HIDDEN)),
        pool_b=jnp.zeros((HIDDEN,), jnp.float32),
        fc_w=nrm((HIDDEN, NUM_CLASS)),
        fc_b=jnp.zeros((NUM_CLASS,), jnp.float32),
        layers=[],
    )
    for _ in range(NUM_LAYERS):
        params["layers"].append(dict(
            wq=nrm((HIDDEN, HIDDEN)), bq=jnp.zeros((HIDDEN,), jnp.float32),
            wk=nrm((HIDDEN, HIDDEN)), bk=jnp.zeros((HIDDEN,), jnp.float32),
            wv=nrm((HIDDEN, HIDDEN)), bv=jnp.zeros((HIDDEN,), jnp.float32),
            wo=nrm((HIDDEN, HIDDEN)), bo=jnp.zeros((HIDDEN,), jnp.float32),
            ln1_g=jnp.ones((HIDDEN,), jnp.float32), ln1_b=jnp.zeros((HIDDEN,), jnp.float32),
            w1=nrm((HIDDEN, INTER)), b1=jnp.zeros((INTER,), jnp.float32),
            w2=nrm((INTER, HIDDEN)), b2=jnp.zeros((HIDDEN,), jnp.float32),
            ln2_g=jnp.ones((HIDDEN,), jnp.float32), ln2_b=jnp.zeros((HIDDEN,), jnp.float32),
        ))
    return params


if __name__ == "__main__":
    key = jax.random.PRNGKey(0)
    pkey, ikey = jax.random.split(key)
    params = init_params(pkey)

    B, S = 2, 8
    input_ids = jax.random.randint(ikey, (B, S), 0, VOCAB, dtype=jnp.int32)
    input_mask = jnp.ones((B, S), jnp.float32).at[1, S - 2:].set(0.0)  # pad a couple of tokens
    segment_ids = jnp.zeros((B, S), jnp.int32)

    fwd = build_forward(params, B, S)           # one-time packing, happens once here
    out = fwd(input_ids, input_mask, segment_ids)
    out = jax.block_until_ready(out)
    assert out.shape == (B, NUM_CLASS)
    assert bool(jnp.all(jnp.isfinite(out)))
    assert bool(jnp.allclose(out.sum(-1), 1.0, atol=1e-5))
    print("KERNEL_OK")
</pallas_src>

<mosaic_0001>
module attributes {stable_mosaic.version = 11 : i64} {
  func.func @kernel(%arg0: i32, %arg1: memref<24x32xf32, #tpu.memory_space<vmem>>, %arg2: memref<1x24xf32, #tpu.memory_space<vmem>>, %arg3: memref<384x128xbf16, #tpu.memory_space<vmem>>, %arg4: memref<112x128xf32, #tpu.memory_space<vmem>>, %arg5: memref<2x3xf32, #tpu.memory_space<vmem>>) attributes {dimension_semantics = [#tpu.dimension_semantics<arbitrary>], iteration_bounds = array<i64: 1>, scalar_prefetch = 0 : i64, scratch_operands = 0 : i64, tpu.core_type = #tpu.core_type<tc>, window_params = [{pipeline_mode = #tpu.pipeline_mode<synchronous>, transform_indices = @transform_0, window_bounds = array<i64: 24, 32>}, {pipeline_mode = #tpu.pipeline_mode<synchronous>, transform_indices = @transform_1, window_bounds = array<i64: 1, 24>}, {pipeline_mode = #tpu.pipeline_mode<synchronous>, transform_indices = @transform_2, window_bounds = array<i64: 384, 128>}, {pipeline_mode = #tpu.pipeline_mode<synchronous>, transform_indices = @transform_3, window_bounds = array<i64: 112, 128>}, {pipeline_mode = #tpu.pipeline_mode<synchronous>, transform_indices = @transform_4, window_bounds = array<i64: 2, 3>}]} {
    %c0 = arith.constant 0 : index
    %c0_0 = arith.constant 0 : index
    %0 = vector.load %arg4[%c0, %c0_0] : memref<112x128xf32, #tpu.memory_space<vmem>>, vector<2x32xf32>
    %1 = vector.extract_strided_slice %0 {offsets = [0, 0], sizes = [1, 32], strides = [1, 1]} : vector<2x32xf32> to vector<1x32xf32>
    %2 = vector.extract_strided_slice %0 {offsets = [1, 0], sizes = [1, 32], strides = [1, 1]} : vector<2x32xf32> to vector<1x32xf32>
    %c8 = arith.constant 8 : index
    %c0_1 = arith.constant 0 : index
    %3 = vector.load %arg4[%c8, %c0_1] : memref<112x128xf32, #tpu.memory_space<vmem>>, vector<24x32xf32>
    %c32 = arith.constant 32 : index
    %c0_2 = arith.constant 0 : index
    %4 = vector.load %arg4[%c32, %c0_2] : memref<112x128xf32, #tpu.memory_space<vmem>>, vector<24x32xf32>
    %c0_3 = arith.constant 0 : index
    %c0_4 = arith.constant 0 : index
    %5 = vector.load %arg1[%c0_3, %c0_4] : memref<24x32xf32, #tpu.memory_space<vmem>>, vector<24x32xf32>
    %6 = arith.addf %5, %3 : vector<24x32xf32>
    %cst = arith.constant dense<0.000000e+00> : vector<24xf32>
    %7 = vector.multi_reduction <add>, %6, %cst [1] : vector<24x32xf32> to vector<24xf32>
    %8 = vector.shape_cast %7 : vector<24xf32> to vector<24x1xf32>
    %cst_5 = arith.constant 3.200000e+01 : f32
    %9 = vector.broadcast %cst_5 : f32 to vector<24x1xf32>
    %10 = arith.divf %8, %9 : vector<24x1xf32>
    %11 = vector.broadcast %10 : vector<24x1xf32> to vector<24x32xf32>
    %12 = arith.subf %6, %11 : vector<24x32xf32>
    %13 = arith.mulf %12, %12 : vector<24x32xf32>
    %cst_6 = arith.constant dense<0.000000e+00> : vector<24xf32>
    %14 = vector.multi_reduction <add>, %13, %cst_6 [1] : vector<24x32xf32> to vector<24xf32>
    %15 = vector.shape_cast %14 : vector<24xf32> to vector<24x1xf32>
    %cst_7 = arith.constant 3.200000e+01 : f32
    %16 = vector.broadcast %cst_7 : f32 to vector<24x1xf32>
    %17 = arith.divf %15, %16 : vector<24x1xf32>
    %18 = vector.broadcast %10 : vector<24x1xf32> to vector<24x32xf32>
    %19 = arith.subf %6, %18 : vector<24x32xf32>
    %cst_8 = arith.constant 9.99999996E-13 : f32
    %20 = vector.broadcast %cst_8 : f32 to vector<24x1xf32>
    %21 = arith.addf %17, %20 : vector<24x1xf32>
    %22 = math.rsqrt %21 : vector<24x1xf32>
    %23 = vector.broadcast %22 : vector<24x1xf32> to vector<24x32xf32>
    %24 = arith.mulf %19, %23 : vector<24x32xf32>
    %25 = vector.broadcast %1 : vector<1x32xf32> to vector<24x32xf32>
    %26 = arith.mulf %24, %25 : vector<24x32xf32>
    %27 = vector.broadcast %2 : vector<1x32xf32> to vector<24x32xf32>
    %28 = arith.addf %26, %27 : vector<24x32xf32>
    %29 = arith.addf %28, %4 : vector<24x32xf32>
    %cst_9 = arith.constant dense<0.000000e+00> : vector<24xf32>
    %30 = vector.multi_reduction <add>, %29, %cst_9 [1] : vector<24x32xf32> to vector<24xf32>
    %31 = vector.shape_cast %30 : vector<24xf32> to vector<24x1xf32>
    %cst_10 = arith.constant 3.200000e+01 : f32
    %32 = vector.broadcast %cst_10 : f32 to vector<24x1xf32>
    %33 = arith.divf %31, %32 : vector<24x1xf32>
    %34 = vector.broadcast %33 : vector<24x1xf32> to vector<24x32xf32>
    %35 = arith.subf %29, %34 : vector<24x32xf32>
    %36 = arith.mulf %35, %35 : vector<24x32xf32>
    %cst_11 = arith.constant dense<0.000000e+00> : vector<24xf32>
    %37 = vector.multi_reduction <add>, %36, %cst_11 [1] : vector<24x32xf32> to vector<24xf32>
    %38 = vector.shape_cast %37 : vector<24xf32> to vector<24x1xf32>
    %cst_12 = arith.constant 3.200000e+01 : f32
    %39 = vector.broadcast %cst_12 : f32 to vector<24x1xf32>
    %40 = arith.divf %38, %39 : vector<24x1xf32>
    %41 = vector.broadcast %33 : vector<24x1xf32> to vector<24x32xf32>
    %42 = arith.subf %29, %41 : vector<24x32xf32>
    %cst_13 = arith.constant 9.99999996E-13 : f32
    %43 = vector.broadcast %cst_13 : f32 to vector<24x1xf32>
    %44 = arith.addf %40, %43 : vector<24x1xf32>
    %45 = math.rsqrt %44 : vector<24x1xf32>
    %46 = vector.broadcast %45 : vector<24x1xf32> to vector<24x32xf32>
    %47 = arith.mulf %42, %46 : vector<24x32xf32>
    %48 = vector.broadcast %1 : vector<1x32xf32> to vector<24x32xf32>
    %49 = arith.mulf %47, %48 : vector<24x32xf32>
    %50 = vector.broadcast %2 : vector<1x32xf32> to vector<24x32xf32>
    %51 = arith.addf %49, %50 : vector<24x32xf32>
    %c56 = arith.constant 56 : index
    %c0_14 = arith.constant 0 : index
    %52 = vector.load %arg4[%c56, %c0_14] : memref<112x128xf32, #tpu.memory_space<vmem>>, vector<24x1xf32>
    %c0_15 = arith.constant 0 : index
    %c0_16 = arith.constant 0 : index
    %53 = vector.load %arg2[%c0_15, %c0_16] : memref<1x24xf32, #tpu.memory_space<vmem>>, vector<1x24xf32>
    %54 = vector.broadcast %52 : vector<24x1xf32> to vector<24x24xf32>
    %55 = vector.broadcast %53 : vector<1x24xf32> to vector<24x24xf32>
    %56 = arith.cmpf oeq, %54, %55 : vector<24x24xf32>
    %cst_17 = arith.constant 0.000000e+00 : f32
    %cst_18 = arith.constant -1.000000e+09 : f32
    %57 = vector.broadcast %cst_17 : f32 to vector<24x24xf32>
    %58 = vector.broadcast %cst_18 : f32 to vector<24x24xf32>
    %59 = arith.select %56, %57, %58 : vector<24x24xi1>, vector<24x24xf32>
    %c0_19 = arith.constant 0 : index
    %c0_20 = arith.constant 0 : index
    %60 = vector.load %arg3[%c0_19, %c0_20] : memref<384x128xbf16, #tpu.memory_space<vmem>>, vector<32x96xbf16>
    %c32_21 = arith.constant 32 : index
    %c0_22 = arith.constant 0 : index
    %61 = vector.load %arg3[%c32_21, %c0_22] : memref<384x128xbf16, #tpu.memory_space<vmem>>, vector<32x32xbf16>
    %c64 = arith.constant 64 : index
    %c0_23 = arith.constant 0 : index
    %62 = vector.load %arg3[%c64, %c0_23] : memref<384x128xbf16, #tpu.memory_space<vmem>>, vector<32x64xbf16>
    %c96 = arith.constant 96 : index
    %c0_24 = arith.constant 0 : index
    %63 = vector.load %arg3[%c96, %c0_24] : memref<384x128xbf16, #tpu.memory_space<vmem>>, vector<64x32xbf16>
    %c88 = arith.constant 88 : index
    %c0_25 = arith.constant 0 : index
    %64 = vector.load %arg4[%c88, %c0_25] : memref<112x128xf32, #tpu.memory_space<vmem>>, vector<8x128xf32>
    %65 = vector.extract_strided_slice %64 {offsets = [0, 0], sizes = [1, 96], strides = [1, 1]} : vector<8x128xf32> to vector<1x96xf32>
    %66 = vector.extract_strided_slice %64 {offsets = [1, 0], sizes = [1, 64], strides = [1, 1]} : vector<8x128xf32> to vector<1x64xf32>
    %67 = vector.extract_strided_slice %64 {offsets = [2, 0], sizes = [1, 32], strides = [1, 1]} : vector<8x128xf32> to vector<1x32xf32>
    %68 = vector.extract_strided_slice %64 {offsets = [3, 0], sizes = [1, 32], strides = [1, 1]} : vector<8x128xf32> to vector<1x32xf32>
    %69 = vector.extract_strided_slice %64 {offsets = [4, 0], sizes = [1, 32], strides = [1, 1]} : vector<8x128xf32> to vector<1x32xf32>
    %70 = vector.extract_strided_slice %64 {offsets = [5, 0], sizes = [1, 32], strides = [1, 1]} : vector<8x128xf32> to vector<1x32xf32>
    %71 = vector.extract_strided_slice %64 {offsets = [6, 0], sizes = [1, 32], strides = [1, 1]} : vector<8x128xf32> to vector<1x32xf32>
    %72 = vector.extract_strided_slice %64 {offsets = [7, 0], sizes = [1, 32], strides = [1, 1]} : vector<8x128xf32> to vector<1x32xf32>
    %73 = arith.truncf %51 : vector<24x32xf32> to vector<24x32xbf16>
    %cst_26 = arith.constant dense<0.000000e+00> : vector<24x96xf32>
    %74 = tpu.matmul %73, %60, %cst_26 {dimension_numbers = #tpu.dot_dimension_numbers<[1], [0], [0], [1], [0, 0, 1, 1], [], []>} : vector<24x32xbf16>, vector<32x96xbf16>, vector<24x96xf32> -> vector<24x96xf32>
    %75 = vector.broadcast %65 : vector<1x96xf32> to vector<24x96xf32>
    %76 = arith.addf %74, %75 : vector<24x96xf32>
    %77 = vector.extract_strided_slice %76 {offsets = [0, 0], sizes = [24, 32], strides = [1, 1]} : vector<24x96xf32> to vector<24x32xf32>
    %cst_27 = arith.constant 0.353553385 : f32
    %78 = vector.broadcast %cst_27 : f32 to vector<24x32xf32>
    %79 = arith.mulf %77, %78 : vector<24x32xf32>
    %80 = arith.truncf %79 : vector<24x32xf32> to vector<24x32xbf16>
    %81 = vector.extract_strided_slice %76 {offsets = [0, 32], sizes = [24, 32], strides = [1, 1]} : vector<24x96xf32> to vector<24x32xf32>
    %82 = arith.truncf %81 : vector<24x32xf32> to vector<24x32xbf16>
    %83 = vector.extract_strided_slice %76 {offsets = [0, 64], sizes = [24, 32], strides = [1, 1]} : vector<24x96xf32> to vector<24x32xf32>
    %84 = arith.truncf %83 : vector<24x32xf32> to vector<24x32xbf16>
    %85 = vector.extract_strided_slice %80 {offsets = [0, 0], sizes = [24, 8], strides = [1, 1]} : vector<24x32xbf16> to vector<24x8xbf16>
    %86 = vector.extract_strided_slice %82 {offsets = [0, 0], sizes = [24, 8], strides = [1, 1]} : vector<24x32xbf16> to vector<24x8xbf16>
    %cst_28 = arith.constant dense<0.000000e+00> : vector<24x24xf32>
    %87 = tpu.matmul %85, %86, %cst_28 {dimension_numbers = #tpu.dot_dimension_numbers<[1], [1], [0], [0], [0, 0, 1, 0], [], []>} : vector<24x8xbf16>, vector<24x8xbf16>, vector<24x24xf32> -> vector<24x24xf32>
    %88 = arith.addf %87, %59 : vector<24x24xf32>
    %cst_29 = arith.constant dense<0xFF800000> : vector<24xf32>
    %89 = vector.multi_reduction <maximumf>, %88, %cst_29 [1] : vector<24x24xf32> to vector<24xf32>
    %90 = vector.shape_cast %89 : vector<24xf32> to vector<24x1xf32>
    %91 = vector.broadcast %90 : vector<24x1xf32> to vector<24x24xf32>
    %92 = arith.subf %88, %91 : vector<24x24xf32>
    %93 = math.exp %92 : vector<24x24xf32>
    %cst_30 = arith.constant dense<0.000000e+00> : vector<24xf32>
    %94 = vector.multi_reduction <add>, %93, %cst_30 [1] : vector<24x24xf32> to vector<24xf32>
    %95 = vector.shape_cast %94 : vector<24xf32> to vector<24x1xf32>
    %96 = tpu.reciprocal %95 {approx = true} : vector<24x1xf32> -> vector<24x1xf32>
    %97 = vector.broadcast %96 : vector<24x1xf32> to vector<24x24xf32>
    %98 = arith.mulf %93, %97 : vector<24x24xf32>
    %99 = vector.extract_strided_slice %84 {offsets = [0, 0], sizes = [24, 8], strides = [1, 1]} : vector<24x32xbf16> to vector<24x8xbf16>
    %100 = arith.truncf %98 : vector<24x24xf32> to vector<24x24xbf16>
    %cst_31 = arith.constant dense<0.000000e+00> : vector<24x8xf32>
    %101 = tpu.matmul %100, %99, %cst_31 {dimension_numbers = #tpu.dot_dimension_numbers<[1], [0], [0], [1], [0, 0, 1, 1], [], []>} : vector<24x24xbf16>, vector<24x8xbf16>, vector<24x8xf32> -> vector<24x8xf32>
    %102 = vector.extract_strided_slice %80 {offsets = [0, 8], sizes = [24, 8], strides = [1, 1]} : vector<24x32xbf16> to vector<24x8xbf16>
    %103 = vector.extract_strided_slice %82 {offsets = [0, 8], sizes = [24, 8], strides = [1, 1]} : vector<24x32xbf16> to vector<24x8xbf16>
    %cst_32 = arith.constant dense<0.000000e+00> : vector<24x24xf32>
    %104 = tpu.matmul %102, %103, %cst_32 {dimension_numbers = #tpu.dot_dimension_numbers<[1], [1], [0], [0], [0, 0, 1, 0], [], []>} : vector<24x8xbf16>, vector<24x8xbf16>, vector<24x24xf32> -> vector<24x24xf32>
    %105 = arith.addf %104, %59 : vector<24x24xf32>
    %cst_33 = arith.constant dense<0xFF800000> : vector<24xf32>
    %106 = vector.multi_reduction <maximumf>, %105, %cst_33 [1] : vector<24x24xf32> to vector<24xf32>
    %107 = vector.shape_cast %106 : vector<24xf32> to vector<24x1xf32>
    %108 = vector.broadcast %107 : vector<24x1xf32> to vector<24x24xf32>
    %109 = arith.subf %105, %108 : vector<24x24xf32>
    %110 = math.exp %109 : vector<24x24xf32>
    %cst_34 = arith.constant dense<0.000000e+00> : vector<24xf32>
    %111 = vector.multi_reduction <add>, %110, %cst_34 [1] : vector<24x24xf32> to vector<24xf32>
    %112 = vector.shape_cast %111 : vector<24xf32> to vector<24x1xf32>
    %113 = tpu.reciprocal %112 {approx = true} : vector<24x1xf32> -> vector<24x1xf32>
    %114 = vector.broadcast %113 : vector<24x1xf32> to vector<24x24xf32>
    %115 = arith.mulf %110, %114 : vector<24x24xf32>
    %116 = vector.extract_strided_slice %84 {offsets = [0, 8], sizes = [24, 8], strides = [1, 1]} : vector<24x32xbf16> to vector<24x8xbf16>
    %117 = arith.truncf %115 : vector<24x24xf32> to vector<24x24xbf16>
    %cst_35 = arith.constant dense<0.000000e+00> : vector<24x8xf32>
    %118 = tpu.matmul %117, %116, %cst_35 {dimension_numbers = #tpu.dot_dimension_numbers<[1], [0], [0], [1], [0, 0, 1, 1], [], []>} : vector<24x24xbf16>, vector<24x8xbf16>, vector<24x8xf32> -> vector<24x8xf32>
    %119 = vector.extract_strided_slice %80 {offsets = [0, 16], sizes = [24, 8], strides = [1, 1]} : vector<24x32xbf16> to vector<24x8xbf16>
    %120 = vector.extract_strided_slice %82 {offsets = [0, 16], sizes = [24, 8], strides = [1, 1]} : vector<24x32xbf16> to vector<24x8xbf16>
    %cst_36 = arith.constant dense<0.000000e+00> : vector<24x24xf32>
    %121 = tpu.matmul %119, %120, %cst_36 {dimension_numbers = #tpu.dot_dimension_numbers<[1], [1], [0], [0], [0, 0, 1, 0], [], []>} : vector<24x8xbf16>, vector<24x8xbf16>, vector<24x24xf32> -> vector<24x24xf32>
    %122 = arith.addf %121, %59 : vector<24x24xf32>
    %cst_37 = arith.constant dense<0xFF800000> : vector<24xf32>
    %123 = vector.multi_reduction <maximumf>, %122, %cst_37 [1] : vector<24x24xf32> to vector<24xf32>
    %124 = vector.shape_cast %123 : vector<24xf32> to vector<24x1xf32>
    %125 = vector.broadcast %124 : vector<24x1xf32> to vector<24x24xf32>
    %126 = arith.subf %122, %125 : vector<24x24xf32>
    %127 = math.exp %126 : vector<24x24xf32>
    %cst_38 = arith.constant dense<0.000000e+00> : vector<24xf32>
    %128 = vector.multi_reduction <add>, %127, %cst_38 [1] : vector<24x24xf32> to vector<24xf32>
    %129 = vector.shape_cast %128 : vector<24xf32> to vector<24x1xf32>
    %130 = tpu.reciprocal %129 {approx = true} : vector<24x1xf32> -> vector<24x1xf32>
    %131 = vector.broadcast %130 : vector<24x1xf32> to vector<24x24xf32>
    %132 = arith.mulf %127, %131 : vector<24x24xf32>
    %133 = vector.extract_strided_slice %84 {offsets = [0, 16], sizes = [24, 8], strides = [1, 1]} : vector<24x32xbf16> to vector<24x8xbf16>
    %134 = arith.truncf %132 : vector<24x24xf32> to vector<24x24xbf16>
    %cst_39 = arith.constant dense<0.000000e+00> : vector<24x8xf32>
    %135 = tpu.matmul %134, %133, %cst_39 {dimension_numbers = #tpu.dot_dimension_numbers<[1], [0], [0], [1], [0, 0, 1, 1], [], []>} : vector<24x24xbf16>, vector<24x8xbf16>, vector<24x8xf32> -> vector<24x8xf32>
    %136 = vector.extract_strided_slice %80 {offsets = [0, 24], sizes = [24, 8], strides = [1, 1]} : vector<24x32xbf16> to vector<24x8xbf16>
    %137 = vector.extract_strided_slice %82 {offsets = [0, 24], sizes = [24, 8], strides = [1, 1]} : vector<24x32xbf16> to vector<24x8xbf16>
    %cst_40 = arith.constant dense<0.000000e+00> : vector<24x24xf32>
    %138 = tpu.matmul %136, %137, %cst_40 {dimension_numbers = #tpu.dot_dimension_numbers<[1], [1], [0], [0], [0, 0, 1, 0], [], []>} : vector<24x8xbf16>, vector<24x8xbf16>, vector<24x24xf32> -> vector<24x24xf32>
    %139 = arith.addf %138, %59 : vector<24x24xf32>
    %cst_41 = arith.constant dense<0xFF800000> : vector<24xf32>
    %140 = vector.multi_reduction <maximumf>, %139, %cst_41 [1] : vector<24x24xf32> to vector<24xf32>
    %141 = vector.shape_cast %140 : vector<24xf32> to vector<24x1xf32>
    %142 = vector.broadcast %141 : vector<24x1xf32> to vector<24x24xf32>
    %143 = arith.subf %139, %142 : vector<24x24xf32>
    %144 = math.exp %143 : vector<24x24xf32>
    %cst_42 = arith.constant dense<0.000000e+00> : vector<24xf32>
    %145 = vector.multi_reduction <add>, %144, %cst_42 [1] : vector<24x24xf32> to vector<24xf32>
    %146 = vector.shape_cast %145 : vector<24xf32> to vector<24x1xf32>
    %147 = tpu.reciprocal %146 {approx = true} : vector<24x1xf32> -> vector<24x1xf32>
    %148 = vector.broadcast %147 : vector<24x1xf32> to vector<24x24xf32>
    %149 = arith.mulf %144, %148 : vector<24x24xf32>
    %150 = vector.extract_strided_slice %84 {offsets = [0, 24], sizes = [24, 8], strides = [1, 1]} : vector<24x32xbf16> to vector<24x8xbf16>
    %151 = arith.truncf %149 : vector<24x24xf32> to vector<24x24xbf16>
    %cst_43 = arith.constant dense<0.000000e+00> : vector<24x8xf32>
    %152 = tpu.matmul %151, %150, %cst_43 {dimension_numbers = #tpu.dot_dimension_numbers<[1], [0], [0], [1], [0, 0, 1, 1], [], []>} : vector<24x24xbf16>, vector<24x8xbf16>, vector<24x8xf32> -> vector<24x8xf32>
    %153 = tpu.concatenate %101, %118, %135, %152 in 1 : vector<24x8xf32>, vector<24x8xf32>, vector<24x8xf32>, vector<24x8xf32> -> vector<24x32xf32>
    %154 = arith.truncf %153 : vector<24x32xf32> to vector<24x32xbf16>
    %cst_44 = arith.constant dense<0.000000e+00> : vector<24x32xf32>
    %155 = tpu.matmul %154, %61, %cst_44 {dimension_numbers = #tpu.dot_dimension_numbers<[1], [0], [0], [1], [0, 0, 1, 1], [], []>} : vector<24x32xbf16>, vector<32x32xbf16>, vector<24x32xf32> -> vector<24x32xf32>
    %156 = vector.broadcast %67 : vector<1x32xf32> to vector<24x32xf32>
    %157 = arith.addf %155, %156 : vector<24x32xf32>
    %158 = arith.addf %51, %157 : vector<24x32xf32>
    %cst_45 = arith.constant dense<0.000000e+00> : vector<24xf32>
    %159 = vector.multi_reduction <add>, %158, %cst_45 [1] : vector<24x32xf32> to vector<24xf32>
    %160 = vector.shape_cast %159 : vector<24xf32> to vector<24x1xf32>
    %cst_46 = arith.constant 3.200000e+01 : f32
    %161 = vector.broadcast %cst_46 : f32 to vector<24x1xf32>
    %162 = arith.divf %160, %161 : vector<24x1xf32>
    %163 = vector.broadcast %162 : vector<24x1xf32> to vector<24x32xf32>
    %164 = arith.subf %158, %163 : vector<24x32xf32>
    %165 = arith.mulf %164, %164 : vector<24x32xf32>
    %cst_47 = arith.constant dense<0.000000e+00> : vector<24xf32>
    %166 = vector.multi_reduction <add>, %165, %cst_47 [1] : vector<24x32xf32> to vector<24xf32>
    %167 = vector.shape_cast %166 : vector<24xf32> to vector<24x1xf32>
    %cst_48 = arith.constant 3.200000e+01 : f32
    %168 = vector.broadcast %cst_48 : f32 to vector<24x1xf32>
    %169 = arith.divf %167, %168 : vector<24x1xf32>
    %170 = vector.broadcast %162 : vector<24x1xf32> to vector<24x32xf32>
    %171 = arith.subf %158, %170 : vector<24x32xf32>
    %cst_49 = arith.constant 9.99999996E-13 : f32
    %172 = vector.broadcast %cst_49 : f32 to vector<24x1xf32>
    %173 = arith.addf %169, %172 : vector<24x1xf32>
    %174 = math.rsqrt %173 : vector<24x1xf32>
    %175 = vector.broadcast %174 : vector<24x1xf32> to vector<24x32xf32>
    %176 = arith.mulf %171, %175 : vector<24x32xf32>
    %177 = vector.broadcast %68 : vector<1x32xf32> to vector<24x32xf32>
    %178 = arith.mulf %176, %177 : vector<24x32xf32>
    %179 = vector.broadcast %69 : vector<1x32xf32> to vector<24x32xf32>
    %180 = arith.addf %178, %179 : vector<24x32xf32>
    %181 = arith.truncf %180 : vector<24x32xf32> to vector<24x32xbf16>
    %cst_50 = arith.constant dense<0.000000e+00> : vector<24x64xf32>
    %182 = tpu.matmul %181, %62, %cst_50 {dimension_numbers = #tpu.dot_dimension_numbers<[1], [0], [0], [1], [0, 0, 1, 1], [], []>} : vector<24x32xbf16>, vector<32x64xbf16>, vector<24x64xf32> -> vector<24x64xf32>
    %183 = vector.broadcast %66 : vector<1x64xf32> to vector<24x64xf32>
    %184 = arith.addf %182, %183 : vector<24x64xf32>
    %cst_51 = arith.constant 5.000000e-01 : f32
    %185 = vector.broadcast %cst_51 : f32 to vector<24x64xf32>
    %186 = arith.mulf %185, %184 : vector<24x64xf32>
    %cst_52 = arith.constant 4.471500e-02 : f32
    %187 = vector.broadcast %cst_52 : f32 to vector<24x64xf32>
    %188 = arith.mulf %187, %184 : vector<24x64xf32>
    %189 = arith.mulf %188, %184 : vector<24x64xf32>
    %190 = arith.mulf %189, %184 : vector<24x64xf32>
    %191 = arith.addf %184, %190 : vector<24x64xf32>
    %cst_53 = arith.constant 0.797884583 : f32
    %192 = vector.broadcast %cst_53 : f32 to vector<24x64xf32>
    %193 = arith.mulf %192, %191 : vector<24x64xf32>
    %194 = math.tanh %193 : vector<24x64xf32>
    %cst_54 = arith.constant 1.000000e+00 : f32
    %195 = vector.broadcast %cst_54 : f32 to vector<24x64xf32>
    %196 = arith.addf %195, %194 : vector<24x64xf32>
    %197 = arith.mulf %186, %196 : vector<24x64xf32>
    %198 = arith.truncf %197 : vector<24x64xf32> to vector<24x64xbf16>
    %cst_55 = arith.constant dense<0.000000e+00> : vector<24x32xf32>
    %199 = tpu.matmul %198, %63, %cst_55 {dimension_numbers = #tpu.dot_dimension_numbers<[1], [0], [0], [1], [0, 0, 1, 1], [], []>} : vector<24x64xbf16>, vector<64x32xbf16>, vector<24x32xf32> -> vector<24x32xf32>
    %200 = vector.broadcast %70 : vector<1x32xf32> to vector<24x32xf32>
    %201 = arith.addf %199, %200 : vector<24x32xf32>
    %202 = arith.addf %180, %201 : vector<24x32xf32>
    %cst_56 = arith.constant dense<0.000000e+00> : vector<24xf32>
    %203 = vector.multi_reduction <add>, %202, %cst_56 [1] : vector<24x32xf32> to vector<24xf32>
    %204 = vector.shape_cast %203 : vector<24xf32> to vector<24x1xf32>
    %cst_57 = arith.constant 3.200000e+01 : f32
    %205 = vector.broadcast %cst_57 : f32 to vector<24x1xf32>
    %206 = arith.divf %204, %205 : vector<24x1xf32>
    %207 = vector.broadcast %206 : vector<24x1xf32> to vector<24x32xf32>
    %208 = arith.subf %202, %207 : vector<24x32xf32>
    %209 = arith.mulf %208, %208 : vector<24x32xf32>
    %cst_58 = arith.constant dense<0.000000e+00> : vector<24xf32>
    %210 = vector.multi_reduction <add>, %209, %cst_58 [1] : vector<24x32xf32> to vector<24xf32>
    %211 = vector.shape_cast %210 : vector<24xf32> to vector<24x1xf32>
    %cst_59 = arith.constant 3.200000e+01 : f32
    %212 = vector.broadcast %cst_59 : f32 to vector<24x1xf32>
    %213 = arith.divf %211, %212 : vector<24x1xf32>
    %214 = vector.broadcast %206 : vector<24x1xf32> to vector<24x32xf32>
    %215 = arith.subf %202, %214 : vector<24x32xf32>
    %cst_60 = arith.constant 9.99999996E-13 : f32
    %216 = vector.broadcast %cst_60 : f32 to vector<24x1xf32>
    %217 = arith.addf %213, %216 : vector<24x1xf32>
    %218 = math.rsqrt %217 : vector<24x1xf32>
    %219 = vector.broadcast %218 : vector<24x1xf32> to vector<24x32xf32>
    %220 = arith.mulf %215, %219 : vector<24x32xf32>
    %221 = vector.broadcast %71 : vector<1x32xf32> to vector<24x32xf32>
    %222 = arith.mulf %220, %221 : vector<24x32xf32>
    %223 = vector.broadcast %72 : vector<1x32xf32> to vector<24x32xf32>
    %224 = arith.addf %222, %223 : vector<24x32xf32>
    %c160 = arith.constant 160 : index
    %c0_61 = arith.constant 0 : index
    %225 = vector.load %arg3[%c160, %c0_61] : memref<384x128xbf16, #tpu.memory_space<vmem>>, vector<32x96xbf16>
    %c192 = arith.constant 192 : index
    %c0_62 = arith.constant 0 : index
    %226 = vector.load %arg3[%c192, %c0_62] : memref<384x128xbf16, #tpu.memory_space<vmem>>, vector<32x32xbf16>
    %c224 = arith.constant 224 : index
    %c0_63 = arith.constant 0 : index
    %227 = vector.load %arg3[%c224, %c0_63] : memref<384x128xbf16, #tpu.memory_space<vmem>>, vector<32x64xbf16>
    %c256 = arith.constant 256 : index
    %c0_64 = arith.constant 0 : index
    %228 = vector.load %arg3[%c256, %c0_64] : memref<384x128xbf16, #tpu.memory_space<vmem>>, vector<64x32xbf16>
    %c96_65 = arith.constant 96 : index
    %c0_66 = arith.constant 0 : index
    %229 = vector.load %arg4[%c96_65, %c0_66] : memref<112x128xf32, #tpu.memory_space<vmem>>, vector<8x128xf32>
    %230 = vector.extract_strided_slice %229 {offsets = [0, 0], sizes = [1, 96], strides = [1, 1]} : vector<8x128xf32> to vector<1x96xf32>
    %231 = vector.extract_strided_slice %229 {offsets = [1, 0], sizes = [1, 64], strides = [1, 1]} : vector<8x128xf32> to vector<1x64xf32>
    %232 = vector.extract_strided_slice %229 {offsets = [2, 0], sizes = [1, 32], strides = [1, 1]} : vector<8x128xf32> to vector<1x32xf32>
    %233 = vector.extract_strided_slice %229 {offsets = [3, 0], sizes = [1, 32], strides = [1, 1]} : vector<8x128xf32> to vector<1x32xf32>
    %234 = vector.extract_strided_slice %229 {offsets = [4, 0], sizes = [1, 32], strides = [1, 1]} : vector<8x128xf32> to vector<1x32xf32>
    %235 = vector.extract_strided_slice %229 {offsets = [5, 0], sizes = [1, 32], strides = [1, 1]} : vector<8x128xf32> to vector<1x32xf32>
    %236 = vector.extract_strided_slice %229 {offsets = [6, 0], sizes = [1, 32], strides = [1, 1]} : vector<8x128xf32> to vector<1x32xf32>
    %237 = vector.extract_strided_slice %229 {offsets = [7, 0], sizes = [1, 32], strides = [1, 1]} : vector<8x128xf32> to vector<1x32xf32>
    %238 = arith.truncf %224 : vector<24x32xf32> to vector<24x32xbf16>
    %cst_67 = arith.constant dense<0.000000e+00> : vector<24x96xf32>
    %239 = tpu.matmul %238, %225, %cst_67 {dimension_numbers = #tpu.dot_dimension_numbers<[1], [0], [0], [1], [0, 0, 1, 1], [], []>} : vector<24x32xbf16>, vector<32x96xbf16>, vector<24x96xf32> -> vector<24x96xf32>
    %240 = vector.broadcast %230 : vector<1x96xf32> to vector<24x96xf32>
    %241 = arith.addf %239, %240 : vector<24x96xf32>
    %242 = vector.extract_strided_slice %241 {offsets = [0, 0], sizes = [24, 32], strides = [1, 1]} : vector<24x96xf32> to vector<24x32xf32>
    %cst_68 = arith.constant 0.353553385 : f32
    %243 = vector.broadcast %cst_68 : f32 to vector<24x32xf32>
    %244 = arith.mulf %242, %243 : vector<24x32xf32>
    %245 = arith.truncf %244 : vector<24x32xf32> to vector<24x32xbf16>
    %246 = vector.extract_strided_slice %241 {offsets = [0, 32], sizes = [24, 32], strides = [1, 1]} : vector<24x96xf32> to vector<24x32xf32>
    %247 = arith.truncf %246 : vector<24x32xf32> to vector<24x32xbf16>
    %248 = vector.extract_strided_slice %241 {offsets = [0, 64], sizes = [24, 32], strides = [1, 1]} : vector<24x96xf32> to vector<24x32xf32>
    %249 = arith.truncf %248 : vector<24x32xf32> to vector<24x32xbf16>
    %250 = vector.extract_strided_slice %245 {offsets = [0, 0], sizes = [24, 8], strides = [1, 1]} : vector<24x32xbf16> to vector<24x8xbf16>
    %251 = vector.extract_strided_slice %247 {offsets = [0, 0], sizes = [24, 8], strides = [1, 1]} : vector<24x32xbf16> to vector<24x8xbf16>
    %cst_69 = arith.constant dense<0.000000e+00> : vector<24x24xf32>
    %252 = tpu.matmul %250, %251, %cst_69 {dimension_numbers = #tpu.dot_dimension_numbers<[1], [1], [0], [0], [0, 0, 1, 0], [], []>} : vector<24x8xbf16>, vector<24x8xbf16>, vector<24x24xf32> -> vector<24x24xf32>
    %253 = arith.addf %252, %59 : vector<24x24xf32>
    %cst_70 = arith.constant dense<0xFF800000> : vector<24xf32>
    %254 = vector.multi_reduction <maximumf>, %253, %cst_70 [1] : vector<24x24xf32> to vector<24xf32>
    %255 = vector.shape_cast %254 : vector<24xf32> to vector<24x1xf32>
    %256 = vector.broadcast %255 : vector<24x1xf32> to vector<24x24xf32>
    %257 = arith.subf %253, %256 : vector<24x24xf32>
    %258 = math.exp %257 : vector<24x24xf32>
    %cst_71 = arith.constant dense<0.000000e+00> : vector<24xf32>
    %259 = vector.multi_reduction <add>, %258, %cst_71 [1] : vector<24x24xf32> to vector<24xf32>
    %260 = vector.shape_cast %259 : vector<24xf32> to vector<24x1xf32>
    %261 = tpu.reciprocal %260 {approx = true} : vector<24x1xf32> -> vector<24x1xf32>
    %262 = vector.broadcast %261 : vector<24x1xf32> to vector<24x24xf32>
    %263 = arith.mulf %258, %262 : vector<24x24xf32>
    %264 = vector.extract_strided_slice %249 {offsets = [0, 0], sizes = [24, 8], strides = [1, 1]} : vector<24x32xbf16> to vector<24x8xbf16>
    %265 = arith.truncf %263 : vector<24x24xf32> to vector<24x24xbf16>
    %cst_72 = arith.constant dense<0.000000e+00> : vector<24x8xf32>
    %266 = tpu.matmul %265, %264, %cst_72 {dimension_numbers = #tpu.dot_dimension_numbers<[1], [0], [0], [1], [0, 0, 1, 1], [], []>} : vector<24x24xbf16>, vector<24x8xbf16>, vector<24x8xf32> -> vector<24x8xf32>
    %267 = vector.extract_strided_slice %245 {offsets = [0, 8], sizes = [24, 8], strides = [1, 1]} : vector<24x32xbf16> to vector<24x8xbf16>
    %268 = vector.extract_strided_slice %247 {offsets = [0, 8], sizes = [24, 8], strides = [1, 1]} : vector<24x32xbf16> to vector<24x8xbf16>
    %cst_73 = arith.constant dense<0.000000e+00> : vector<24x24xf32>
    %269 = tpu.matmul %267, %268, %cst_73 {dimension_numbers = #tpu.dot_dimension_numbers<[1], [1], [0], [0], [0, 0, 1, 0], [], []>} : vector<24x8xbf16>, vector<24x8xbf16>, vector<24x24xf32> -> vector<24x24xf32>
    %270 = arith.addf %269, %59 : vector<24x24xf32>
    %cst_74 = arith.constant dense<0xFF800000> : vector<24xf32>
    %271 = vector.multi_reduction <maximumf>, %270, %cst_74 [1] : vector<24x24xf32> to vector<24xf32>
    %272 = vector.shape_cast %271 : vector<24xf32> to vector<24x1xf32>
    %273 = vector.broadcast %272 : vector<24x1xf32> to vector<24x24xf32>
    %274 = arith.subf %270, %273 : vector<24x24xf32>
    %275 = math.exp %274 : vector<24x24xf32>
    %cst_75 = arith.constant dense<0.000000e+00> : vector<24xf32>
    %276 = vector.multi_reduction <add>, %275, %cst_75 [1] : vector<24x24xf32> to vector<24xf32>
    %277 = vector.shape_cast %276 : vector<24xf32> to vector<24x1xf32>
    %278 = tpu.reciprocal %277 {approx = true} : vector<24x1xf32> -> vector<24x1xf32>
    %279 = vector.broadcast %278 : vector<24x1xf32> to vector<24x24xf32>
    %280 = arith.mulf %275, %279 : vector<24x24xf32>
    %281 = vector.extract_strided_slice %249 {offsets = [0, 8], sizes = [24, 8], strides = [1, 1]} : vector<24x32xbf16> to vector<24x8xbf16>
    %282 = arith.truncf %280 : vector<24x24xf32> to vector<24x24xbf16>
    %cst_76 = arith.constant dense<0.000000e+00> : vector<24x8xf32>
    %283 = tpu.matmul %282, %281, %cst_76 {dimension_numbers = #tpu.dot_dimension_numbers<[1], [0], [0], [1], [0, 0, 1, 1], [], []>} : vector<24x24xbf16>, vector<24x8xbf16>, vector<24x8xf32> -> vector<24x8xf32>
    %284 = vector.extract_strided_slice %245 {offsets = [0, 16], sizes = [24, 8], strides = [1, 1]} : vector<24x32xbf16> to vector<24x8xbf16>
    %285 = vector.extract_strided_slice %247 {offsets = [0, 16], sizes = [24, 8], strides = [1, 1]} : vector<24x32xbf16> to vector<24x8xbf16>
    %cst_77 = arith.constant dense<0.000000e+00> : vector<24x24xf32>
    %286 = tpu.matmul %284, %285, %cst_77 {dimension_numbers = #tpu.dot_dimension_numbers<[1], [1], [0], [0], [0, 0, 1, 0], [], []>} : vector<24x8xbf16>, vector<24x8xbf16>, vector<24x24xf32> -> vector<24x24xf32>
    %287 = arith.addf %286, %59 : vector<24x24xf32>
    %cst_78 = arith.constant dense<0xFF800000> : vector<24xf32>
    %288 = vector.multi_reduction <maximumf>, %287, %cst_78 [1] : vector<24x24xf32> to vector<24xf32>
    %289 = vector.shape_cast %288 : vector<24xf32> to vector<24x1xf32>
    %290 = vector.broadcast %289 : vector<24x1xf32> to vector<24x24xf32>
    %291 = arith.subf %287, %290 : vector<24x24xf32>
    %292 = math.exp %291 : vector<24x24xf32>
    %cst_79 = arith.constant dense<0.000000e+00> : vector<24xf32>
    %293 = vector.multi_reduction <add>, %292, %cst_79 [1] : vector<24x24xf32> to vector<24xf32>
    %294 = vector.shape_cast %293 : vector<24xf32> to vector<24x1xf32>
    %295 = tpu.reciprocal %294 {approx = true} : vector<24x1xf32> -> vector<24x1xf32>
    %296 = vector.broadcast %295 : vector<24x1xf32> to vector<24x24xf32>
    %297 = arith.mulf %292, %296 : vector<24x24xf32>
    %298 = vector.extract_strided_slice %249 {offsets = [0, 16], sizes = [24, 8], strides = [1, 1]} : vector<24x32xbf16> to vector<24x8xbf16>
    %299 = arith.truncf %297 : vector<24x24xf32> to vector<24x24xbf16>
    %cst_80 = arith.constant dense<0.000000e+00> : vector<24x8xf32>
    %300 = tpu.matmul %299, %298, %cst_80 {dimension_numbers = #tpu.dot_dimension_numbers<[1], [0], [0], [1], [0, 0, 1, 1], [], []>} : vector<24x24xbf16>, vector<24x8xbf16>, vector<24x8xf32> -> vector<24x8xf32>
    %301 = vector.extract_strided_slice %245 {offsets = [0, 24], sizes = [24, 8], strides = [1, 1]} : vector<24x32xbf16> to vector<24x8xbf16>
    %302 = vector.extract_strided_slice %247 {offsets = [0, 24], sizes = [24, 8], strides = [1, 1]} : vector<24x32xbf16> to vector<24x8xbf16>
    %cst_81 = arith.constant dense<0.000000e+00> : vector<24x24xf32>
    %303 = tpu.matmul %301, %302, %cst_81 {dimension_numbers = #tpu.dot_dimension_numbers<[1], [1], [0], [0], [0, 0, 1, 0], [], []>} : vector<24x8xbf16>, vector<24x8xbf16>, vector<24x24xf32> -> vector<24x24xf32>
    %304 = arith.addf %303, %59 : vector<24x24xf32>
    %cst_82 = arith.constant dense<0xFF800000> : vector<24xf32>
    %305 = vector.multi_reduction <maximumf>, %304, %cst_82 [1] : vector<24x24xf32> to vector<24xf32>
    %306 = vector.shape_cast %305 : vector<24xf32> to vector<24x1xf32>
    %307 = vector.broadcast %306 : vector<24x1xf32> to vector<24x24xf32>
    %308 = arith.subf %304, %307 : vector<24x24xf32>
    %309 = math.exp %308 : vector<24x24xf32>
    %cst_83 = arith.constant dense<0.000000e+00> : vector<24xf32>
    %310 = vector.multi_reduction <add>, %309, %cst_83 [1] : vector<24x24xf32> to vector<24xf32>
    %311 = vector.shape_cast %310 : vector<24xf32> to vector<24x1xf32>
    %312 = tpu.reciprocal %311 {approx = true} : vector<24x1xf32> -> vector<24x1xf32>
    %313 = vector.broadcast %312 : vector<24x1xf32> to vector<24x24xf32>
    %314 = arith.mulf %309, %313 : vector<24x24xf32>
    %315 = vector.extract_strided_slice %249 {offsets = [0, 24], sizes = [24, 8], strides = [1, 1]} : vector<24x32xbf16> to vector<24x8xbf16>
    %316 = arith.truncf %314 : vector<24x24xf32> to vector<24x24xbf16>
    %cst_84 = arith.constant dense<0.000000e+00> : vector<24x8xf32>
    %317 = tpu.matmul %316, %315, %cst_84 {dimension_numbers = #tpu.dot_dimension_numbers<[1], [0], [0], [1], [0, 0, 1, 1], [], []>} : vector<24x24xbf16>, vector<24x8xbf16>, vector<24x8xf32> -> vector<24x8xf32>
    %318 = tpu.concatenate %266, %283, %300, %317 in 1 : vector<24x8xf32>, vector<24x8xf32>, vector<24x8xf32>, vector<24x8xf32> -> vector<24x32xf32>
    %319 = arith.truncf %318 : vector<24x32xf32> to vector<24x32xbf16>
    %cst_85 = arith.constant dense<0.000000e+00> : vector<24x32xf32>
    %320 = tpu.matmul %319, %226, %cst_85 {dimension_numbers = #tpu.dot_dimension_numbers<[1], [0], [0], [1], [0, 0, 1, 1], [], []>} : vector<24x32xbf16>, vector<32x32xbf16>, vector<24x32xf32> -> vector<24x32xf32>
    %321 = vector.broadcast %232 : vector<1x32xf32> to vector<24x32xf32>
    %322 = arith.addf %320, %321 : vector<24x32xf32>
    %323 = arith.addf %224, %322 : vector<24x32xf32>
    %cst_86 = arith.constant dense<0.000000e+00> : vector<24xf32>
    %324 = vector.multi_reduction <add>, %323, %cst_86 [1] : vector<24x32xf32> to vector<24xf32>
    %325 = vector.shape_cast %324 : vector<24xf32> to vector<24x1xf32>
    %cst_87 = arith.constant 3.200000e+01 : f32
    %326 = vector.broadcast %cst_87 : f32 to vector<24x1xf32>
    %327 = arith.divf %325, %326 : vector<24x1xf32>
    %328 = vector.broadcast %327 : vector<24x1xf32> to vector<24x32xf32>
    %329 = arith.subf %323, %328 : vector<24x32xf32>
    %330 = arith.mulf %329, %329 : vector<24x32xf32>
    %cst_88 = arith.constant dense<0.000000e+00> : vector<24xf32>
    %331 = vector.multi_reduction <add>, %330, %cst_88 [1] : vector<24x32xf32> to vector<24xf32>
    %332 = vector.shape_cast %331 : vector<24xf32> to vector<24x1xf32>
    %cst_89 = arith.constant 3.200000e+01 : f32
    %333 = vector.broadcast %cst_89 : f32 to vector<24x1xf32>
    %334 = arith.divf %332, %333 : vector<24x1xf32>
    %335 = vector.broadcast %327 : vector<24x1xf32> to vector<24x32xf32>
    %336 = arith.subf %323, %335 : vector<24x32xf32>
    %cst_90 = arith.constant 9.99999996E-13 : f32
    %337 = vector.broadcast %cst_90 : f32 to vector<24x1xf32>
    %338 = arith.addf %334, %337 : vector<24x1xf32>
    %339 = math.rsqrt %338 : vector<24x1xf32>
    %340 = vector.broadcast %339 : vector<24x1xf32> to vector<24x32xf32>
    %341 = arith.mulf %336, %340 : vector<24x32xf32>
    %342 = vector.broadcast %233 : vector<1x32xf32> to vector<24x32xf32>
    %343 = arith.mulf %341, %342 : vector<24x32xf32>
    %344 = vector.broadcast %234 : vector<1x32xf32> to vector<24x32xf32>
    %345 = arith.addf %343, %344 : vector<24x32xf32>
    %346 = arith.truncf %345 : vector<24x32xf32> to vector<24x32xbf16>
    %cst_91 = arith.constant dense<0.000000e+00> : vector<24x64xf32>
    %347 = tpu.matmul %346, %227, %cst_91 {dimension_numbers = #tpu.dot_dimension_numbers<[1], [0], [0], [1], [0, 0, 1, 1], [], []>} : vector<24x32xbf16>, vector<32x64xbf16>, vector<24x64xf32> -> vector<24x64xf32>
    %348 = vector.broadcast %231 : vector<1x64xf32> to vector<24x64xf32>
    %349 = arith.addf %347, %348 : vector<24x64xf32>
    %cst_92 = arith.constant 5.000000e-01 : f32
    %350 = vector.broadcast %cst_92 : f32 to vector<24x64xf32>
    %351 = arith.mulf %350, %349 : vector<24x64xf32>
    %cst_93 = arith.constant 4.471500e-02 : f32
    %352 = vector.broadcast %cst_93 : f32 to vector<24x64xf32>
    %353 = arith.mulf %352, %349 : vector<24x64xf32>
    %354 = arith.mulf %353, %349 : vector<24x64xf32>
    %355 = arith.mulf %354, %349 : vector<24x64xf32>
    %356 = arith.addf %349, %355 : vector<24x64xf32>
    %cst_94 = arith.constant 0.797884583 : f32
    %357 = vector.broadcast %cst_94 : f32 to vector<24x64xf32>
    %358 = arith.mulf %357, %356 : vector<24x64xf32>
    %359 = math.tanh %358 : vector<24x64xf32>
    %cst_95 = arith.constant 1.000000e+00 : f32
    %360 = vector.broadcast %cst_95 : f32 to vector<24x64xf32>
    %361 = arith.addf %360, %359 : vector<24x64xf32>
    %362 = arith.mulf %351, %361 : vector<24x64xf32>
    %363 = arith.truncf %362 : vector<24x64xf32> to vector<24x64xbf16>
    %cst_96 = arith.constant dense<0.000000e+00> : vector<24x32xf32>
    %364 = tpu.matmul %363, %228, %cst_96 {dimension_numbers = #tpu.dot_dimension_numbers<[1], [0], [0], [1], [0, 0, 1, 1], [], []>} : vector<24x64xbf16>, vector<64x32xbf16>, vector<24x32xf32> -> vector<24x32xf32>
    %365 = vector.broadcast %235 : vector<1x32xf32> to vector<24x32xf32>
    %366 = arith.addf %364, %365 : vector<24x32xf32>
    %367 = arith.addf %345, %366 : vector<24x32xf32>
    %cst_97 = arith.constant dense<0.000000e+00> : vector<24xf32>
    %368 = vector.multi_reduction <add>, %367, %cst_97 [1] : vector<24x32xf32> to vector<24xf32>
    %369 = vector.shape_cast %368 : vector<24xf32> to vector<24x1xf32>
    %cst_98 = arith.constant 3.200000e+01 : f32
    %370 = vector.broadcast %cst_98 : f32 to vector<24x1xf32>
    %371 = arith.divf %369, %370 : vector<24x1xf32>
    %372 = vector.broadcast %371 : vector<24x1xf32> to vector<24x32xf32>
    %373 = arith.subf %367, %372 : vector<24x32xf32>
    %374 = arith.mulf %373, %373 : vector<24x32xf32>
    %cst_99 = arith.constant dense<0.000000e+00> : vector<24xf32>
    %375 = vector.multi_reduction <add>, %374, %cst_99 [1] : vector<24x32xf32> to vector<24xf32>
    %376 = vector.shape_cast %375 : vector<24xf32> to vector<24x1xf32>
    %cst_100 = arith.constant 3.200000e+01 : f32
    %377 = vector.broadcast %cst_100 : f32 to vector<24x1xf32>
    %378 = arith.divf %376, %377 : vector<24x1xf32>
    %379 = vector.broadcast %371 : vector<24x1xf32> to vector<24x32xf32>
    %380 = arith.subf %367, %379 : vector<24x32xf32>
    %cst_101 = arith.constant 9.99999996E-13 : f32
    %381 = vector.broadcast %cst_101 : f32 to vector<24x1xf32>
    %382 = arith.addf %378, %381 : vector<24x1xf32>
    %383 = math.rsqrt %382 : vector<24x1xf32>
    %384 = vector.broadcast %383 : vector<24x1xf32> to vector<24x32xf32>
    %385 = arith.mulf %380, %384 : vector<24x32xf32>
    %386 = vector.broadcast %236 : vector<1x32xf32> to vector<24x32xf32>
    %387 = arith.mulf %385, %386 : vector<24x32xf32>
    %388 = vector.broadcast %237 : vector<1x32xf32> to vector<24x32xf32>
    %389 = arith.addf %387, %388 : vector<24x32xf32>
    %c80 = arith.constant 80 : index
    %c0_102 = arith.constant 0 : index
    %390 = vector.load %arg4[%c80, %c0_102] : memref<112x128xf32, #tpu.memory_space<vmem>>, vector<2x24xf32>
    %391 = arith.truncf %390 : vector<2x24xf32> to vector<2x24xbf16>
    %392 = arith.truncf %389 : vector<24x32xf32> to vector<24x32xbf16>
    %cst_103 = arith.constant dense<0.000000e+00> : vector<2x32xf32>
    %393 = tpu.matmul %391, %392, %cst_103 {dimension_numbers = #tpu.dot_dimension_numbers<[1], [0], [0], [1], [0, 0, 1, 1], [], []>} : vector<2x24xbf16>, vector<24x32xbf16>, vector<2x32xf32> -> vector<2x32xf32>
    %c104 = arith.constant 104 : index
    %c0_104 = arith.constant 0 : index
    %394 = vector.load %arg4[%c104, %c0_104] : memref<112x128xf32, #tpu.memory_space<vmem>>, vector<2x128xf32>
    %395 = vector.extract_strided_slice %394 {offsets = [0, 0], sizes = [1, 32], strides = [1, 1]} : vector<2x128xf32> to vector<1x32xf32>
    %396 = vector.extract_strided_slice %394 {offsets = [1, 0], sizes = [1, 3], strides = [1, 1]} : vector<2x128xf32> to vector<1x3xf32>
    %c320 = arith.constant 320 : index
    %c0_105 = arith.constant 0 : index
    %397 = vector.load %arg3[%c320, %c0_105] : memref<384x128xbf16, #tpu.memory_space<vmem>>, vector<32x32xbf16>
    %c352 = arith.constant 352 : index
    %c0_106 = arith.constant 0 : index
    %398 = vector.load %arg3[%c352, %c0_106] : memref<384x128xbf16, #tpu.memory_space<vmem>>, vector<32x3xbf16>
    %399 = arith.truncf %393 : vector<2x32xf32> to vector<2x32xbf16>
    %cst_107 = arith.constant dense<0.000000e+00> : vector<2x32xf32>
    %400 = tpu.matmul %399, %397, %cst_107 {dimension_numbers = #tpu.dot_dimension_numbers<[1], [0], [0], [1], [0, 0, 1, 1], [], []>} : vector<2x32xbf16>, vector<32x32xbf16>, vector<2x32xf32> -> vector<2x32xf32>
    %401 = vector.broadcast %395 : vector<1x32xf32> to vector<2x32xf32>
    %402 = arith.addf %400, %401 : vector<2x32xf32>
    %403 = math.tanh %402 : vector<2x32xf32>
    %404 = arith.truncf %403 : vector<2x32xf32> to vector<2x32xbf16>
    %cst_108 = arith.constant dense<0.000000e+00> : vector<2x3xf32>
    %405 = tpu.matmul %404, %398, %cst_108 {dimension_numbers = #tpu.dot_dimension_numbers<[1], [0], [0], [1], [0, 0, 1, 1], [], []>} : vector<2x32xbf16>, vector<32x3xbf16>, vector<2x3xf32> -> vector<2x3xf32>
    %406 = vector.broadcast %396 : vector<1x3xf32> to vector<2x3xf32>
    %407 = arith.addf %405, %406 : vector<2x3xf32>
    %cst_109 = arith.constant dense<0xFF800000> : vector<2xf32>
    %408 = vector.multi_reduction <maximumf>, %407, %cst_109 [1] : vector<2x3xf32> to vector<2xf32>
    %409 = vector.shape_cast %408 : vector<2xf32> to vector<2x1xf32>
    %410 = vector.broadcast %409 : vector<2x1xf32> to vector<2x3xf32>
    %411 = arith.subf %407, %410 : vector<2x3xf32>
    %412 = math.exp %411 : vector<2x3xf32>
    %cst_110 = arith.constant dense<0.000000e+00> : vector<2xf32>
    %413 = vector.multi_reduction <add>, %412, %cst_110 [1] : vector<2x3xf32> to vector<2xf32>
    %414 = vector.shape_cast %413 : vector<2xf32> to vector<2x1xf32>
    %415 = vector.broadcast %414 : vector<2x1xf32> to vector<2x3xf32>
    %416 = arith.divf %412, %415 : vector<2x3xf32>
    %c0_111 = arith.constant 0 : index
    %c0_112 = arith.constant 0 : index
    %417 = vector.load %arg5[%c0_111, %c0_112] : memref<2x3xf32, #tpu.memory_space<vmem>>, vector<2x3xf32>
    tpu.vector_store %arg5[%c0_111, %c0_112], %416 {strides = array<i32>} : memref<2x3xf32, #tpu.memory_space<vmem>>, vector<2x3xf32>,
    return
  }
  func.func @transform_0(%arg0: i32) -> (i32, i32) {
    %c0_i32 = arith.constant 0 : i32
    %c0_i32_0 = arith.constant 0 : i32
    %c0_i32_1 = arith.constant 0 : i32
    return %c0_i32, %c0_i32_0 : i32, i32
  }
  func.func @transform_1(%arg0: i32) -> (i32, i32) {
    %c0_i32 = arith.constant 0 : i32
    %c0_i32_0 = arith.constant 0 : i32
    %c0_i32_1 = arith.constant 0 : i32
    return %c0_i32, %c0_i32_0 : i32, i32
  }
  func.func @transform_2(%arg0: i32) -> (i32, i32) {
    %c0_i32 = arith.constant 0 : i32
    %c0_i32_0 = arith.constant 0 : i32
    %c0_i32_1 = arith.constant 0 : i32
    return %c0_i32, %c0_i32_0 : i32, i32
  }
  func.func @transform_3(%arg0: i32) -> (i32, i32) {
    %c0_i32 = arith.constant 0 : i32
    %c0_i32_0 = arith.constant 0 : i32
    %c0_i32_1 = arith.constant 0 : i32
    return %c0_i32, %c0_i32_0 : i32, i32
  }
  func.func @transform_4(%arg0: i32) -> (i32, i32) {
    %c0_i32 = arith.constant 0 : i32
    %c0_i32_0 = arith.constant 0 : i32
    %c0_i32_1 = arith.constant 0 : i32
    return %c0_i32, %c0_i32_0 : i32, i32
  }
}

</mosaic_0001>

<llo_original>
// kernel: forward.1
$region0: #{forward.1}
  #allocation0 [shape = 'u32[]', space=smem, size = 0x4, offset = 0x4, fixed_abs, tag = 'smem constant byte address 0x4 - core index']
  #allocation1 [shape = 'u32[144,128]{1,0:T(1,128)}', space=vmem, size = 0x12000, scoped, tag = 'internal scratch']
  %s0 = inlined_call_operand.vmem [shape: f32[24,32], index: 0, kind: input, shape index: {}]
  %s1 = inlined_call_operand.vmem [shape: f32[1,24], index: 1, kind: input, shape index: {}]
  %s2 = inlined_call_operand.vmem [shape: bf16[384,128], index: 2, kind: input, shape index: {}]
  %s3 = inlined_call_operand.vmem [shape: f32[112,128], index: 3, kind: input, shape index: {}]
  %s4 = inlined_call_operand.hbm [shape: f32[2,3], index: 4, kind: output, shape index: {}]
  %s5 = sld [smem:[#allocation0]]
  $region26: #{forward.1} parent=0
    _
  %s7 = ssub.s32 1, %s5
  %s8 = scalar_select 0, %s7, %s5
  $region1: #{forward.1} parent=0
    #allocation2 [shape = 'u8[1024]{0}', space=vmem, size = 0x400, scoped, tag = 'output window, operand 0, single buffered']
    #allocation3 [shape = 's32[1]{0}', space=sflag, size = 0x4, scoped, tag = 'scoped memory for forward.1']
    %9 = vsyncpa [#allocation3], 0
    // Predicated region
    $region2: #{forward.1} parent=1 // pred_check
      _
    $region3: #{forward.1} parent=1 // pred_check_branch
      %11 = sbr.rel (0) target = $region5
    $region4: #{forward.1} parent=1 // pred_region
      _
    $region5: #{forward.1} parent=1 // pred_fallthru
      _
    // Predicated region
    $region6: #{forward.1} parent=1 // pred_check
      _
    $region7: #{forward.1} parent=1 // pred_check_branch
      %13 = sbr.rel (0) target = $region9
    $region8: #{forward.1} parent=1 // pred_region
      _
    $region9: #{forward.1} parent=1 // pred_fallthru
      _
    // Predicated region
    $region10: #{forward.1} parent=1 // pred_check
      _
    $region11: #{forward.1} parent=1 // pred_check_branch
      %15 = sbr.rel (0) target = $region13
    $region12: #{forward.1} parent=1 // pred_region
      _
    $region13: #{forward.1} parent=1 // pred_fallthru
      _
    // Predicated region
    $region14: #{forward.1} parent=1 // pred_check
      _
    $region15: #{forward.1} parent=1 // pred_check_branch
      %17 = sbr.rel (0) target = $region17
    $region16: #{forward.1} parent=1 // pred_region
      _
    $region17: #{forward.1} parent=1 // pred_fallthru
      _
    %v19 = vld [vmem:[%s3] sm:$0x3]
    %v20 = vld [vmem:[%s3 + $0x8] sm:$0xff]
    %v21 = vld [vmem:[%s3 + $0x10] sm:$0xff]
    %v22 = vld [vmem:[%s3 + $0x18] sm:$0xff]
    %v23 = vld [vmem:[%s3 + $0x20] sm:$0xff]
    %v24 = vld [vmem:[%s3 + $0x28] sm:$0xff]
    %v25 = vld [vmem:[%s3 + $0x30] sm:$0xff]
    %v26 = vld [vmem:[%s0] sm:$0xff]
    %v27 = vld [vmem:[%s0 + $0x8] sm:$0xff]
    %v28 = vld [vmem:[%s0 + $0x10] sm:$0xff]
    %v29 = vadd.f32 %v26, %v20
    %v30 = vadd.f32 %v27, %v21
    %v31 = vadd.f32 %v28, %v22
    %vm32 = vcmask 261120
    %v33 = vsel %vm32, %v29, 0.0
    %34 = vadd.xlane.f32.xlu0 %v33
    %v35 = vpop.xlane.xlu0 %34
    %v36 = vsel %vm32, %v30, 0.0
    %37 = vadd.xlane.f32.xlu0 %v36
    %v38 = vpop.xlane.xlu0 %37
    %v39 = vsel %vm32, %v31, 0.0
    %40 = vadd.xlane.f32.xlu0 %v39
    %v41 = vpop.xlane.xlu0 %40
    %v42 = vrcp.pop 32.0
    %v43 = vmul.f32 %v35, %v42
    %v44 = vmul.f32 %v38, %v42
    %v45 = vmul.f32 %v41, %v42
    %v46 = vsub.f32 %v29, %v43
    %v47 = vsub.f32 %v30, %v44
    %v48 = vsub.f32 %v31, %v45
    %v49 = vmul.f32 %v46, %v46
    %v50 = vmul.f32 %v47, %v47
    %v51 = vmul.f32 %v48, %v48
    %v52 = vsel %vm32, %v49, 0.0
    %53 = vadd.xlane.f32.xlu0 %v52
    %v54 = vpop.xlane.xlu0 %53
    %v55 = vsel %vm32, %v50, 0.0
    %56 = vadd.xlane.f32.xlu0 %v55
    %v57 = vpop.xlane.xlu0 %56
    %v58 = vsel %vm32, %v51, 0.0
    %59 = vadd.xlane.f32.xlu0 %v58
    %v60 = vpop.xlane.xlu0 %59
    %v61 = vmul.f32 %v54, %v42
    %v62 = vmul.f32 %v57, %v42
    %v63 = vmul.f32 %v60, %v42
    %v64 = vadd.f32 %v61, 1e-12
    %v65 = vadd.f32 %v62, 1e-12
    %v66 = vadd.f32 %v63, 1e-12
    %v67 = vrsqrt.pop %v64
    %v68 = vrsqrt.pop %v65
    %v69 = vrsqrt.pop %v66
    %v70 = vmul.f32 %v46, %v67
    %v71 = vmul.f32 %v47, %v68
    %v72 = vmul.f32 %v48, %v69
    %v73 = vlaneseq
    %v74 = vshrl.u32 %v73, 7
    %v75 = vsub.s32 0, %v74
    %v76 = vrot.slane %v19, %v75
    %v77 = vmul.f32 %v70, %v76
    %v78 = vmul.f32 %v71, %v76
    %v79 = vmul.f32 %v72, %v76
    %v80 = vlaneseq
    %v81 = vshrl.u32 %v80, 7
    %v82 = vsub.s32 1, %v81
    %v83 = vrot.slane %v19, %v82
    %v84 = vadd.f32 %v77, %v83
    %v85 = vadd.f32 %v78, %v83
    %v86 = vadd.f32 %v79, %v83
    %v87 = vadd.f32 %v84, %v23
    %v88 = vadd.f32 %v85, %v24
    %v89 = vadd.f32 %v86, %v25
    %v90 = vsel %vm32, %v87, 0.0
    %91 = vadd.xlane.f32.xlu0 %v90
    %v92 = vpop.xlane.xlu0 %91
    %v93 = vsel %vm32, %v88, 0.0
    %94 = vadd.xlane.f32.xlu0 %v93
    %v95 = vpop.xlane.xlu0 %94
    %v96 = vsel %vm32, %v89, 0.0
    %97 = vadd.xlane.f32.xlu0 %v96
    %v98 = vpop.xlane.xlu0 %97
    %v99 = vmul.f32 %v92, %v42
    %v100 = vmul.f32 %v95, %v42
    %v101 = vmul.f32 %v98, %v42
    %v102 = vsub.f32 %v87, %v99
    %v103 = vsub.f32 %v88, %v100
    %v104 = vsub.f32 %v89, %v101
    %v105 = vmul.f32 %v102, %v102
    %v106 = vmul.f32 %v103, %v103
    %v107 = vmul.f32 %v104, %v104
    %v108 = vsel %vm32, %v105, 0.0
    %109 = vadd.xlane.f32.xlu0 %v108
    %v110 = vpop.xlane.xlu0 %109
    %v111 = vsel %vm32, %v106, 0.0
    %112 = vadd.xlane.f32.xlu0 %v111
    %v113 = vpop.xlane.xlu0 %112
    %v114 = vsel %vm32, %v107, 0.0
    %115 = vadd.xlane.f32.xlu0 %v114
    %v116 = vpop.xlane.xlu0 %115
    %v117 = vmul.f32 %v110, %v42
    %v118 = vmul.f32 %v113, %v42
    %v119 = vmul.f32 %v116, %v42
    %v120 = vadd.f32 %v117, 1e-12
    %v121 = vadd.f32 %v118, 1e-12
    %v122 = vadd.f32 %v119, 1e-12
    %v123 = vrsqrt.pop %v120
    %v124 = vrsqrt.pop %v121
    %v125 = vrsqrt.pop %v122
    %v126 = vmul.f32 %v102, %v123
    %v127 = vmul.f32 %v103, %v124
    %v128 = vmul.f32 %v104, %v125
    %v129 = vmul.f32 %v126, %v76
    %v130 = vmul.f32 %v127, %v76
    %v131 = vmul.f32 %v128, %v76
    %v132 = vadd.f32 %v129, %v83
    %v133 = vadd.f32 %v130, %v83
    %v134 = vadd.f32 %v131, %v83
    %v135 = vld [vmem:[%s3 + $0x38] sm:$0xff]
    %v136 = vld [vmem:[%s3 + $0x40] sm:$0xff]
    %v137 = vld [vmem:[%s3 + $0x48] sm:$0xff]
    %v138 = vld [vmem:[%s1] sm:$0x1]
    %140 = vset.pattern.permute.xlu0 0
    %141 = vperm.xlu0 %140, %v135
    %v142 = vpop.permute.xlu0 %141
    %145 = vset.pattern.permute.xlu0 0
    %146 = vperm.xlu0 %145, %v136
    %v147 = vpop.permute.xlu0 %146
    %150 = vset.pattern.permute.xlu0 0
    %151 = vperm.xlu0 %150, %v137
    %v152 = vpop.permute.xlu0 %151
    %v155 = vlaneseq
    %v156 = vshrl.u32 %v155, 7
    %v157 = vsub.s32 0, %v156
    %v158 = vrot.slane %v138, %v157
    %vm160 = vcmp.eq.f32.partialorder %v142, %v158
    %vm161 = vcmp.eq.f32.partialorder %v147, %v158
    %vm162 = vcmp.eq.f32.partialorder %v152, %v158
    %v163 = vsel %vm160, 0.0, -1e+09
    %v164 = vsel %vm161, 0.0, -1e+09
    %v165 = vsel %vm162, 0.0, -1e+09
    %v166 = vld [vmem:[%s2] sm:$0xf]
    %v167 = vld [vmem:[%s2 + $0x4] sm:$0xf]
    %v168 = vld [vmem:[%s2 + $0x8] sm:$0xf]
    %v169 = vld [vmem:[%s2 + $0xc] sm:$0xf]
    %v170 = vld [vmem:[%s2 + $0x10] sm:$0xf]
    %v171 = vld [vmem:[%s2 + $0x14] sm:$0xf]
    %v172 = vld [vmem:[%s2 + $0x18] sm:$0xf]
    %v173 = vld [vmem:[%s2 + $0x1c] sm:$0xf]
    %v174 = vld [vmem:[%s2 + $0x20] sm:$0xf]
    %v175 = vld [vmem:[%s2 + $0x24] sm:$0xf]
    %v176 = vld [vmem:[%s2 + $0x28] sm:$0xf]
    %v177 = vld [vmem:[%s2 + $0x2c] sm:$0xf]
    %v178 = vld [vmem:[%s2 + $0x30] sm:$0xf]
    %v179 = vld [vmem:[%s2 + $0x34] sm:$0xf]
    %v180 = vld [vmem:[%s2 + $0x38] sm:$0xf]
    %v181 = vld [vmem:[%s2 + $0x3c] sm:$0xf]
    %v182 = vld [vmem:[%s2 + $0x40] sm:$0xf]
    %v183 = vld [vmem:[%s2 + $0x44] sm:$0xf]
    %v184 = vld [vmem:[%s2 + $0x48] sm:$0xf]
    %v185 = vld [vmem:[%s2 + $0x4c] sm:$0xf]
    %v186 = vld [vmem:[%s3 + $0x58] sm:$0xff]
    %v187 = vpack.c.bf16 %v133, %v132
    %v188 = vpack.c.bf16 %v134, %v134
    %v189 = vlaneseq
    %v190 = vshrl.u32 %v189, 7
    %v191 = vsub.s32 0, %v190
    %v192 = vrot.slane %v186, %v191
    %v197 = vunpack.c.l.b16 %v166
    %v198 = vunpack.c.l.b16 %v167
    %v199 = vunpack.c.l.b16 %v168
    %v200 = vunpack.c.l.b16 %v169
    %v201 = vpack.c.b16 %v198, %v197
    %v202 = vpack.c.b16 %v200, %v199
    %v206 = vsel %vm32, %v187, 0
    %v209 = vsel %vm32, %v188, 0
    %211 = vmatprep.subr.bf16.mxu0 0
    %212 = vmatpush1.bf16.msra.mxu0 %v201
    %213 = vmatprep.subr.bf16.mxu0 0
    %214 = vmatpush1.bf16.msra.mxu0 %v202
    %215 = vmatprep.subr.bf16.mxu0 0
    %216 = vmatpush1.bf16.msra.mxu0 0
    %217 = vmatprep.subr.bf16.mxu0 0
    %218 = vmatpush1.bf16.msra.mxu0 0
    %219 = vmatprep.subr.bf16.mxu0 0
    %220 = vmatpush1.bf16.msra.mxu0 0
    %221 = vmatprep.subr.bf16.mxu0 0
    %222 = vmatpush1.bf16.msra.mxu0 0
    %223 = vmatprep.subr.bf16.mxu0 0
    %224 = vmatpush1.bf16.msra.mxu0 0
    %225 = vmatprep.subr.bf16.mxu0 0
    %226 = vmatpush1.bf16.msra.mxu0 0
    %227 = vmatprep.subr.bf16.mxu0 0
    %228 = vmatpush1.bf16.msra.mxu0 0
    %229 = vmatprep.subr.bf16.mxu0 0
    %230 = vmatpush1.bf16.msra.mxu0 0
    %231 = vmatprep.subr.bf16.mxu0 0
    %232 = vmatpush1.bf16.msra.mxu0 0
    %233 = vmatprep.subr.bf16.mxu0 0
    %234 = vmatpush1.bf16.msra.mxu0 0
    %235 = vmatprep.subr.bf16.mxu0 0
    %236 = vmatpush1.bf16.msra.mxu0 0
    %237 = vmatprep.subr.bf16.mxu0 0
    %238 = vmatpush1.bf16.msra.mxu0 0
    %239 = vmatprep.subr.bf16.mxu0 0
    %240 = vmatpush1.bf16.msra.mxu0 0
    %241 = vmatprep.subr.bf16.mxu0 0
    %242 = vmatpush1.bf16.msra.mxu0 0
    %243 = vmatprep.mubr.bf16.mxu0 0
    %244 = vmatmul.mubr.bf16.gmra.mrb[0].mxu0 %v206
    %v245 = vpop.f32.mrb[0].mxu0
    %v246 = vadd.f32 %v192, %v245
    %v247 = vpop.f32.mrb[0].mxu0
    %v248 = vpop.f32.mrb[0].mxu0
    %v249 = vadd.f32 %v192, %v248
    %v250 = vpop.f32.mrb[0].mxu0
    %251 = vmatprep.mubr.bf16.mxu0 0
    %252 = vmatmul.mubr.bf16.gmra.mrb[0].mxu0 %v209
    %v253 = vpop.f32.mrb[0].mxu0
    %v254 = vadd.f32 %v192, %v253
    %v255 = vpop.f32.mrb[0].mxu0
    %v256 = vpop.f32.mrb[0].mxu0
    %v257 = vpop.f32.mrb[0].mxu0
    %258 = vdwg.mxu0
    %v259 = vmul.f32 %v246, 0.35355338
    %v260 = vmul.f32 %v249, 0.35355338
    %v261 = vmul.f32 %v254, 0.35355338
    %v262 = vpack.c.bf16 %v260, %v259
    %v263 = vpack.c.bf16 %v261, %v261
    %v264 = vpack.c.bf16 %v249, %v246
    %v265 = vpack.c.bf16 %v254, %v254
    %268 = vrot.lane.b32.xlu0 %v264, 96
    %v269 = vpop.permute.xlu0 %268
    %270 = vrot.lane.b32.xlu0 %v265, 96
    %v271 = vpop.permute.xlu0 %270
    %vm272 = vcmask 64512
    %v274 = vsel %vm272, %v262, 0
    %v277 = vsel %vm272, %v263, 0
    %v280 = vsel %vm272, %v269, 0
    %v283 = vsel %vm272, %v271, 0
    %285 = vmatprep.subr.bf16.mxu0 0
    %286 = vmatpush1.bf16.xpose.msra.mxu0 %v280
    %287 = vmatprep.subr.bf16.mxu0 0
    %288 = vmatpush1.bf16.xpose.msra.mxu0 %v283
    %289 = vmatprep.subr.bf16.mxu0 0
    %290 = vmatpush1.bf16.xpose.msra.mxu0 0
    %291 = vmatprep.subr.bf16.mxu0 0
    %292 = vmatpush1.bf16.xpose.msra.mxu0 0
    %293 = vmatprep.subr.bf16.mxu0 0
    %294 = vmatpush1.bf16.xpose.msra.mxu0 0
    %295 = vmatprep.subr.bf16.mxu0 0
    %296 = vmatpush1.bf16.xpose.msra.mxu0 0
    %297 = vmatprep.subr.bf16.mxu0 0
    %298 = vmatpush1.bf16.xpose.msra.mxu0 0
    %299 = vmatprep.subr.bf16.mxu0 0
    %300 = vmatpush1.bf16.xpose.msra.mxu0 0
    %301 = vmatprep.subr.bf16.mxu0 0
    %302 = vmatpush1.bf16.xpose.msra.mxu0 0
    %303 = vmatprep.subr.bf16.mxu0 0
    %304 = vmatpush1.bf16.xpose.msra.mxu0 0
    %305 = vmatprep.subr.bf16.mxu0 0
    %306 = vmatpush1.bf16.xpose.msra.mxu0 0
    %307 = vmatprep.subr.bf16.mxu0 0
    %308 = vmatpush1.bf16.xpose.msra.mxu0 0
    %309 = vmatprep.subr.bf16.mxu0 0
    %310 = vmatpush1.bf16.xpose.msra.mxu0 0
    %311 = vmatprep.subr.bf16.mxu0 0
    %312 = vmatpush1.bf16.xpose.msra.mxu0 0
    %313 = vmatprep.subr.bf16.mxu0 0
    %314 = vmatpush1.bf16.xpose.msra.mxu0 0
    %315 = vmatprep.subr.bf16.mxu0 0
    %316 = vmatpush1.bf16.xpose.msra.mxu0 0
    %317 = vmatprep.mubr.bf16.mxu0 0
    %318 = vmatmul.mubr.bf16.gmra.mrb[0].mxu0 %v274
    %v319 = vpop.f32.mrb[0].mxu0
    %v320 = vadd.f32 %v163, %v319
    %v321 = vpop.f32.mrb[0].mxu0
    %v322 = vpop.f32.mrb[0].mxu0
    %v323 = vadd.f32 %v164, %v322
    %v324 = vpop.f32.mrb[0].mxu0
    %325 = vmatprep.mubr.bf16.mxu0 0
    %326 = vmatmul.mubr.bf16.gmra.mrb[0].mxu0 %v277
    %v327 = vpop.f32.mrb[0].mxu0
    %v328 = vadd.f32 %v165, %v327
    %v329 = vpop.f32.mrb[0].mxu0
    %v330 = vpop.f32.mrb[0].mxu0
    %v331 = vpop.f32.mrb[0].mxu0
    %332 = vdwg.mxu0
    %vm333 = vcmask 195584
    %v334 = vsel %vm333, %v320, -inf
    %335 = vmax.xlane.f32.xlu0 %v334
    %v336 = vpop.xlane.xlu0 %335
    %v337 = vsel %vm333, %v323, -inf
    %338 = vmax.xlane.f32.xlu0 %v337
    %v339 = vpop.xlane.xlu0 %338
    %v340 = vsel %vm333, %v328, -inf
    %341 = vmax.xlane.f32.xlu0 %v340
    %v342 = vpop.xlane.xlu0 %341
    %v343 = vsub.f32 %v320, %v336
    %v344 = vsub.f32 %v323, %v339
    %v345 = vsub.f32 %v328, %v342
    %v346 = vmul.f32 %v343, 1.442695
    %v347 = vpow.pop %v346
    %v348 = vmul.f32 %v344, 1.442695
    %v349 = vpow.pop %v348
    %v350 = vmul.f32 %v345, 1.442695
    %v351 = vpow.pop %v350
    %v352 = vsel %vm333, %v347, 0.0
    %353 = vadd.xlane.f32.xlu0 %v352
    %v354 = vpop.xlane.xlu0 %353
    %v355 = vsel %vm333, %v349, 0.0
    %356 = vadd.xlane.f32.xlu0 %v355
    %v357 = vpop.xlane.xlu0 %356
    %v358 = vsel %vm333, %v351, 0.0
    %359 = vadd.xlane.f32.xlu0 %v358
    %v360 = vpop.xlane.xlu0 %359
    %v361 = vrcp.pop %v354
    %v362 = vrcp.pop %v357
    %v363 = vrcp.pop %v360
    %v364 = vmul.f32 %v347, %v361
    %v365 = vmul.f32 %v349, %v362
    %v366 = vmul.f32 %v351, %v363
    %v367 = vpack.c.bf16 %v365, %v364
    %v368 = vpack.c.bf16 %v366, %v366
    %369 = vrot.lane.b32.xlu0 %v264, 64
    %v370 = vpop.permute.xlu0 %369
    %371 = vrot.lane.b32.xlu0 %v265, 64
    %v372 = vpop.permute.xlu0 %371
    %v375 = vsel %vm333, %v367, 0
    %v378 = vsel %vm333, %v368, 0
    %vm380 = vcmask 1043456
    %v382 = vsel %vm380, %v372, 0
    %384 = vmatprep.subr.bf16.mxu0 0
    %385 = vmatpush1.bf16.msra.mxu0 %v370
    %386 = vmatprep.subr.bf16.mxu0 0
    %387 = vmatpush1.bf16.msra.mxu0 %v382
    %388 = vmatprep.subr.bf16.mxu0 0
    %389 = vmatpush1.bf16.msra.mxu0 0
    %390 = vmatprep.subr.bf16.mxu0 0
    %391 = vmatpush1.bf16.msra.mxu0 0
    %392 = vmatprep.subr.bf16.mxu0 0
    %393 = vmatpush1.bf16.msra.mxu0 0
    %394 = vmatprep.subr.bf16.mxu0 0
    %395 = vmatpush1.bf16.msra.mxu0 0
    %396 = vmatprep.subr.bf16.mxu0 0
    %397 = vmatpush1.bf16.msra.mxu0 0
    %398 = vmatprep.subr.bf16.mxu0 0
    %399 = vmatpush1.bf16.msra.mxu0 0
    %400 = vmatprep.subr.bf16.mxu0 0
    %401 = vmatpush1.bf16.msra.mxu0 0
    %402 = vmatprep.subr.bf16.mxu0 0
    %403 = vmatpush1.bf16.msra.mxu0 0
    %404 = vmatprep.subr.bf16.mxu0 0
    %405 = vmatpush1.bf16.msra.mxu0 0
    %406 = vmatprep.subr.bf16.mxu0 0
    %407 = vmatpush1.bf16.msra.mxu0 0
    %408 = vmatprep.subr.bf16.mxu0 0
    %409 = vmatpush1.bf16.msra.mxu0 0
    %410 = vmatprep.subr.bf16.mxu0 0
    %411 = vmatpush1.bf16.msra.mxu0 0
    %412 = vmatprep.subr.bf16.mxu0 0
    %413 = vmatpush1.bf16.msra.mxu0 0
    %414 = vmatprep.subr.bf16.mxu0 0
    %415 = vmatpush1.bf16.msra.mxu0 0
    %416 = vmatprep.mubr.bf16.mxu0 0
    %417 = vmatmul.mubr.bf16.gmra.mrb[0].mxu0 %v375
    %v418 = vpop.f32.mrb[0].mxu0
    %v419 = vadd.f32 0.0, %v418
    %v420 = vpop.f32.mrb[0].mxu0
    %v421 = vpop.f32.mrb[0].mxu0
    %v422 = vadd.f32 0.0, %v421
    %v423 = vpop.f32.mrb[0].mxu0
    %424 = vmatprep.mubr.bf16.mxu0 0
    %425 = vmatmul.mubr.bf16.gmra.mrb[0].mxu0 %v378
    %v426 = vpop.f32.mrb[0].mxu0
    %v427 = vadd.f32 0.0, %v426
    %v428 = vpop.f32.mrb[0].mxu0
    %v429 = vpop.f32.mrb[0].mxu0
    %v430 = vpop.f32.mrb[0].mxu0
    %431 = vdwg.mxu0
    %434 = vrot.lane.b32.xlu0 %v262, 120
    %v435 = vpop.permute.xlu0 %434
    %436 = vrot.lane.b32.xlu0 %v263, 120
    %v437 = vpop.permute.xlu0 %436
    %438 = vrot.lane.b32.xlu0 %v264, 88
    %v439 = vpop.permute.xlu0 %438
    %440 = vrot.lane.b32.xlu0 %v265, 88
    %v441 = vpop.permute.xlu0 %440
    %v443 = vsel %vm272, %v435, 0
    %v446 = vsel %vm272, %v437, 0
    %v449 = vsel %vm272, %v439, 0
    %v452 = vsel %vm272, %v441, 0
    %454 = vmatprep.subr.bf16.mxu0 0
    %455 = vmatpush1.bf16.xpose.msra.mxu0 %v449
    %456 = vmatprep.subr.bf16.mxu0 0
    %457 = vmatpush1.bf16.xpose.msra.mxu0 %v452
    %458 = vmatprep.subr.bf16.mxu0 0
    %459 = vmatpush1.bf16.xpose.msra.mxu0 0
    %460 = vmatprep.subr.bf16.mxu0 0
    %461 = vmatpush1.bf16.xpose.msra.mxu0 0
    %462 = vmatprep.subr.bf16.mxu0 0
    %463 = vmatpush1.bf16.xpose.msra.mxu0 0
    %464 = vmatprep.subr.bf16.mxu0 0
    %465 = vmatpush1.bf16.xpose.msra.mxu0 0
    %466 = vmatprep.subr.bf16.mxu0 0
    %467 = vmatpush1.bf16.xpose.msra.mxu0 0
    %468 = vmatprep.subr.bf16.mxu0 0
    %469 = vmatpush1.bf16.xpose.msra.mxu0 0
    %470 = vmatprep.subr.bf16.mxu0 0
    %471 = vmatpush1.bf16.xpose.msra.mxu0 0
    %472 = vmatprep.subr.bf16.mxu0 0
    %473 = vmatpush1.bf16.xpose.msra.mxu0 0
    %474 = vmatprep.subr.bf16.mxu0 0
    %475 = vmatpush1.bf16.xpose.msra.mxu0 0
    %476 = vmatprep.subr.bf16.mxu0 0
    %477 = vmatpush1.bf16.xpose.msra.mxu0 0
    %478 = vmatprep.subr.bf16.mxu0 0
    %479 = vmatpush1.bf16.xpose.msra.mxu0 0
    %480 = vmatprep.subr.bf16.mxu0 0
    %481 = vmatpush1.bf16.xpose.msra.mxu0 0
    %482 = vmatprep.subr.bf16.mxu0 0
    %483 = vmatpush1.bf16.xpose.msra.mxu0 0
    %484 = vmatprep.subr.bf16.mxu0 0
    %485 = vmatpush1.bf16.xpose.msra.mxu0 0
    %486 = vmatprep.mubr.bf16.mxu0 0
    %487 = vmatmul.mubr.bf16.gmra.mrb[0].mxu0 %v443
    %v488 = vpop.f32.mrb[0].mxu0
    %v489 = vadd.f32 %v163, %v488
    %v490 = vpop.f32.mrb[0].mxu0
    %v491 = vpop.f32.mrb[0].mxu0
    %v492 = vadd.f32 %v164, %v491
    %v493 = vpop.f32.mrb[0].mxu0
    %494 = vmatprep.mubr.bf16.mxu0 0
    %495 = vmatmul.mubr.bf16.gmra.mrb[0].mxu0 %v446
    %v496 = vpop.f32.mrb[0].mxu0
    %v497 = vadd.f32 %v165, %v496
    %v498 = vpop.f32.mrb[0].mxu0
    %v499 = vpop.f32.mrb[0].mxu0
    %v500 = vpop.f32.mrb[0].mxu0
    %501 = vdwg.mxu0
    %v502 = vsel %vm333, %v489, -inf
    %503 = vmax.xlane.f32.xlu0 %v502
    %v504 = vpop.xlane.xlu0 %503
    %v505 = vsel %vm333, %v492, -inf
    %506 = vmax.xlane.f32.xlu0 %v505
    %v507 = vpop.xlane.xlu0 %506
    %v508 = vsel %vm333, %v497, -inf
    %509 = vmax.xlane.f32.xlu0 %v508
    %v510 = vpop.xlane.xlu0 %509
    %v511 = vsub.f32 %v489, %v504
    %v512 = vsub.f32 %v492, %v507
    %v513 = vsub.f32 %v497, %v510
    %v514 = vmul.f32 %v511, 1.442695
    %v515 = vpow.pop %v514
    %v516 = vmul.f32 %v512, 1.442695
    %v517 = vpow.pop %v516
    %v518 = vmul.f32 %v513, 1.442695
    %v519 = vpow.pop %v518
    %v520 = vsel %vm333, %v515, 0.0
    %521 = vadd.xlane.f32.xlu0 %v520
    %v522 = vpop.xlane.xlu0 %521
    %v523 = vsel %vm333, %v517, 0.0
    %524 = vadd.xlane.f32.xlu0 %v523
    %v525 = vpop.xlane.xlu0 %524
    %v526 = vsel %vm333, %v519, 0.0
    %527 = vadd.xlane.f32.xlu0 %v526
    %v528 = vpop.xlane.xlu0 %527
    %v529 = vrcp.pop %v522
    %v530 = vrcp.pop %v525
    %v531 = vrcp.pop %v528
    %v532 = vmul.f32 %v515, %v529
    %v533 = vmul.f32 %v517, %v530
    %v534 = vmul.f32 %v519, %v531
    %v535 = vpack.c.bf16 %v533, %v532
    %v536 = vpack.c.bf16 %v534, %v534
    %537 = vrot.lane.b32.xlu0 %v264, 56
    %v538 = vpop.permute.xlu0 %537
    %539 = vrot.lane.b32.xlu0 %v265, 56
    %v540 = vpop.permute.xlu0 %539
    %v543 = vsel %vm333, %v535, 0
    %v546 = vsel %vm333, %v536, 0
    %v549 = vsel %vm380, %v540, 0
    %551 = vmatprep.subr.bf16.mxu0 0
    %552 = vmatpush1.bf16.msra.mxu0 %v538
    %553 = vmatprep.subr.bf16.mxu0 0
    %554 = vmatpush1.bf16.msra.mxu0 %v549
    %555 = vmatprep.subr.bf16.mxu0 0
    %556 = vmatpush1.bf16.msra.mxu0 0
    %557 = vmatprep.subr.bf16.mxu0 0
    %558 = vmatpush1.bf16.msra.mxu0 0
    %559 = vmatprep.subr.bf16.mxu0 0
    %560 = vmatpush1.bf16.msra.mxu0 0
    %561 = vmatprep.subr.bf16.mxu0 0
    %562 = vmatpush1.bf16.msra.mxu0 0
    %563 = vmatprep.subr.bf16.mxu0 0
    %564 = vmatpush1.bf16.msra.mxu0 0
    %565 = vmatprep.subr.bf16.mxu0 0
    %566 = vmatpush1.bf16.msra.mxu0 0
    %567 = vmatprep.subr.bf16.mxu0 0
    %568 = vmatpush1.bf16.msra.mxu0 0
    %569 = vmatprep.subr.bf16.mxu0 0
    %570 = vmatpush1.bf16.msra.mxu0 0
    %571 = vmatprep.subr.bf16.mxu0 0
    %572 = vmatpush1.bf16.msra.mxu0 0
    %573 = vmatprep.subr.bf16.mxu0 0
    %574 = vmatpush1.bf16.msra.mxu0 0
    %575 = vmatprep.subr.bf16.mxu0 0
    %576 = vmatpush1.bf16.msra.mxu0 0
    %577 = vmatprep.subr.bf16.mxu0 0
    %578 = vmatpush1.bf16.msra.mxu0 0
    %579 = vmatprep.subr.bf16.mxu0 0
    %580 = vmatpush1.bf16.msra.mxu0 0
    %581 = vmatprep.subr.bf16.mxu0 0
    %582 = vmatpush1.bf16.msra.mxu0 0
    %583 = vmatprep.mubr.bf16.mxu0 0
    %584 = vmatmul.mubr.bf16.gmra.mrb[0].mxu0 %v543
    %v585 = vpop.f32.mrb[0].mxu0
    %v586 = vadd.f32 0.0, %v585
    %v587 = vpop.f32.mrb[0].mxu0
    %v588 = vpop.f32.mrb[0].mxu0
    %v589 = vadd.f32 0.0, %v588
    %v590 = vpop.f32.mrb[0].mxu0
    %591 = vmatprep.mubr.bf16.mxu0 0
    %592 = vmatmul.mubr.bf16.gmra.mrb[0].mxu0 %v546
    %v593 = vpop.f32.mrb[0].mxu0
    %v594 = vadd.f32 0.0, %v593
    %v595 = vpop.f32.mrb[0].mxu0
    %v596 = vpop.f32.mrb[0].mxu0
    %v597 = vpop.f32.mrb[0].mxu0
    %598 = vdwg.mxu0
    %599 = vrot.lane.b32.xlu0 %v262, 112
    %v600 = vpop.permute.xlu0 %599
    %601 = vrot.lane.b32.xlu0 %v263, 112
    %v602 = vpop.permute.xlu0 %601
    %603 = vrot.lane.b32.xlu0 %v264, 80
    %v604 = vpop.permute.xlu0 %603
    %605 = vrot.lane.b32.xlu0 %v265, 80
    %v606 = vpop.permute.xlu0 %605
    %v608 = vsel %vm272, %v600, 0
    %v611 = vsel %vm272, %v602, 0
    %v614 = vsel %vm272, %v604, 0
    %v617 = vsel %vm272, %v606, 0
    %619 = vmatprep.subr.bf16.mxu0 0
    %620 = vmatpush1.bf16.xpose.msra.mxu0 %v614
    %621 = vmatprep.subr.bf16.mxu0 0
    %622 = vmatpush1.bf16.xpose.msra.mxu0 %v617
    %623 = vmatprep.subr.bf16.mxu0 0
    %624 = vmatpush1.bf16.xpose.msra.mxu0 0
    %625 = vmatprep.subr.bf16.mxu0 0
    %626 = vmatpush1.bf16.xpose.msra.mxu0 0
    %627 = vmatprep.subr.bf16.mxu0 0
    %628 = vmatpush1.bf16.xpose.msra.mxu0 0
    %629 = vmatprep.subr.bf16.mxu0 0
    %630 = vmatpush1.bf16.xpose.msra.mxu0 0
    %631 = vmatprep.subr.bf16.mxu0 0
    %632 = vmatpush1.bf16.xpose.msra.mxu0 0
    %633 = vmatprep.subr.bf16.mxu0 0
    %634 = vmatpush1.bf16.xpose.msra.mxu0 0
    %635 = vmatprep.subr.bf16.mxu0 0
    %636 = vmatpush1.bf16.xpose.msra.mxu0 0
    %637 = vmatprep.subr.bf16.mxu0 0
    %638 = vmatpush1.bf16.xpose.msra.mxu0 0
    %639 = vmatprep.subr.bf16.mxu0 0
    %640 = vmatpush1.bf16.xpose.msra.mxu0 0
    %641 = vmatprep.subr.bf16.mxu0 0
    %642 = vmatpush1.bf16.xpose.msra.mxu0 0
    %643 = vmatprep.subr.bf16.mxu0 0
    %644 = vmatpush1.bf16.xpose.msra.mxu0 0
    %645 = vmatprep.subr.bf16.mxu0 0
    %646 = vmatpush1.bf16.xpose.msra.mxu0 0
    %647 = vmatprep.subr.bf16.mxu0 0
    %648 = vmatpush1.bf16.xpose.msra.mxu0 0
    %649 = vmatprep.subr.bf16.mxu0 0
    %650 = vmatpush1.bf16.xpose.msra.mxu0 0
    %651 = vmatprep.mubr.bf16.mxu0 0
    %652 = vmatmul.mubr.bf16.gmra.mrb[0].mxu0 %v608
    %v653 = vpop.f32.mrb[0].mxu0
    %v654 = vadd.f32 %v163, %v653
    %v655 = vpop.f32.mrb[0].mxu0
    %v656 = vpop.f32.mrb[0].mxu0
    %v657 = vadd.f32 %v164, %v656
    %v658 = vpop.f32.mrb[0].mxu0
    %659 = vmatprep.mubr.bf16.mxu0 0
    %660 = vmatmul.mubr.bf16.gmra.mrb[0].mxu0 %v611
    %v661 = vpop.f32.mrb[0].mxu0
    %v662 = vadd.f32 %v165, %v661
    %v663 = vpop.f32.mrb[0].mxu0
    %v664 = vpop.f32.mrb[0].mxu0
    %v665 = vpop.f32.mrb[0].mxu0
    %666 = vdwg.mxu0
    %v667 = vsel %vm333, %v654, -inf
    %668 = vmax.xlane.f32.xlu0 %v667
    %v669 = vpop.xlane.xlu0 %668
    %v670 = vsel %vm333, %v657, -inf
    %671 = vmax.xlane.f32.xlu0 %v670
    %v672 = vpop.xlane.xlu0 %671
    %v673 = vsel %vm333, %v662, -inf
    %674 = vmax.xlane.f32.xlu0 %v673
    %v675 = vpop.xlane.xlu0 %674
    %v676 = vsub.f32 %v654, %v669
    %v677 = vsub.f32 %v657, %v672
    %v678 = vsub.f32 %v662, %v675
    %v679 = vmul.f32 %v676, 1.442695
    %v680 = vpow.pop %v679
    %v681 = vmul.f32 %v677, 1.442695
    %v682 = vpow.pop %v681
    %v683 = vmul.f32 %v678, 1.442695
    %v684 = vpow.pop %v683
    %v685 = vsel %vm333, %v680, 0.0
    %686 = vadd.xlane.f32.xlu0 %v685
    %v687 = vpop.xlane.xlu0 %686
    %v688 = vsel %vm333, %v682, 0.0
    %689 = vadd.xlane.f32.xlu0 %v688
    %v690 = vpop.xlane.xlu0 %689
    %v691 = vsel %vm333, %v684, 0.0
    %692 = vadd.xlane.f32.xlu0 %v691
    %v693 = vpop.xlane.xlu0 %692
    %v694 = vrcp.pop %v687
    %v695 = vrcp.pop %v690
    %v696 = vrcp.pop %v693
    %v697 = vmul.f32 %v680, %v694
    %v698 = vmul.f32 %v682, %v695
    %v699 = vmul.f32 %v684, %v696
    %v700 = vpack.c.bf16 %v698, %v697
    %v701 = vpack.c.bf16 %v699, %v699
    %702 = vrot.lane.b32.xlu0 %v264, 48
    %v703 = vpop.permute.xlu0 %702
    %704 = vrot.lane.b32.xlu0 %v265, 48
    %v705 = vpop.permute.xlu0 %704
    %v708 = vsel %vm333, %v700, 0
    %v711 = vsel %vm333, %v701, 0
    %v714 = vsel %vm380, %v705, 0
    %716 = vmatprep.subr.bf16.mxu0 0
    %717 = vmatpush1.bf16.msra.mxu0 %v703
    %718 = vmatprep.subr.bf16.mxu0 0
    %719 = vmatpush1.bf16.msra.mxu0 %v714
    %720 = vmatprep.subr.bf16.mxu0 0
    %721 = vmatpush1.bf16.msra.mxu0 0
    %722 = vmatprep.subr.bf16.mxu0 0
    %723 = vmatpush1.bf16.msra.mxu0 0
    %724 = vmatprep.subr.bf16.mxu0 0
    %725 = vmatpush1.bf16.msra.mxu0 0
    %726 = vmatprep.subr.bf16.mxu0 0
    %727 = vmatpush1.bf16.msra.mxu0 0
    %728 = vmatprep.subr.bf16.mxu0 0
    %729 = vmatpush1.bf16.msra.mxu0 0
    %730 = vmatprep.subr.bf16.mxu0 0
    %731 = vmatpush1.bf16.msra.mxu0 0
    %732 = vmatprep.subr.bf16.mxu0 0
    %733 = vmatpush1.bf16.msra.mxu0 0
    %734 = vmatprep.subr.bf16.mxu0 0
    %735 = vmatpush1.bf16.msra.mxu0 0
    %736 = vmatprep.subr.bf16.mxu0 0
    %737 = vmatpush1.bf16.msra.mxu0 0
    %738 = vmatprep.subr.bf16.mxu0 0
    %739 = vmatpush1.bf16.msra.mxu0 0
    %740 = vmatprep.subr.bf16.mxu0 0
    %741 = vmatpush1.bf16.msra.mxu0 0
    %742 = vmatprep.subr.bf16.mxu0 0
    %743 = vmatpush1.bf16.msra.mxu0 0
    %744 = vmatprep.subr.bf16.mxu0 0
    %745 = vmatpush1.bf16.msra.mxu0 0
    %746 = vmatprep.subr.bf16.mxu0 0
    %747 = vmatpush1.bf16.msra.mxu0 0
    %748 = vmatprep.mubr.bf16.mxu0 0
    %749 = vmatmul.mubr.bf16.gmra.mrb[0].mxu0 %v708
    %v750 = vpop.f32.mrb[0].mxu0
    %v751 = vadd.f32 0.0, %v750
    %v752 = vpop.f32.mrb[0].mxu0
    %v753 = vpop.f32.mrb[0].mxu0
    %v754 = vadd.f32 0.0, %v753
    %v755 = vpop.f32.mrb[0].mxu0
    %756 = vmatprep.mubr.bf16.mxu0 0
    %757 = vmatmul.mubr.bf16.gmra.mrb[0].mxu0 %v711
    %v758 = vpop.f32.mrb[0].mxu0
    %v759 = vadd.f32 0.0, %v758
    %v760 = vpop.f32.mrb[0].mxu0
    %v761 = vpop.f32.mrb[0].mxu0
    %v762 = vpop.f32.mrb[0].mxu0
    %763 = vdwg.mxu0
    %764 = vrot.lane.b32.xlu0 %v262, 104
    %v765 = vpop.permute.xlu0 %764
    %766 = vrot.lane.b32.xlu0 %v263, 104
    %v767 = vpop.permute.xlu0 %766
    %768 = vrot.lane.b32.xlu0 %v264, 72
    %v769 = vpop.permute.xlu0 %768
    %770 = vrot.lane.b32.xlu0 %v265, 72
    %v771 = vpop.permute.xlu0 %770
    %v773 = vsel %vm272, %v765, 0
    %v776 = vsel %vm272, %v767, 0
    %v779 = vsel %vm272, %v769, 0
    %v782 = vsel %vm272, %v771, 0
    %784 = vmatprep.subr.bf16.mxu0 0
    %785 = vmatpush1.bf16.xpose.msra.mxu0 %v779
    %786 = vmatprep.subr.bf16.mxu0 0
    %787 = vmatpush1.bf16.xpose.msra.mxu0 %v782
    %788 = vmatprep.subr.bf16.mxu0 0
    %789 = vmatpush1.bf16.xpose.msra.mxu0 0
    %790 = vmatprep.subr.bf16.mxu0 0
    %791 = vmatpush1.bf16.xpose.msra.mxu0 0
    %792 = vmatprep.subr.bf16.mxu0 0
    %793 = vmatpush1.bf16.xpose.msra.mxu0 0
    %794 = vmatprep.subr.bf16.mxu0 0
    %795 = vmatpush1.bf16.xpose.msra.mxu0 0
    %796 = vmatprep.subr.bf16.mxu0 0
    %797 = vmatpush1.bf16.xpose.msra.mxu0 0
    %798 = vmatprep.subr.bf16.mxu0 0
    %799 = vmatpush1.bf16.xpose.msra.mxu0 0
    %800 = vmatprep.subr.bf16.mxu0 0
    %801 = vmatpush1.bf16.xpose.msra.mxu0 0
    %802 = vmatprep.subr.bf16.mxu0 0
    %803 = vmatpush1.bf16.xpose.msra.mxu0 0
    %804 = vmatprep.subr.bf16.mxu0 0
    %805 = vmatpush1.bf16.xpose.msra.mxu0 0
    %806 = vmatprep.subr.bf16.mxu0 0
    %807 = vmatpush1.bf16.xpose.msra.mxu0 0
    %808 = vmatprep.subr.bf16.mxu0 0
    %809 = vmatpush1.bf16.xpose.msra.mxu0 0
    %810 = vmatprep.subr.bf16.mxu0 0
    %811 = vmatpush1.bf16.xpose.msra.mxu0 0
    %812 = vmatprep.subr.bf16.mxu0 0
    %813 = vmatpush1.bf16.xpose.msra.mxu0 0
    %814 = vmatprep.subr.bf16.mxu0 0
    %815 = vmatpush1.bf16.xpose.msra.mxu0 0
    %816 = vmatprep.mubr.bf16.mxu0 0
    %817 = vmatmul.mubr.bf16.gmra.mrb[0].mxu0 %v773
    %v818 = vpop.f32.mrb[0].mxu0
    %v819 = vadd.f32 %v163, %v818
    %v820 = vpop.f32.mrb[0].mxu0
    %v821 = vpop.f32.mrb[0].mxu0
    %v822 = vadd.f32 %v164, %v821
    %v823 = vpop.f32.mrb[0].mxu0
    %824 = vmatprep.mubr.bf16.mxu0 0
    %825 = vmatmul.mubr.bf16.gmra.mrb[0].mxu0 %v776
    %v826 = vpop.f32.mrb[0].mxu0
    %v827 = vadd.f32 %v165, %v826
    %v828 = vpop.f32.mrb[0].mxu0
    %v829 = vpop.f32.mrb[0].mxu0
    %v830 = vpop.f32.mrb[0].mxu0
    %831 = vdwg.mxu0
    %v832 = vsel %vm333, %v819, -inf
    %833 = vmax.xlane.f32.xlu0 %v832
    %v834 = vpop.xlane.xlu0 %833
    %v835 = vsel %vm333, %v822, -inf
    %836 = vmax.xlane.f32.xlu0 %v835
    %v837 = vpop.xlane.xlu0 %836
    %v838 = vsel %vm333, %v827, -inf
    %839 = vmax.xlane.f32.xlu0 %v838
    %v840 = vpop.xlane.xlu0 %839
    %v841 = vsub.f32 %v819, %v834
    %v842 = vsub.f32 %v822, %v837
    %v843 = vsub.f32 %v827, %v840
    %v844 = vmul.f32 %v841, 1.442695
    %v845 = vpow.pop %v844
    %v846 = vmul.f32 %v842, 1.442695
    %v847 = vpow.pop %v846
    %v848 = vmul.f32 %v843, 1.442695
    %v849 = vpow.pop %v848
    %v850 = vsel %vm333, %v845, 0.0
    %851 = vadd.xlane.f32.xlu0 %v850
    %v852 = vpop.xlane.xlu0 %851
    %v853 = vsel %vm333, %v847, 0.0
    %854 = vadd.xlane.f32.xlu0 %v853
    %v855 = vpop.xlane.xlu0 %854
    %v856 = vsel %vm333, %v849, 0.0
    %857 = vadd.xlane.f32.xlu0 %v856
    %v858 = vpop.xlane.xlu0 %857
    %v859 = vrcp.pop %v852
    %v860 = vrcp.pop %v855
    %v861 = vrcp.pop %v858
    %v862 = vmul.f32 %v845, %v859
    %v863 = vmul.f32 %v847, %v860
    %v864 = vmul.f32 %v849, %v861
    %v865 = vpack.c.bf16 %v863, %v862
    %v866 = vpack.c.bf16 %v864, %v864
    %867 = vrot.lane.b32.xlu0 %v264, 40
    %v868 = vpop.permute.xlu0 %867
    %869 = vrot.lane.b32.xlu0 %v265, 40
    %v870 = vpop.permute.xlu0 %869
    %v873 = vsel %vm333, %v865, 0
    %v876 = vsel %vm333, %v866, 0
    %v879 = vsel %vm380, %v870, 0
    %881 = vmatprep.subr.bf16.mxu0 0
    %882 = vmatpush1.bf16.msra.mxu0 %v868
    %883 = vmatprep.subr.bf16.mxu0 0
    %884 = vmatpush1.bf16.msra.mxu0 %v879
    %885 = vmatprep.subr.bf16.mxu0 0
    %886 = vmatpush1.bf16.msra.mxu0 0
    %887 = vmatprep.subr.bf16.mxu0 0
    %888 = vmatpush1.bf16.msra.mxu0 0
    %889 = vmatprep.subr.bf16.mxu0 0
    %890 = vmatpush1.bf16.msra.mxu0 0
    %891 = vmatprep.subr.bf16.mxu0 0
    %892 = vmatpush1.bf16.msra.mxu0 0
    %893 = vmatprep.subr.bf16.mxu0 0
    %894 = vmatpush1.bf16.msra.mxu0 0
    %895 = vmatprep.subr.bf16.mxu0 0
    %896 = vmatpush1.bf16.msra.mxu0 0
    %897 = vmatprep.subr.bf16.mxu0 0
    %898 = vmatpush1.bf16.msra.mxu0 0
    %899 = vmatprep.subr.bf16.mxu0 0
    %900 = vmatpush1.bf16.msra.mxu0 0
    %901 = vmatprep.subr.bf16.mxu0 0
    %902 = vmatpush1.bf16.msra.mxu0 0
    %903 = vmatprep.subr.bf16.mxu0 0
    %904 = vmatpush1.bf16.msra.mxu0 0
    %905 = vmatprep.subr.bf16.mxu0 0
    %906 = vmatpush1.bf16.msra.mxu0 0
    %907 = vmatprep.subr.bf16.mxu0 0
    %908 = vmatpush1.bf16.msra.mxu0 0
    %909 = vmatprep.subr.bf16.mxu0 0
    %910 = vmatpush1.bf16.msra.mxu0 0
    %911 = vmatprep.subr.bf16.mxu0 0
    %912 = vmatpush1.bf16.msra.mxu0 0
    %913 = vmatprep.mubr.bf16.mxu0 0
    %914 = vmatmul.mubr.bf16.gmra.mrb[0].mxu0 %v873
    %v915 = vpop.f32.mrb[0].mxu0
    %v916 = vadd.f32 0.0, %v915
    %v917 = vpop.f32.mrb[0].mxu0
    %v918 = vpop.f32.mrb[0].mxu0
    %v919 = vadd.f32 0.0, %v918
    %v920 = vpop.f32.mrb[0].mxu0
    %921 = vmatprep.mubr.bf16.mxu0 0
    %922 = vmatmul.mubr.bf16.gmra.mrb[0].mxu0 %v876
    %v923 = vpop.f32.mrb[0].mxu0
    %v924 = vadd.f32 0.0, %v923
    %v925 = vpop.f32.mrb[0].mxu0
    %v926 = vpop.f32.mrb[0].mxu0
    %v927 = vpop.f32.mrb[0].mxu0
    %928 = vdwg.mxu0
    %932 = vrot.lane.b32.xlu0 %v586, 8
    %v933 = vpop.permute.xlu0 %932
    %934 = vrot.lane.b32.xlu0 %v589, 8
    %v935 = vpop.permute.xlu0 %934
    %936 = vrot.lane.b32.xlu0 %v594, 8
    %v937 = vpop.permute.xlu0 %936
    %944 = vrot.lane.b32.xlu0 %v751, 16
    %v945 = vpop.permute.xlu0 %944
    %946 = vrot.lane.b32.xlu0 %v754, 16
    %v947 = vpop.permute.xlu0 %946
    %948 = vrot.lane.b32.xlu0 %v759, 16
    %v949 = vpop.permute.xlu0 %948
    %956 = vrot.lane.b32.xlu0 %v916, 24
    %v957 = vpop.permute.xlu0 %956
    %958 = vrot.lane.b32.xlu0 %v919, 24
    %v959 = vpop.permute.xlu0 %958
    %960 = vrot.lane.b32.xlu0 %v924, 24
    %v961 = vpop.permute.xlu0 %960
    %v965 = vsel %vm272, %v419, %v933
    %v966 = vsel %vm272, %v422, %v935
    %v967 = vsel %vm272, %v427, %v937
    %vm968 = vcmask 130048
    %v969 = vsel %vm968, %v965, %v945
    %v970 = vsel %vm968, %v966, %v947
    %v971 = vsel %vm968, %v967, %v949
    %v972 = vsel %vm333, %v969, %v957
    %v973 = vsel %vm333, %v970, %v959
    %v974 = vsel %vm333, %v971, %v961
    %v975 = vpack.c.bf16 %v973, %v972
    %v976 = vpack.c.bf16 %v974, %v974
    %v977 = vlaneseq
    %v978 = vshrl.u32 %v977, 7
    %v979 = vsub.s32 2, %v978
    %v980 = vrot.slane %v186, %v979
    %v985 = vunpack.c.l.b16 %v170
    %v986 = vunpack.c.l.b16 %v171
    %v987 = vunpack.c.l.b16 %v172
    %v988 = vunpack.c.l.b16 %v173
    %v989 = vpack.c.b16 %v986, %v985
    %v990 = vpack.c.b16 %v988, %v987
    %v994 = vsel %vm32, %v975, 0
    %v997 = vsel %vm32, %v976, 0
    %999 = vmatprep.subr.bf16.mxu0 0
    %1000 = vmatpush1.bf16.msra.mxu0 %v989
    %1001 = vmatprep.subr.bf16.mxu0 0
    %1002 = vmatpush1.bf16.msra.mxu0 %v990
    %1003 = vmatprep.subr.bf16.mxu0 0
    %1004 = vmatpush1.bf16.msra.mxu0 0
    %1005 = vmatprep.subr.bf16.mxu0 0
    %1006 = vmatpush1.bf16.msra.mxu0 0
    %1007 = vmatprep.subr.bf16.mxu0 0
    %1008 = vmatpush1.bf16.msra.mxu0 0
    %1009 = vmatprep.subr.bf16.mxu0 0
    %1010 = vmatpush1.bf16.msra.mxu0 0
    %1011 = vmatprep.subr.bf16.mxu0 0
    %1012 = vmatpush1.bf16.msra.mxu0 0
    %1013 = vmatprep.subr.bf16.mxu0 0
    %1014 = vmatpush1.bf16.msra.mxu0 0
    %1015 = vmatprep.subr.bf16.mxu0 0
    %1016 = vmatpush1.bf16.msra.mxu0 0
    %1017 = vmatprep.subr.bf16.mxu0 0
    %1018 = vmatpush1.bf16.msra.mxu0 0
    %1019 = vmatprep.subr.bf16.mxu0 0
    %1020 = vmatpush1.bf16.msra.mxu0 0
    %1021 = vmatprep.subr.bf16.mxu0 0
    %1022 = vmatpush1.bf16.msra.mxu0 0
    %1023 = vmatprep.subr.bf16.mxu0 0
    %1024 = vmatpush1.bf16.msra.mxu0 0
    %1025 = vmatprep.subr.bf16.mxu0 0
    %1026 = vmatpush1.bf16.msra.mxu0 0
    %1027 = vmatprep.subr.bf16.mxu0 0
    %1028 = vmatpush1.bf16.msra.mxu0 0
    %1029 = vmatprep.subr.bf16.mxu0 0
    %1030 = vmatpush1.bf16.msra.mxu0 0
    %1031 = vmatprep.mubr.bf16.mxu0 0
    %1032 = vmatmul.mubr.bf16.gmra.mrb[0].mxu0 %v994
    %v1033 = vpop.f32.mrb[0].mxu0
    %v1034 = vadd.f32 %v980, %v1033
    %v1035 = vpop.f32.mrb[0].mxu0
    %v1036 = vpop.f32.mrb[0].mxu0
    %v1037 = vadd.f32 %v980, %v1036
    %v1038 = vpop.f32.mrb[0].mxu0
    %1039 = vmatprep.mubr.bf16.mxu0 0
    %1040 = vmatmul.mubr.bf16.gmra.mrb[0].mxu0 %v997
    %v1041 = vpop.f32.mrb[0].mxu0
    %v1042 = vadd.f32 %v980, %v1041
    %v1043 = vpop.f32.mrb[0].mxu0
    %v1044 = vpop.f32.mrb[0].mxu0
    %v1045 = vpop.f32.mrb[0].mxu0
    %1046 = vdwg.mxu0
    %v1047 = vadd.f32 %v132, %v1034
    %v1048 = vadd.f32 %v133, %v1037
    %v1049 = vadd.f32 %v134, %v1042
    %v1050 = vsel %vm32, %v1047, 0.0
    %1051 = vadd.xlane.f32.xlu0 %v1050
    %v1052 = vpop.xlane.xlu0 %1051
    %v1053 = vsel %vm32, %v1048, 0.0
    %1054 = vadd.xlane.f32.xlu0 %v1053
    %v1055 = vpop.xlane.xlu0 %1054
    %v1056 = vsel %vm32, %v1049, 0.0
    %1057 = vadd.xlane.f32.xlu0 %v1056
    %v1058 = vpop.xlane.xlu0 %1057
    %v1059 = vmul.f32 %v1052, %v42
    %v1060 = vmul.f32 %v1055, %v42
    %v1061 = vmul.f32 %v1058, %v42
    %v1062 = vsub.f32 %v1047, %v1059
    %v1063 = vsub.f32 %v1048, %v1060
    %v1064 = vsub.f32 %v1049, %v1061
    %v1065 = vmul.f32 %v1062, %v1062
    %v1066 = vmul.f32 %v1063, %v1063
    %v1067 = vmul.f32 %v1064, %v1064
    %v1068 = vsel %vm32, %v1065, 0.0
    %1069 = vadd.xlane.f32.xlu0 %v1068
    %v1070 = vpop.xlane.xlu0 %1069
    %v1071 = vsel %vm32, %v1066, 0.0
    %1072 = vadd.xlane.f32.xlu0 %v1071
    %v1073 = vpop.xlane.xlu0 %1072
    %v1074 = vsel %vm32, %v1067, 0.0
    %1075 = vadd.xlane.f32.xlu0 %v1074
    %v1076 = vpop.xlane.xlu0 %1075
    %v1077 = vmul.f32 %v1070, %v42
    %v1078 = vmul.f32 %v1073, %v42
    %v1079 = vmul.f32 %v1076, %v42
    %v1080 = vadd.f32 %v1077, 1e-12
    %v1081 = vadd.f32 %v1078, 1e-12
    %v1082 = vadd.f32 %v1079, 1e-12
    %v1083 = vrsqrt.pop %v1080
    %v1084 = vrsqrt.pop %v1081
    %v1085 = vrsqrt.pop %v1082
    %v1086 = vmul.f32 %v1062, %v1083
    %v1087 = vmul.f32 %v1063, %v1084
    %v1088 = vmul.f32 %v1064, %v1085
    %v1089 = vlaneseq
    %v1090 = vshrl.u32 %v1089, 7
    %v1091 = vsub.s32 3, %v1090
    %v1092 = vrot.slane %v186, %v1091
    %v1093 = vmul.f32 %v1086, %v1092
    %v1094 = vmul.f32 %v1087, %v1092
    %v1095 = vmul.f32 %v1088, %v1092
    %v1096 = vlaneseq
    %v1097 = vshrl.u32 %v1096, 7
    %v1098 = vsub.s32 4, %v1097
    %v1099 = vrot.slane %v186, %v1098
    %v1100 = vadd.f32 %v1093, %v1099
    %v1101 = vadd.f32 %v1094, %v1099
    %v1102 = vadd.f32 %v1095, %v1099
    %v1103 = vpack.c.bf16 %v1101, %v1100
    %v1104 = vpack.c.bf16 %v1102, %v1102
    %v1105 = vlaneseq
    %v1106 = vshrl.u32 %v1105, 7
    %v1107 = vsub.s32 1, %v1106
    %v1108 = vrot.slane %v186, %v1107
    %v1113 = vunpack.c.l.b16 %v174
    %v1114 = vunpack.c.l.b16 %v175
    %v1115 = vunpack.c.l.b16 %v176
    %v1116 = vunpack.c.l.b16 %v177
    %v1117 = vpack.c.b16 %v1114, %v1113
    %v1118 = vpack.c.b16 %v1116, %v1115
    %v1122 = vsel %vm32, %v1103, 0
    %v1125 = vsel %vm32, %v1104, 0
    %1127 = vmatprep.subr.bf16.mxu0 0
    %1128 = vmatpush1.bf16.msra.mxu0 %v1117
    %1129 = vmatprep.subr.bf16.mxu0 0
    %1130 = vmatpush1.bf16.msra.mxu0 %v1118
    %1131 = vmatprep.subr.bf16.mxu0 0
    %1132 = vmatpush1.bf16.msra.mxu0 0
    %1133 = vmatprep.subr.bf16.mxu0 0
    %1134 = vmatpush1.bf16.msra.mxu0 0
    %1135 = vmatprep.subr.bf16.mxu0 0
    %1136 = vmatpush1.bf16.msra.mxu0 0
    %1137 = vmatprep.subr.bf16.mxu0 0
    %1138 = vmatpush1.bf16.msra.mxu0 0
    %1139 = vmatprep.subr.bf16.mxu0 0
    %1140 = vmatpush1.bf16.msra.mxu0 0
    %1141 = vmatprep.subr.bf16.mxu0 0
    %1142 = vmatpush1.bf16.msra.mxu0 0
    %1143 = vmatprep.subr.bf16.mxu0 0
    %1144 = vmatpush1.bf16.msra.mxu0 0
    %1145 = vmatprep.subr.bf16.mxu0 0
    %1146 = vmatpush1.bf16.msra.mxu0 0
    %1147 = vmatprep.subr.bf16.mxu0 0
    %1148 = vmatpush1.bf16.msra.mxu0 0
    %1149 = vmatprep.subr.bf16.mxu0 0
    %1150 = vmatpush1.bf16.msra.mxu0 0
    %1151 = vmatprep.subr.bf16.mxu0 0
    %1152 = vmatpush1.bf16.msra.mxu0 0
    %1153 = vmatprep.subr.bf16.mxu0 0
    %1154 = vmatpush1.bf16.msra.mxu0 0
    %1155 = vmatprep.subr.bf16.mxu0 0
    %1156 = vmatpush1.bf16.msra.mxu0 0
    %1157 = vmatprep.subr.bf16.mxu0 0
    %1158 = vmatpush1.bf16.msra.mxu0 0
    %1159 = vmatprep.mubr.bf16.mxu0 0
    %1160 = vmatmul.mubr.bf16.gmra.mrb[0].mxu0 %v1122
    %v1161 = vpop.f32.mrb[0].mxu0
    %v1162 = vadd.f32 %v1108, %v1161
    %v1163 = vpop.f32.mrb[0].mxu0
    %v1164 = vpop.f32.mrb[0].mxu0
    %v1165 = vadd.f32 %v1108, %v1164
    %v1166 = vpop.f32.mrb[0].mxu0
    %1167 = vmatprep.mubr.bf16.mxu0 0
    %1168 = vmatmul.mubr.bf16.gmra.mrb[0].mxu0 %v1125
    %v1169 = vpop.f32.mrb[0].mxu0
    %v1170 = vadd.f32 %v1108, %v1169
    %v1171 = vpop.f32.mrb[0].mxu0
    %v1172 = vpop.f32.mrb[0].mxu0
    %v1173 = vpop.f32.mrb[0].mxu0
    %1174 = vdwg.mxu0
    %v1175 = vmul.f32 %v1162, 0.5
    %v1176 = vmul.f32 %v1165, 0.5
    %v1177 = vmul.f32 %v1170, 0.5
    %v1178 = vmul.f32 %v1162, 0.044715
    %v1179 = vmul.f32 %v1165, 0.044715
    %v1180 = vmul.f32 %v1170, 0.044715
    %v1181 = vmul.f32 %v1178, %v1162
    %v1182 = vmul.f32 %v1179, %v1165
    %v1183 = vmul.f32 %v1180, %v1170
    %v1184 = vmul.f32 %v1181, %v1162
    %v1185 = vmul.f32 %v1182, %v1165
    %v1186 = vmul.f32 %v1183, %v1170
    %v1187 = vadd.f32 %v1162, %v1184
    %v1188 = vadd.f32 %v1165, %v1185
    %v1189 = vadd.f32 %v1170, %v1186
    %v1190 = vmul.f32 %v1187, 0.7978846
    %v1191 = vmul.f32 %v1188, 0.7978846
    %v1192 = vmul.f32 %v1189, 0.7978846
    %v1193 = vtanh.pop %v1190
    %v1194 = vtanh.pop %v1191
    %v1195 = vtanh.pop %v1192
    %v1196 = vadd.f32 %v1193, 1.0
    %v1197 = vadd.f32 %v1194, 1.0
    %v1198 = vadd.f32 %v1195, 1.0
    %v1199 = vmul.f32 %v1175, %v1196
    %v1200 = vmul.f32 %v1176, %v1197
    %v1201 = vmul.f32 %v1177, %v1198
    %v1202 = vpack.c.bf16 %v1200, %v1199
    %v1203 = vpack.c.bf16 %v1201, %v1201
    %v1204 = vlaneseq
    %v1205 = vshrl.u32 %v1204, 7
    %v1206 = vsub.s32 5, %v1205
    %v1207 = vrot.slane %v186, %v1206
    %v1216 = vunpack.c.l.b16 %v178
    %v1217 = vunpack.c.l.b16 %v179
    %v1218 = vunpack.c.l.b16 %v180
    %v1219 = vunpack.c.l.b16 %v181
    %v1220 = vunpack.c.l.b16 %v182
    %v1221 = vunpack.c.l.b16 %v183
    %v1222 = vunpack.c.l.b16 %v184
    %v1223 = vunpack.c.l.b16 %v185
    %v1224 = vpack.c.b16 %v1217, %v1216
    %v1225 = vpack.c.b16 %v1219, %v1218
    %v1226 = vpack.c.b16 %v1221, %v1220
    %v1227 = vpack.c.b16 %v1223, %v1222
    %vm1232 = vcmask 523264
    %v1234 = vsel %vm1232, %v1202, 0
    %v1237 = vsel %vm1232, %v1203, 0
    %1239 = vmatprep.subr.bf16.mxu0 0
    %1240 = vmatpush1.bf16.msra.mxu0 %v1224
    %1241 = vmatprep.subr.bf16.mxu0 0
    %1242 = vmatpush1.bf16.msra.mxu0 %v1225
    %1243 = vmatprep.subr.bf16.mxu0 0
    %1244 = vmatpush1.bf16.msra.mxu0 %v1226
    %1245 = vmatprep.subr.bf16.mxu0 0
    %1246 = vmatpush1.bf16.msra.mxu0 %v1227
    %1247 = vmatprep.subr.bf16.mxu0 0
    %1248 = vmatpush1.bf16.msra.mxu0 0
    %1249 = vmatprep.subr.bf16.mxu0 0
    %1250 = vmatpush1.bf16.msra.mxu0 0
    %1251 = vmatprep.subr.bf16.mxu0 0
    %1252 = vmatpush1.bf16.msra.mxu0 0
    %1253 = vmatprep.subr.bf16.mxu0 0
    %1254 = vmatpush1.bf16.msra.mxu0 0
    %1255 = vmatprep.subr.bf16.mxu0 0
    %1256 = vmatpush1.bf16.msra.mxu0 0
    %1257 = vmatprep.subr.bf16.mxu0 0
    %1258 = vmatpush1.bf16.msra.mxu0 0
    %1259 = vmatprep.subr.bf16.mxu0 0
    %1260 = vmatpush1.bf16.msra.mxu0 0
    %1261 = vmatprep.subr.bf16.mxu0 0
    %1262 = vmatpush1.bf16.msra.mxu0 0
    %1263 = vmatprep.subr.bf16.mxu0 0
    %1264 = vmatpush1.bf16.msra.mxu0 0
    %1265 = vmatprep.subr.bf16.mxu0 0
    %1266 = vmatpush1.bf16.msra.mxu0 0
    %1267 = vmatprep.subr.bf16.mxu0 0
    %1268 = vmatpush1.bf16.msra.mxu0 0
    %1269 = vmatprep.subr.bf16.mxu0 0
    %1270 = vmatpush1.bf16.msra.mxu0 0
    %1271 = vmatprep.mubr.bf16.mxu0 0
    %1272 = vmatmul.mubr.bf16.gmra.mrb[0].mxu0 %v1234
    %v1273 = vpop.f32.mrb[0].mxu0
    %v1274 = vadd.f32 %v1207, %v1273
    %v1275 = vpop.f32.mrb[0].mxu0
    %v1276 = vpop.f32.mrb[0].mxu0
    %v1277 = vadd.f32 %v1207, %v1276
    %v1278 = vpop.f32.mrb[0].mxu0
    %1279 = vmatprep.mubr.bf16.mxu0 0
    %1280 = vmatmul.mubr.bf16.gmra.mrb[0].mxu0 %v1237
    %v1281 = vpop.f32.mrb[0].mxu0
    %v1282 = vadd.f32 %v1207, %v1281
    %v1283 = vpop.f32.mrb[0].mxu0
    %v1284 = vpop.f32.mrb[0].mxu0
    %v1285 = vpop.f32.mrb[0].mxu0
    %1286 = vdwg.mxu0
    %v1287 = vadd.f32 %v1100, %v1274
    %v1288 = vadd.f32 %v1101, %v1277
    %v1289 = vadd.f32 %v1102, %v1282
    %v1290 = vsel %vm32, %v1287, 0.0
    %1291 = vadd.xlane.f32.xlu0 %v1290
    %v1292 = vpop.xlane.xlu0 %1291
    %v1293 = vsel %vm32, %v1288, 0.0
    %1294 = vadd.xlane.f32.xlu0 %v1293
    %v1295 = vpop.xlane.xlu0 %1294
    %v1296 = vsel %vm32, %v1289, 0.0
    %1297 = vadd.xlane.f32.xlu0 %v1296
    %v1298 = vpop.xlane.xlu0 %1297
    %v1299 = vmul.f32 %v1292, %v42
    %v1300 = vmul.f32 %v1295, %v42
    %v1301 = vmul.f32 %v1298, %v42
    %v1302 = vsub.f32 %v1287, %v1299
    %v1303 = vsub.f32 %v1288, %v1300
    %v1304 = vsub.f32 %v1289, %v1301
    %v1305 = vmul.f32 %v1302, %v1302
    %v1306 = vmul.f32 %v1303, %v1303
    %v1307 = vmul.f32 %v1304, %v1304
    %v1308 = vsel %vm32, %v1305, 0.0
    %1309 = vadd.xlane.f32.xlu0 %v1308
    %v1310 = vpop.xlane.xlu0 %1309
    %v1311 = vsel %vm32, %v1306, 0.0
    %1312 = vadd.xlane.f32.xlu0 %v1311
    %v1313 = vpop.xlane.xlu0 %1312
    %v1314 = vsel %vm32, %v1307, 0.0
    %1315 = vadd.xlane.f32.xlu0 %v1314
    %v1316 = vpop.xlane.xlu0 %1315
    %v1317 = vmul.f32 %v1310, %v42
    %v1318 = vmul.f32 %v1313, %v42
    %v1319 = vmul.f32 %v1316, %v42
    %v1320 = vadd.f32 %v1317, 1e-12
    %v1321 = vadd.f32 %v1318, 1e-12
    %v1322 = vadd.f32 %v1319, 1e-12
    %v1323 = vrsqrt.pop %v1320
    %v1324 = vrsqrt.pop %v1321
    %v1325 = vrsqrt.pop %v1322
    %v1326 = vmul.f32 %v1302, %v1323
    %v1327 = vmul.f32 %v1303, %v1324
    %v1328 = vmul.f32 %v1304, %v1325
    %v1329 = vlaneseq
    %v1330 = vshrl.u32 %v1329, 7
    %v1331 = vsub.s32 6, %v1330
    %v1332 = vrot.slane %v186, %v1331
    %v1333 = vmul.f32 %v1326, %v1332
    %v1334 = vmul.f32 %v1327, %v1332
    %v1335 = vmul.f32 %v1328, %v1332
    %v1336 = vlaneseq
    %v1337 = vshrl.u32 %v1336, 7
    %v1338 = vsub.s32 7, %v1337
    %v1339 = vrot.slane %v186, %v1338
    %v1340 = vadd.f32 %v1333, %v1339
    %v1341 = vadd.f32 %v1334, %v1339
    %v1342 = vadd.f32 %v1335, %v1339
    %v1343 = vld [vmem:[%s2 + $0x50] sm:$0xf]
    %v1344 = vld [vmem:[%s2 + $0x54] sm:$0xf]
    %v1345 = vld [vmem:[%s2 + $0x58] sm:$0xf]
    %v1346 = vld [vmem:[%s2 + $0x5c] sm:$0xf]
    %v1347 = vld [vmem:[%s2 + $0x60] sm:$0xf]
    %v1348 = vld [vmem:[%s2 + $0x64] sm:$0xf]
    %v1349 = vld [vmem:[%s2 + $0x68] sm:$0xf]
    %v1350 = vld [vmem:[%s2 + $0x6c] sm:$0xf]
    %v1351 = vld [vmem:[%s2 + $0x70] sm:$0xf]
    %v1352 = vld [vmem:[%s2 + $0x74] sm:$0xf]
    %v1353 = vld [vmem:[%s2 + $0x78] sm:$0xf]
    %v1354 = vld [vmem:[%s2 + $0x7c] sm:$0xf]
    %v1355 = vld [vmem:[%s2 + $0x80] sm:$0xf]
    %v1356 = vld [vmem:[%s2 + $0x84] sm:$0xf]
    %v1357 = vld [vmem:[%s2 + $0x88] sm:$0xf]
    %v1358 = vld [vmem:[%s2 + $0x8c] sm:$0xf]
    %v1359 = vld [vmem:[%s2 + $0x90] sm:$0xf]
    %v1360 = vld [vmem:[%s2 + $0x94] sm:$0xf]
    %v1361 = vld [vmem:[%s2 + $0x98] sm:$0xf]
    %v1362 = vld [vmem:[%s2 + $0x9c] sm:$0xf]
    %v1363 = vld [vmem:[%s3 + $0x60] sm:$0xff]
    %v1364 = vpack.c.bf16 %v1341, %v1340
    %v1365 = vpack.c.bf16 %v1342, %v1342
    %v1366 = vlaneseq
    %v1367 = vshrl.u32 %v1366, 7
    %v1368 = vsub.s32 0, %v1367
    %v1369 = vrot.slane %v1363, %v1368
    %v1374 = vunpack.c.l.b16 %v1343
    %v1375 = vunpack.c.l.b16 %v1344
    %v1376 = vunpack.c.l.b16 %v1345
    %v1377 = vunpack.c.l.b16 %v1346
    %v1378 = vpack.c.b16 %v1375, %v1374
    %v1379 = vpack.c.b16 %v1377, %v1376
    %v1383 = vsel %vm32, %v1364, 0
    %v1386 = vsel %vm32, %v1365, 0
    %1388 = vmatprep.subr.bf16.mxu0 0
    %1389 = vmatpush1.bf16.msra.mxu0 %v1378
    %1390 = vmatprep.subr.bf16.mxu0 0
    %1391 = vmatpush1.bf16.msra.mxu0 %v1379
    %1392 = vmatprep.subr.bf16.mxu0 0
    %1393 = vmatpush1.bf16.msra.mxu0 0
    %1394 = vmatprep.subr.bf16.mxu0 0
    %1395 = vmatpush1.bf16.msra.mxu0 0
    %1396 = vmatprep.subr.bf16.mxu0 0
    %1397 = vmatpush1.bf16.msra.mxu0 0
    %1398 = vmatprep.subr.bf16.mxu0 0
    %1399 = vmatpush1.bf16.msra.mxu0 0
    %1400 = vmatprep.subr.bf16.mxu0 0
    %1401 = vmatpush1.bf16.msra.mxu0 0
    %1402 = vmatprep.subr.bf16.mxu0 0
    %1403 = vmatpush1.bf16.msra.mxu0 0
    %1404 = vmatprep.subr.bf16.mxu0 0
    %1405 = vmatpush1.bf16.msra.mxu0 0
    %1406 = vmatprep.subr.bf16.mxu0 0
    %1407 = vmatpush1.bf16.msra.mxu0 0
    %1408 = vmatprep.subr.bf16.mxu0 0
    %1409 = vmatpush1.bf16.msra.mxu0 0
    %1410 = vmatprep.subr.bf16.mxu0 0
    %1411 = vmatpush1.bf16.msra.mxu0 0
    %1412 = vmatprep.subr.bf16.mxu0 0
    %1413 = vmatpush1.bf16.msra.mxu0 0
    %1414 = vmatprep.subr.bf16.mxu0 0
    %1415 = vmatpush1.bf16.msra.mxu0 0
    %1416 = vmatprep.subr.bf16.mxu0 0
    %1417 = vmatpush1.bf16.msra.mxu0 0
    %1418 = vmatprep.subr.bf16.mxu0 0
    %1419 = vmatpush1.bf16.msra.mxu0 0
    %1420 = vmatprep.mubr.bf16.mxu0 0
    %1421 = vmatmul.mubr.bf16.gmra.mrb[0].mxu0 %v1383
    %v1422 = vpop.f32.mrb[0].mxu0
    %v1423 = vadd.f32 %v1369, %v1422
    %v1424 = vpop.f32.mrb[0].mxu0
    %v1425 = vpop.f32.mrb[0].mxu0
    %v1426 = vadd.f32 %v1369, %v1425
    %v1427 = vpop.f32.mrb[0].mxu0
    %1428 = vmatprep.mubr.bf16.mxu0 0
    %1429 = vmatmul.mubr.bf16.gmra.mrb[0].mxu0 %v1386
    %v1430 = vpop.f32.mrb[0].mxu0
    %v1431 = vadd.f32 %v1369, %v1430
    %v1432 = vpop.f32.mrb[0].mxu0
    %v1433 = vpop.f32.mrb[0].mxu0
    %v1434 = vpop.f32.mrb[0].mxu0
    %1435 = vdwg.mxu0
    %v1436 = vmul.f32 %v1423, 0.35355338
    %v1437 = vmul.f32 %v1426, 0.35355338
    %v1438 = vmul.f32 %v1431, 0.35355338
    %v1439 = vpack.c.bf16 %v1437, %v1436
    %v1440 = vpack.c.bf16 %v1438, %v1438
    %v1441 = vpack.c.bf16 %v1426, %v1423
    %v1442 = vpack.c.bf16 %v1431, %v1431
    %1445 = vrot.lane.b32.xlu0 %v1441, 96
    %v1446 = vpop.permute.xlu0 %1445
    %1447 = vrot.lane.b32.xlu0 %v1442, 96
    %v1448 = vpop.permute.xlu0 %1447
    %v1450 = vsel %vm272, %v1439, 0
    %v1453 = vsel %vm272, %v1440, 0
    %v1456 = vsel %vm272, %v1446, 0
    %v1459 = vsel %vm272, %v1448, 0
    %1461 = vmatprep.subr.bf16.mxu0 0
    %1462 = vmatpush1.bf16.xpose.msra.mxu0 %v1456
    %1463 = vmatprep.subr.bf16.mxu0 0
    %1464 = vmatpush1.bf16.xpose.msra.mxu0 %v1459
    %1465 = vmatprep.subr.bf16.mxu0 0
    %1466 = vmatpush1.bf16.xpose.msra.mxu0 0
    %1467 = vmatprep.subr.bf16.mxu0 0
    %1468 = vmatpush1.bf16.xpose.msra.mxu0 0
    %1469 = vmatprep.subr.bf16.mxu0 0
    %1470 = vmatpush1.bf16.xpose.msra.mxu0 0
    %1471 = vmatprep.subr.bf16.mxu0 0
    %1472 = vmatpush1.bf16.xpose.msra.mxu0 0
    %1473 = vmatprep.subr.bf16.mxu0 0
    %1474 = vmatpush1.bf16.xpose.msra.mxu0 0
    %1475 = vmatprep.subr.bf16.mxu0 0
    %1476 = vmatpush1.bf16.xpose.msra.mxu0 0
    %1477 = vmatprep.subr.bf16.mxu0 0
    %1478 = vmatpush1.bf16.xpose.msra.mxu0 0
    %1479 = vmatprep.subr.bf16.mxu0 0
    %1480 = vmatpush1.bf16.xpose.msra.mxu0 0
    %1481 = vmatprep.subr.bf16.mxu0 0
    %1482 = vmatpush1.bf16.xpose.msra.mxu0 0
    %1483 = vmatprep.subr.bf16.mxu0 0
    %1484 = vmatpush1.bf16.xpose.msra.mxu0 0
    %1485 = vmatprep.subr.bf16.mxu0 0
    %1486 = vmatpush1.bf16.xpose.msra.mxu0 0
    %1487 = vmatprep.subr.bf16.mxu0 0
    %1488 = vmatpush1.bf16.xpose.msra.mxu0 0
    %1489 = vmatprep.subr.bf16.mxu0 0
    %1490 = vmatpush1.bf16.xpose.msra.mxu0 0
    %1491 = vmatprep.subr.bf16.mxu0 0
    %1492 = vmatpush1.bf16.xpose.msra.mxu0 0
    %1493 = vmatprep.mubr.bf16.mxu0 0
    %1494 = vmatmul.mubr.bf16.gmra.mrb[0].mxu0 %v1450
    %v1495 = vpop.f32.mrb[0].mxu0
    %v1496 = vadd.f32 %v163, %v1495
    %v1497 = vpop.f32.mrb[0].mxu0
    %v1498 = vpop.f32.mrb[0].mxu0
    %v1499 = vadd.f32 %v164, %v1498
    %v1500 = vpop.f32.mrb[0].mxu0
    %1501 = vmatprep.mubr.bf16.mxu0 0
    %1502 = vmatmul.mubr.bf16.gmra.mrb[0].mxu0 %v1453
    %v1503 = vpop.f32.mrb[0].mxu0
    %v1504 = vadd.f32 %v165, %v1503
    %v1505 = vpop.f32.mrb[0].mxu0
    %v1506 = vpop.f32.mrb[0].mxu0
    %v1507 = vpop.f32.mrb[0].mxu0
    %1508 = vdwg.mxu0
    %v1509 = vsel %vm333, %v1496, -inf
    %1510 = vmax.xlane.f32.xlu0 %v1509
    %v1511 = vpop.xlane.xlu0 %1510
    %v1512 = vsel %vm333, %v1499, -inf
    %1513 = vmax.xlane.f32.xlu0 %v1512
    %v1514 = vpop.xlane.xlu0 %1513
    %v1515 = vsel %vm333, %v1504, -inf
    %1516 = vmax.xlane.f32.xlu0 %v1515
    %v1517 = vpop.xlane.xlu0 %1516
    %v1518 = vsub.f32 %v1496, %v1511
    %v1519 = vsub.f32 %v1499, %v1514
    %v1520 = vsub.f32 %v1504, %v1517
    %v1521 = vmul.f32 %v1518, 1.442695
    %v1522 = vpow.pop %v1521
    %v1523 = vmul.f32 %v1519, 1.442695
    %v1524 = vpow.pop %v1523
    %v1525 = vmul.f32 %v1520, 1.442695
    %v1526 = vpow.pop %v1525
    %v1527 = vsel %vm333, %v1522, 0.0
    %1528 = vadd.xlane.f32.xlu0 %v1527
    %v1529 = vpop.xlane.xlu0 %1528
    %v1530 = vsel %vm333, %v1524, 0.0
    %1531 = vadd.xlane.f32.xlu0 %v1530
    %v1532 = vpop.xlane.xlu0 %1531
    %v1533 = vsel %vm333, %v1526, 0.0
    %1534 = vadd.xlane.f32.xlu0 %v1533
    %v1535 = vpop.xlane.xlu0 %1534
    %v1536 = vrcp.pop %v1529
    %v1537 = vrcp.pop %v1532
    %v1538 = vrcp.pop %v1535
    %v1539 = vmul.f32 %v1522, %v1536
    %v1540 = vmul.f32 %v1524, %v1537
    %v1541 = vmul.f32 %v1526, %v1538
    %v1542 = vpack.c.bf16 %v1540, %v1539
    %v1543 = vpack.c.bf16 %v1541, %v1541
    %1544 = vrot.lane.b32.xlu0 %v1441, 64
    %v1545 = vpop.permute.xlu0 %1544
    %1546 = vrot.lane.b32.xlu0 %v1442, 64
    %v1547 = vpop.permute.xlu0 %1546
    %v1550 = vsel %vm333, %v1542, 0
    %v1553 = vsel %vm333, %v1543, 0
    %v1556 = vsel %vm380, %v1547, 0
    %1558 = vmatprep.subr.bf16.mxu0 0
    %1559 = vmatpush1.bf16.msra.mxu0 %v1545
    %1560 = vmatprep.subr.bf16.mxu0 0
    %1561 = vmatpush1.bf16.msra.mxu0 %v1556
    %1562 = vmatprep.subr.bf16.mxu0 0
    %1563 = vmatpush1.bf16.msra.mxu0 0
    %1564 = vmatprep.subr.bf16.mxu0 0
    %1565 = vmatpush1.bf16.msra.mxu0 0
    %1566 = vmatprep.subr.bf16.mxu0 0
    %1567 = vmatpush1.bf16.msra.mxu0 0
    %1568 = vmatprep.subr.bf16.mxu0 0
    %1569 = vmatpush1.bf16.msra.mxu0 0
    %1570 = vmatprep.subr.bf16.mxu0 0
    %1571 = vmatpush1.bf16.msra.mxu0 0
    %1572 = vmatprep.subr.bf16.mxu0 0
    %1573 = vmatpush1.bf16.msra.mxu0 0
    %1574 = vmatprep.subr.bf16.mxu0 0
    %1575 = vmatpush1.bf16.msra.mxu0 0
    %1576 = vmatprep.subr.bf16.mxu0 0
    %1577 = vmatpush1.bf16.msra.mxu0 0
    %1578 = vmatprep.subr.bf16.mxu0 0
    %1579 = vmatpush1.bf16.msra.mxu0 0
    %1580 = vmatprep.subr.bf16.mxu0 0
    %1581 = vmatpush1.bf16.msra.mxu0 0
    %1582 = vmatprep.subr.bf16.mxu0 0
    %1583 = vmatpush1.bf16.msra.mxu0 0
    %1584 = vmatprep.subr.bf16.mxu0 0
    %1585 = vmatpush1.bf16.msra.mxu0 0
    %1586 = vmatprep.subr.bf16.mxu0 0
    %1587 = vmatpush1.bf16.msra.mxu0 0
    %1588 = vmatprep.subr.bf16.mxu0 0
    %1589 = vmatpush1.bf16.msra.mxu0 0
    %1590 = vmatprep.mubr.bf16.mxu0 0
    %1591 = vmatmul.mubr.bf16.gmra.mrb[0].mxu0 %v1550
    %v1592 = vpop.f32.mrb[0].mxu0
    %v1593 = vadd.f32 0.0, %v1592
    %v1594 = vpop.f32.mrb[0].mxu0
    %v1595 = vpop.f32.mrb[0].mxu0
    %v1596 = vadd.f32 0.0, %v1595
    %v1597 = vpop.f32.mrb[0].mxu0
    %1598 = vmatprep.mubr.bf16.mxu0 0
    %1599 = vmatmul.mubr.bf16.gmra.mrb[0].mxu0 %v1553
    %v1600 = vpop.f32.mrb[0].mxu0
    %v1601 = vadd.f32 0.0, %v1600
    %v1602 = vpop.f32.mrb[0].mxu0
    %v1603 = vpop.f32.mrb[0].mxu0
    %v1604 = vpop.f32.mrb[0].mxu0
    %1605 = vdwg.mxu0
    %1608 = vrot.lane.b32.xlu0 %v1439, 120
    %v1609 = vpop.permute.xlu0 %1608
    %1610 = vrot.lane.b32.xlu0 %v1440, 120
    %v1611 = vpop.permute.xlu0 %1610
    %1612 = vrot.lane.b32.xlu0 %v1441, 88
    %v1613 = vpop.permute.xlu0 %1612
    %1614 = vrot.lane.b32.xlu0 %v1442, 88
    %v1615 = vpop.permute.xlu0 %1614
    %v1617 = vsel %vm272, %v1609, 0
    %v1620 = vsel %vm272, %v1611, 0
    %v1623 = vsel %vm272, %v1613, 0
    %v1626 = vsel %vm272, %v1615, 0
    %1628 = vmatprep.subr.bf16.mxu0 0
    %1629 = vmatpush1.bf16.xpose.msra.mxu0 %v1623
    %1630 = vmatprep.subr.bf16.mxu0 0
    %1631 = vmatpush1.bf16.xpose.msra.mxu0 %v1626
    %1632 = vmatprep.subr.bf16.mxu0 0
    %1633 = vmatpush1.bf16.xpose.msra.mxu0 0
    %1634 = vmatprep.subr.bf16.mxu0 0
    %1635 = vmatpush1.bf16.xpose.msra.mxu0 0
    %1636 = vmatprep.subr.bf16.mxu0 0
    %1637 = vmatpush1.bf16.xpose.msra.mxu0 0
    %1638 = vmatprep.subr.bf16.mxu0 0
    %1639 = vmatpush1.bf16.xpose.msra.mxu0 0
    %1640 = vmatprep.subr.bf16.mxu0 0
    %1641 = vmatpush1.bf16.xpose.msra.mxu0 0
    %1642 = vmatprep.subr.bf16.mxu0 0
    %1643 = vmatpush1.bf16.xpose.msra.mxu0 0
    %1644 = vmatprep.subr.bf16.mxu0 0
    %1645 = vmatpush1.bf16.xpose.msra.mxu0 0
    %1646 = vmatprep.subr.bf16.mxu0 0
    %1647 = vmatpush1.bf16.xpose.msra.mxu0 0
    %1648 = vmatprep.subr.bf16.mxu0 0
    %1649 = vmatpush1.bf16.xpose.msra.mxu0 0
    %1650 = vmatprep.subr.bf16.mxu0 0
    %1651 = vmatpush1.bf16.xpose.msra.mxu0 0
    %1652 = vmatprep.subr.bf16.mxu0 0
    %1653 = vmatpush1.bf16.xpose.msra.mxu0 0
    %1654 = vmatprep.subr.bf16.mxu0 0
    %1655 = vmatpush1.bf16.xpose.msra.mxu0 0
    %1656 = vmatprep.subr.bf16.mxu0 0
    %1657 = vmatpush1.bf16.xpose.msra.mxu0 0
    %1658 = vmatprep.subr.bf16.mxu0 0
    %1659 = vmatpush1.bf16.xpose.msra.mxu0 0
    %1660 = vmatprep.mubr.bf16.mxu0 0
    %1661 = vmatmul.mubr.bf16.gmra.mrb[0].mxu0 %v1617
    %v1662 = vpop.f32.mrb[0].mxu0
    %v1663 = vadd.f32 %v163, %v1662
    %v1664 = vpop.f32.mrb[0].mxu0
    %v1665 = vpop.f32.mrb[0].mxu0
    %v1666 = vadd.f32 %v164, %v1665
    %v1667 = vpop.f32.mrb[0].mxu0
    %1668 = vmatprep.mubr.bf16.mxu0 0
    %1669 = vmatmul.mubr.bf16.gmra.mrb[0].mxu0 %v1620
    %v1670 = vpop.f32.mrb[0].mxu0
    %v1671 = vadd.f32 %v165, %v1670
    %v1672 = vpop.f32.mrb[0].mxu0
    %v1673 = vpop.f32.mrb[0].mxu0
    %v1674 = vpop.f32.mrb[0].mxu0
    %1675 = vdwg.mxu0
    %v1676 = vsel %vm333, %v1663, -inf
    %1677 = vmax.xlane.f32.xlu0 %v1676
    %v1678 = vpop.xlane.xlu0 %1677
    %v1679 = vsel %vm333, %v1666, -inf
    %1680 = vmax.xlane.f32.xlu0 %v1679
    %v1681 = vpop.xlane.xlu0 %1680
    %v1682 = vsel %vm333, %v1671, -inf
    %1683 = vmax.xlane.f32.xlu0 %v1682
    %v1684 = vpop.xlane.xlu0 %1683
    %v1685 = vsub.f32 %v1663, %v1678
    %v1686 = vsub.f32 %v1666, %v1681
    %v1687 = vsub.f32 %v1671, %v1684
    %v1688 = vmul.f32 %v1685, 1.442695
    %v1689 = vpow.pop %v1688
    %v1690 = vmul.f32 %v1686, 1.442695
    %v1691 = vpow.pop %v1690
    %v1692 = vmul.f32 %v1687, 1.442695
    %v1693 = vpow.pop %v1692
    %v1694 = vsel %vm333, %v1689, 0.0
    %1695 = vadd.xlane.f32.xlu0 %v1694
    %v1696 = vpop.xlane.xlu0 %1695
    %v1697 = vsel %vm333, %v1691, 0.0
    %1698 = vadd.xlane.f32.xlu0 %v1697
    %v1699 = vpop.xlane.xlu0 %1698
    %v1700 = vsel %vm333, %v1693, 0.0
    %1701 = vadd.xlane.f32.xlu0 %v1700
    %v1702 = vpop.xlane.xlu0 %1701
    %v1703 = vrcp.pop %v1696
    %v1704 = vrcp.pop %v1699
    %v1705 = vrcp.pop %v1702
    %v1706 = vmul.f32 %v1689, %v1703
    %v1707 = vmul.f32 %v1691, %v1704
    %v1708 = vmul.f32 %v1693, %v1705
    %v1709 = vpack.c.bf16 %v1707, %v1706
    %v1710 = vpack.c.bf16 %v1708, %v1708
    %1711 = vrot.lane.b32.xlu0 %v1441, 56
    %v1712 = vpop.permute.xlu0 %1711
    %1713 = vrot.lane.b32.xlu0 %v1442, 56
    %v1714 = vpop.permute.xlu0 %1713
    %v1717 = vsel %vm333, %v1709, 0
    %v1720 = vsel %vm333, %v1710, 0
    %v1723 = vsel %vm380, %v1714, 0
    %1725 = vmatprep.subr.bf16.mxu0 0
    %1726 = vmatpush1.bf16.msra.mxu0 %v1712
    %1727 = vmatprep.subr.bf16.mxu0 0
    %1728 = vmatpush1.bf16.msra.mxu0 %v1723
    %1729 = vmatprep.subr.bf16.mxu0 0
    %1730 = vmatpush1.bf16.msra.mxu0 0
    %1731 = vmatprep.subr.bf16.mxu0 0
    %1732 = vmatpush1.bf16.msra.mxu0 0
    %1733 = vmatprep.subr.bf16.mxu0 0
    %1734 = vmatpush1.bf16.msra.mxu0 0
    %1735 = vmatprep.subr.bf16.mxu0 0
    %1736 = vmatpush1.bf16.msra.mxu0 0
    %1737 = vmatprep.subr.bf16.mxu0 0
    %1738 = vmatpush1.bf16.msra.mxu0 0
    %1739 = vmatprep.subr.bf16.mxu0 0
    %1740 = vmatpush1.bf16.msra.mxu0 0
    %1741 = vmatprep.subr.bf16.mxu0 0
    %1742 = vmatpush1.bf16.msra.mxu0 0
    %1743 = vmatprep.subr.bf16.mxu0 0
    %1744 = vmatpush1.bf16.msra.mxu0 0
    %1745 = vmatprep.subr.bf16.mxu0 0
    %1746 = vmatpush1.bf16.msra.mxu0 0
    %1747 = vmatprep.subr.bf16.mxu0 0
    %1748 = vmatpush1.bf16.msra.mxu0 0
    %1749 = vmatprep.subr.bf16.mxu0 0
    %1750 = vmatpush1.bf16.msra.mxu0 0
    %1751 = vmatprep.subr.bf16.mxu0 0
    %1752 = vmatpush1.bf16.msra.mxu0 0
    %1753 = vmatprep.subr.bf16.mxu0 0
    %1754 = vmatpush1.bf16.msra.mxu0 0
    %1755 = vmatprep.subr.bf16.mxu0 0
    %1756 = vmatpush1.bf16.msra.mxu0 0
    %1757 = vmatprep.mubr.bf16.mxu0 0
    %1758 = vmatmul.mubr.bf16.gmra.mrb[0].mxu0 %v1717
    %v1759 = vpop.f32.mrb[0].mxu0
    %v1760 = vadd.f32 0.0, %v1759
    %v1761 = vpop.f32.mrb[0].mxu0
    %v1762 = vpop.f32.mrb[0].mxu0
    %v1763 = vadd.f32 0.0, %v1762
    %v1764 = vpop.f32.mrb[0].mxu0
    %1765 = vmatprep.mubr.bf16.mxu0 0
    %1766 = vmatmul.mubr.bf16.gmra.mrb[0].mxu0 %v1720
    %v1767 = vpop.f32.mrb[0].mxu0
    %v1768 = vadd.f32 0.0, %v1767
    %v1769 = vpop.f32.mrb[0].mxu0
    %v1770 = vpop.f32.mrb[0].mxu0
    %v1771 = vpop.f32.mrb[0].mxu0
    %1772 = vdwg.mxu0
    %1773 = vrot.lane.b32.xlu0 %v1439, 112
    %v1774 = vpop.permute.xlu0 %1773
    %1775 = vrot.lane.b32.xlu0 %v1440, 112
    %v1776 = vpop.permute.xlu0 %1775
    %1777 = vrot.lane.b32.xlu0 %v1441, 80
    %v1778 = vpop.permute.xlu0 %1777
    %1779 = vrot.lane.b32.xlu0 %v1442, 80
    %v1780 = vpop.permute.xlu0 %1779
    %v1782 = vsel %vm272, %v1774, 0
    %v1785 = vsel %vm272, %v1776, 0
    %v1788 = vsel %vm272, %v1778, 0
    %v1791 = vsel %vm272, %v1780, 0
    %1793 = vmatprep.subr.bf16.mxu0 0
    %1794 = vmatpush1.bf16.xpose.msra.mxu0 %v1788
    %1795 = vmatprep.subr.bf16.mxu0 0
    %1796 = vmatpush1.bf16.xpose.msra.mxu0 %v1791
    %1797 = vmatprep.subr.bf16.mxu0 0
    %1798 = vmatpush1.bf16.xpose.msra.mxu0 0
    %1799 = vmatprep.subr.bf16.mxu0 0
    %1800 = vmatpush1.bf16.xpose.msra.mxu0 0
    %1801 = vmatprep.subr.bf16.mxu0 0
    %1802 = vmatpush1.bf16.xpose.msra.mxu0 0
    %1803 = vmatprep.subr.bf16.mxu0 0
    %1804 = vmatpush1.bf16.xpose.msra.mxu0 0
    %1805 = vmatprep.subr.bf16.mxu0 0
    %1806 = vmatpush1.bf16.xpose.msra.mxu0 0
    %1807 = vmatprep.subr.bf16.mxu0 0
    %1808 = vmatpush1.bf16.xpose.msra.mxu0 0
    %1809 = vmatprep.subr.bf16.mxu0 0
    %1810 = vmatpush1.bf16.xpose.msra.mxu0 0
    %1811 = vmatprep.subr.bf16.mxu0 0
    %1812 = vmatpush1.bf16.xpose.msra.mxu0 0
    %1813 = vmatprep.subr.bf16.mxu0 0
    %1814 = vmatpush1.bf16.xpose.msra.mxu0 0
    %1815 = vmatprep.subr.bf16.mxu0 0
    %1816 = vmatpush1.bf16.xpose.msra.mxu0 0
    %1817 = vmatprep.subr.bf16.mxu0 0
    %1818 = vmatpush1.bf16.xpose.msra.mxu0 0
    %1819 = vmatprep.subr.bf16.mxu0 0
    %1820 = vmatpush1.bf16.xpose.msra.mxu0 0
    %1821 = vmatprep.subr.bf16.mxu0 0
    %1822 = vmatpush1.bf16.xpose.msra.mxu0 0
    %1823 = vmatprep.subr.bf16.mxu0 0
    %1824 = vmatpush1.bf16.xpose.msra.mxu0 0
    %1825 = vmatprep.mubr.bf16.mxu0 0
    %1826 = vmatmul.mubr.bf16.gmra.mrb[0].mxu0 %v1782
    %v1827 = vpop.f32.mrb[0].mxu0
    %v1828 = vadd.f32 %v163, %v1827
    %v1829 = vpop.f32.mrb[0].mxu0
    %v1830 = vpop.f32.mrb[0].mxu0
    %v1831 = vadd.f32 %v164, %v1830
    %v1832 = vpop.f32.mrb[0].mxu0
    %1833 = vmatprep.mubr.bf16.mxu0 0
    %1834 = vmatmul.mubr.bf16.gmra.mrb[0].mxu0 %v1785
    %v1835 = vpop.f32.mrb[0].mxu0
    %v1836 = vadd.f32 %v165, %v1835
    %v1837 = vpop.f32.mrb[0].mxu0
    %v1838 = vpop.f32.mrb[0].mxu0
    %v1839 = vpop.f32.mrb[0].mxu0
    %1840 = vdwg.mxu0
    %v1841 = vsel %vm333, %v1828, -inf
    %1842 = vmax.xlane.f32.xlu0 %v1841
    %v1843 = vpop.xlane.xlu0 %1842
    %v1844 = vsel %vm333, %v1831, -inf
    %1845 = vmax.xlane.f32.xlu0 %v1844
    %v1846 = vpop.xlane.xlu0 %1845
    %v1847 = vsel %vm333, %v1836, -inf
    %1848 = vmax.xlane.f32.xlu0 %v1847
    %v1849 = vpop.xlane.xlu0 %1848
    %v1850 = vsub.f32 %v1828, %v1843
    %v1851 = vsub.f32 %v1831, %v1846
    %v1852 = vsub.f32 %v1836, %v1849
    %v1853 = vmul.f32 %v1850, 1.442695
    %v1854 = vpow.pop %v1853
    %v1855 = vmul.f32 %v1851, 1.442695
    %v1856 = vpow.pop %v1855
    %v1857 = vmul.f32 %v1852, 1.442695
    %v1858 = vpow.pop %v1857
    %v1859 = vsel %vm333, %v1854, 0.0
    %1860 = vadd.xlane.f32.xlu0 %v1859
    %v1861 = vpop.xlane.xlu0 %1860
    %v1862 = vsel %vm333, %v1856, 0.0
    %1863 = vadd.xlane.f32.xlu0 %v1862
    %v1864 = vpop.xlane.xlu0 %1863
    %v1865 = vsel %vm333, %v1858, 0.0
    %1866 = vadd.xlane.f32.xlu0 %v1865
    %v1867 = vpop.xlane.xlu0 %1866
    %v1868 = vrcp.pop %v1861
    %v1869 = vrcp.pop %v1864
    %v1870 = vrcp.pop %v1867
    %v1871 = vmul.f32 %v1854, %v1868
    %v1872 = vmul.f32 %v1856, %v1869
    %v1873 = vmul.f32 %v1858, %v1870
    %v1874 = vpack.c.bf16 %v1872, %v1871
    %v1875 = vpack.c.bf16 %v1873, %v1873
    %1876 = vrot.lane.b32.xlu0 %v1441, 48
    %v1877 = vpop.permute.xlu0 %1876
    %1878 = vrot.lane.b32.xlu0 %v1442, 48
    %v1879 = vpop.permute.xlu0 %1878
    %v1882 = vsel %vm333, %v1874, 0
    %v1885 = vsel %vm333, %v1875, 0
    %v1888 = vsel %vm380, %v1879, 0
    %1890 = vmatprep.subr.bf16.mxu0 0
    %1891 = vmatpush1.bf16.msra.mxu0 %v1877
    %1892 = vmatprep.subr.bf16.mxu0 0
    %1893 = vmatpush1.bf16.msra.mxu0 %v1888
    %1894 = vmatprep.subr.bf16.mxu0 0
    %1895 = vmatpush1.bf16.msra.mxu0 0
    %1896 = vmatprep.subr.bf16.mxu0 0
    %1897 = vmatpush1.bf16.msra.mxu0 0
    %1898 = vmatprep.subr.bf16.mxu0 0
    %1899 = vmatpush1.bf16.msra.mxu0 0
    %1900 = vmatprep.subr.bf16.mxu0 0
    %1901 = vmatpush1.bf16.msra.mxu0 0
    %1902 = vmatprep.subr.bf16.mxu0 0
    %1903 = vmatpush1.bf16.msra.mxu0 0
    %1904 = vmatprep.subr.bf16.mxu0 0
    %1905 = vmatpush1.bf16.msra.mxu0 0
    %1906 = vmatprep.subr.bf16.mxu0 0
    %1907 = vmatpush1.bf16.msra.mxu0 0
    %1908 = vmatprep.subr.bf16.mxu0 0
    %1909 = vmatpush1.bf16.msra.mxu0 0
    %1910 = vmatprep.subr.bf16.mxu0 0
    %1911 = vmatpush1.bf16.msra.mxu0 0
    %1912 = vmatprep.subr.bf16.mxu0 0
    %1913 = vmatpush1.bf16.msra.mxu0 0
    %1914 = vmatprep.subr.bf16.mxu0 0
    %1915 = vmatpush1.bf16.msra.mxu0 0
    %1916 = vmatprep.subr.bf16.mxu0 0
    %1917 = vmatpush1.bf16.msra.mxu0 0
    %1918 = vmatprep.subr.bf16.mxu0 0
    %1919 = vmatpush1.bf16.msra.mxu0 0
    %1920 = vmatprep.subr.bf16.mxu0 0
    %1921 = vmatpush1.bf16.msra.mxu0 0
    %1922 = vmatprep.mubr.bf16.mxu0 0
    %1923 = vmatmul.mubr.bf16.gmra.mrb[0].mxu0 %v1882
    %v1924 = vpop.f32.mrb[0].mxu0
    %v1925 = vadd.f32 0.0, %v1924
    %v1926 = vpop.f32.mrb[0].mxu0
    %v1927 = vpop.f32.mrb[0].mxu0
    %v1928 = vadd.f32 0.0, %v1927
    %v1929 = vpop.f32.mrb[0].mxu0
    %1930 = vmatprep.mubr.bf16.mxu0 0
    %1931 = vmatmul.mubr.bf16.gmra.mrb[0].mxu0 %v1885
    %v1932 = vpop.f32.mrb[0].mxu0
    %v1933 = vadd.f32 0.0, %v1932
    %v1934 = vpop.f32.mrb[0].mxu0
    %v1935 = vpop.f32.mrb[0].mxu0
    %v1936 = vpop.f32.mrb[0].mxu0
    %1937 = vdwg.mxu0
    %1938 = vrot.lane.b32.xlu0 %v1439, 104
    %v1939 = vpop.permute.xlu0 %1938
    %1940 = vrot.lane.b32.xlu0 %v1440, 104
    %v1941 = vpop.permute.xlu0 %1940
    %1942 = vrot.lane.b32.xlu0 %v1441, 72
    %v1943 = vpop.permute.xlu0 %1942
    %1944 = vrot.lane.b32.xlu0 %v1442, 72
    %v1945 = vpop.permute.xlu0 %1944
    %v1947 = vsel %vm272, %v1939, 0
    %v1950 = vsel %vm272, %v1941, 0
    %v1953 = vsel %vm272, %v1943, 0
    %v1956 = vsel %vm272, %v1945, 0
    %1958 = vmatprep.subr.bf16.mxu0 0
    %1959 = vmatpush1.bf16.xpose.msra.mxu0 %v1953
    %1960 = vmatprep.subr.bf16.mxu0 0
    %1961 = vmatpush1.bf16.xpose.msra.mxu0 %v1956
    %1962 = vmatprep.subr.bf16.mxu0 0
    %1963 = vmatpush1.bf16.xpose.msra.mxu0 0
    %1964 = vmatprep.subr.bf16.mxu0 0
    %1965 = vmatpush1.bf16.xpose.msra.mxu0 0
    %1966 = vmatprep.subr.bf16.mxu0 0
    %1967 = vmatpush1.bf16.xpose.msra.mxu0 0
    %1968 = vmatprep.subr.bf16.mxu0 0
    %1969 = vmatpush1.bf16.xpose.msra.mxu0 0
    %1970 = vmatprep.subr.bf16.mxu0 0
    %1971 = vmatpush1.bf16.xpose.msra.mxu0 0
    %1972 = vmatprep.subr.bf16.mxu0 0
    %1973 = vmatpush1.bf16.xpose.msra.mxu0 0
    %1974 = vmatprep.subr.bf16.mxu0 0
    %1975 = vmatpush1.bf16.xpose.msra.mxu0 0
    %1976 = vmatprep.subr.bf16.mxu0 0
    %1977 = vmatpush1.bf16.xpose.msra.mxu0 0
    %1978 = vmatprep.subr.bf16.mxu0 0
    %1979 = vmatpush1.bf16.xpose.msra.mxu0 0
    %1980 = vmatprep.subr.bf16.mxu0 0
    %1981 = vmatpush1.bf16.xpose.msra.mxu0 0
    %1982 = vmatprep.subr.bf16.mxu0 0
    %1983 = vmatpush1.bf16.xpose.msra.mxu0 0
    %1984 = vmatprep.subr.bf16.mxu0 0
    %1985 = vmatpush1.bf16.xpose.msra.mxu0 0
    %1986 = vmatprep.subr.bf16.mxu0 0
    %1987 = vmatpush1.bf16.xpose.msra.mxu0 0
    %1988 = vmatprep.subr.bf16.mxu0 0
    %1989 = vmatpush1.bf16.xpose.msra.mxu0 0
    %1990 = vmatprep.mubr.bf16.mxu0 0
    %1991 = vmatmul.mubr.bf16.gmra.mrb[0].mxu0 %v1947
    %v1992 = vpop.f32.mrb[0].mxu0
    %v1993 = vadd.f32 %v163, %v1992
    %v1994 = vpop.f32.mrb[0].mxu0
    %v1995 = vpop.f32.mrb[0].mxu0
    %v1996 = vadd.f32 %v164, %v1995
    %v1997 = vpop.f32.mrb[0].mxu0
    %1998 = vmatprep.mubr.bf16.mxu0 0
    %1999 = vmatmul.mubr.bf16.gmra.mrb[0].mxu0 %v1950
    %v2000 = vpop.f32.mrb[0].mxu0
    %v2001 = vadd.f32 %v165, %v2000
    %v2002 = vpop.f32.mrb[0].mxu0
    %v2003 = vpop.f32.mrb[0].mxu0
    %v2004 = vpop.f32.mrb[0].mxu0
    %2005 = vdwg.mxu0
    %v2006 = vsel %vm333, %v1993, -inf
    %2007 = vmax.xlane.f32.xlu0 %v2006
    %v2008 = vpop.xlane.xlu0 %2007
    %v2009 = vsel %vm333, %v1996, -inf
    %2010 = vmax.xlane.f32.xlu0 %v2009
    %v2011 = vpop.xlane.xlu0 %2010
    %v2012 = vsel %vm333, %v2001, -inf
    %2013 = vmax.xlane.f32.xlu0 %v2012
    %v2014 = vpop.xlane.xlu0 %2013
    %v2015 = vsub.f32 %v1993, %v2008
    %v2016 = vsub.f32 %v1996, %v2011
    %v2017 = vsub.f32 %v2001, %v2014
    %v2018 = vmul.f32 %v2015, 1.442695
    %v2019 = vpow.pop %v2018
    %v2020 = vmul.f32 %v2016, 1.442695
    %v2021 = vpow.pop %v2020
    %v2022 = vmul.f32 %v2017, 1.442695
    %v2023 = vpow.pop %v2022
    %v2024 = vsel %vm333, %v2019, 0.0
    %2025 = vadd.xlane.f32.xlu0 %v2024
    %v2026 = vpop.xlane.xlu0 %2025
    %v2027 = vsel %vm333, %v2021, 0.0
    %2028 = vadd.xlane.f32.xlu0 %v2027
    %v2029 = vpop.xlane.xlu0 %2028
    %v2030 = vsel %vm333, %v2023, 0.0
    %2031 = vadd.xlane.f32.xlu0 %v2030
    %v2032 = vpop.xlane.xlu0 %2031
    %v2033 = vrcp.pop %v2026
    %v2034 = vrcp.pop %v2029
    %v2035 = vrcp.pop %v2032
    %v2036 = vmul.f32 %v2019, %v2033
    %v2037 = vmul.f32 %v2021, %v2034
    %v2038 = vmul.f32 %v2023, %v2035
    %v2039 = vpack.c.bf16 %v2037, %v2036
    %v2040 = vpack.c.bf16 %v2038, %v2038
    %2041 = vrot.lane.b32.xlu0 %v1441, 40
    %v2042 = vpop.permute.xlu0 %2041
    %2043 = vrot.lane.b32.xlu0 %v1442, 40
    %v2044 = vpop.permute.xlu0 %2043
    %v2047 = vsel %vm333, %v2039, 0
    %v2050 = vsel %vm333, %v2040, 0
    %v2053 = vsel %vm380, %v2044, 0
    %2055 = vmatprep.subr.bf16.mxu0 0
    %2056 = vmatpush1.bf16.msra.mxu0 %v2042
    %2057 = vmatprep.subr.bf16.mxu0 0
    %2058 = vmatpush1.bf16.msra.mxu0 %v2053
    %2059 = vmatprep.subr.bf16.mxu0 0
    %2060 = vmatpush1.bf16.msra.mxu0 0
    %2061 = vmatprep.subr.bf16.mxu0 0
    %2062 = vmatpush1.bf16.msra.mxu0 0
    %2063 = vmatprep.subr.bf16.mxu0 0
    %2064 = vmatpush1.bf16.msra.mxu0 0
    %2065 = vmatprep.subr.bf16.mxu0 0
    %2066 = vmatpush1.bf16.msra.mxu0 0
    %2067 = vmatprep.subr.bf16.mxu0 0
    %2068 = vmatpush1.bf16.msra.mxu0 0
    %2069 = vmatprep.subr.bf16.mxu0 0
    %2070 = vmatpush1.bf16.msra.mxu0 0
    %2071 = vmatprep.subr.bf16.mxu0 0
    %2072 = vmatpush1.bf16.msra.mxu0 0
    %2073 = vmatprep.subr.bf16.mxu0 0
    %2074 = vmatpush1.bf16.msra.mxu0 0
    %2075 = vmatprep.subr.bf16.mxu0 0
    %2076 = vmatpush1.bf16.msra.mxu0 0
    %2077 = vmatprep.subr.bf16.mxu0 0
    %2078 = vmatpush1.bf16.msra.mxu0 0
    %2079 = vmatprep.subr.bf16.mxu0 0
    %2080 = vmatpush1.bf16.msra.mxu0 0
    %2081 = vmatprep.subr.bf16.mxu0 0
    %2082 = vmatpush1.bf16.msra.mxu0 0
    %2083 = vmatprep.subr.bf16.mxu0 0
    %2084 = vmatpush1.bf16.msra.mxu0 0
    %2085 = vmatprep.subr.bf16.mxu0 0
    %2086 = vmatpush1.bf16.msra.mxu0 0
    %2087 = vmatprep.mubr.bf16.mxu0 0
    %2088 = vmatmul.mubr.bf16.gmra.mrb[0].mxu0 %v2047
    %v2089 = vpop.f32.mrb[0].mxu0
    %v2090 = vadd.f32 0.0, %v2089
    %v2091 = vpop.f32.mrb[0].mxu0
    %v2092 = vpop.f32.mrb[0].mxu0
    %v2093 = vadd.f32 0.0, %v2092
    %v2094 = vpop.f32.mrb[0].mxu0
    %2095 = vmatprep.mubr.bf16.mxu0 0
    %2096 = vmatmul.mubr.bf16.gmra.mrb[0].mxu0 %v2050
    %v2097 = vpop.f32.mrb[0].mxu0
    %v2098 = vadd.f32 0.0, %v2097
    %v2099 = vpop.f32.mrb[0].mxu0
    %v2100 = vpop.f32.mrb[0].mxu0
    %v2101 = vpop.f32.mrb[0].mxu0
    %2102 = vdwg.mxu0
    %2106 = vrot.lane.b32.xlu0 %v1760, 8
    %v2107 = vpop.permute.xlu0 %2106
    %2108 = vrot.lane.b32.xlu0 %v1763, 8
    %v2109 = vpop.permute.xlu0 %2108
    %2110 = vrot.lane.b32.xlu0 %v1768, 8
    %v2111 = vpop.permute.xlu0 %2110
    %2118 = vrot.lane.b32.xlu0 %v1925, 16
    %v2119 = vpop.permute.xlu0 %2118
    %2120 = vrot.lane.b32.xlu0 %v1928, 16
    %v2121 = vpop.permute.xlu0 %2120
    %2122 = vrot.lane.b32.xlu0 %v1933, 16
    %v2123 = vpop.permute.xlu0 %2122
    %2130 = vrot.lane.b32.xlu0 %v2090, 24
    %v2131 = vpop.permute.xlu0 %2130
    %2132 = vrot.lane.b32.xlu0 %v2093, 24
    %v2133 = vpop.permute.xlu0 %2132
    %2134 = vrot.lane.b32.xlu0 %v2098, 24
    %v2135 = vpop.permute.xlu0 %2134
    %v2139 = vsel %vm272, %v1593, %v2107
    %v2140 = vsel %vm272, %v1596, %v2109
    %v2141 = vsel %vm272, %v1601, %v2111
    %v2142 = vsel %vm968, %v2139, %v2119
    %v2143 = vsel %vm968, %v2140, %v2121
    %v2144 = vsel %vm968, %v2141, %v2123
    %v2145 = vsel %vm333, %v2142, %v2131
    %v2146 = vsel %vm333, %v2143, %v2133
    %v2147 = vsel %vm333, %v2144, %v2135
    %v2148 = vpack.c.bf16 %v2146, %v2145
    %v2149 = vpack.c.bf16 %v2147, %v2147
    %v2150 = vlaneseq
    %v2151 = vshrl.u32 %v2150, 7
    %v2152 = vsub.s32 2, %v2151
    %v2153 = vrot.slane %v1363, %v2152
    %v2158 = vunpack.c.l.b16 %v1347
    %v2159 = vunpack.c.l.b16 %v1348
    %v2160 = vunpack.c.l.b16 %v1349
    %v2161 = vunpack.c.l.b16 %v1350
    %v2162 = vpack.c.b16 %v2159, %v2158
    %v2163 = vpack.c.b16 %v2161, %v2160
    %v2167 = vsel %vm32, %v2148, 0
    %v2170 = vsel %vm32, %v2149, 0
    %2172 = vmatprep.subr.bf16.mxu0 0
    %2173 = vmatpush1.bf16.msra.mxu0 %v2162
    %2174 = vmatprep.subr.bf16.mxu0 0
    %2175 = vmatpush1.bf16.msra.mxu0 %v2163
    %2176 = vmatprep.subr.bf16.mxu0 0
    %2177 = vmatpush1.bf16.msra.mxu0 0
    %2178 = vmatprep.subr.bf16.mxu0 0
    %2179 = vmatpush1.bf16.msra.mxu0 0
    %2180 = vmatprep.subr.bf16.mxu0 0
    %2181 = vmatpush1.bf16.msra.mxu0 0
    %2182 = vmatprep.subr.bf16.mxu0 0
    %2183 = vmatpush1.bf16.msra.mxu0 0
    %2184 = vmatprep.subr.bf16.mxu0 0
    %2185 = vmatpush1.bf16.msra.mxu0 0
    %2186 = vmatprep.subr.bf16.mxu0 0
    %2187 = vmatpush1.bf16.msra.mxu0 0
    %2188 = vmatprep.subr.bf16.mxu0 0
    %2189 = vmatpush1.bf16.msra.mxu0 0
    %2190 = vmatprep.subr.bf16.mxu0 0
    %2191 = vmatpush1.bf16.msra.mxu0 0
    %2192 = vmatprep.subr.bf16.mxu0 0
    %2193 = vmatpush1.bf16.msra.mxu0 0
    %2194 = vmatprep.subr.bf16.mxu0 0
    %2195 = vmatpush1.bf16.msra.mxu0 0
    %2196 = vmatprep.subr.bf16.mxu0 0
    %2197 = vmatpush1.bf16.msra.mxu0 0
    %2198 = vmatprep.subr.bf16.mxu0 0
    %2199 = vmatpush1.bf16.msra.mxu0 0
    %2200 = vmatprep.subr.bf16.mxu0 0
    %2201 = vmatpush1.bf16.msra.mxu0 0
    %2202 = vmatprep.subr.bf16.mxu0 0
    %2203 = vmatpush1.bf16.msra.mxu0 0
    %2204 = vmatprep.mubr.bf16.mxu0 0
    %2205 = vmatmul.mubr.bf16.gmra.mrb[0].mxu0 %v2167
    %v2206 = vpop.f32.mrb[0].mxu0
    %v2207 = vadd.f32 %v2153, %v2206
    %v2208 = vpop.f32.mrb[0].mxu0
    %v2209 = vpop.f32.mrb[0].mxu0
    %v2210 = vadd.f32 %v2153, %v2209
    %v2211 = vpop.f32.mrb[0].mxu0
    %2212 = vmatprep.mubr.bf16.mxu0 0
    %2213 = vmatmul.mubr.bf16.gmra.mrb[0].mxu0 %v2170
    %v2214 = vpop.f32.mrb[0].mxu0
    %v2215 = vadd.f32 %v2153, %v2214
    %v2216 = vpop.f32.mrb[0].mxu0
    %v2217 = vpop.f32.mrb[0].mxu0
    %v2218 = vpop.f32.mrb[0].mxu0
    %2219 = vdwg.mxu0
    %v2220 = vadd.f32 %v1340, %v2207
    %v2221 = vadd.f32 %v1341, %v2210
    %v2222 = vadd.f32 %v1342, %v2215
    %v2223 = vsel %vm32, %v2220, 0.0
    %2224 = vadd.xlane.f32.xlu0 %v2223
    %v2225 = vpop.xlane.xlu0 %2224
    %v2226 = vsel %vm32, %v2221, 0.0
    %2227 = vadd.xlane.f32.xlu0 %v2226
    %v2228 = vpop.xlane.xlu0 %2227
    %v2229 = vsel %vm32, %v2222, 0.0
    %2230 = vadd.xlane.f32.xlu0 %v2229
    %v2231 = vpop.xlane.xlu0 %2230
    %v2232 = vmul.f32 %v2225, %v42
    %v2233 = vmul.f32 %v2228, %v42
    %v2234 = vmul.f32 %v2231, %v42
    %v2235 = vsub.f32 %v2220, %v2232
    %v2236 = vsub.f32 %v2221, %v2233
    %v2237 = vsub.f32 %v2222, %v2234
    %v2238 = vmul.f32 %v2235, %v2235
    %v2239 = vmul.f32 %v2236, %v2236
    %v2240 = vmul.f32 %v2237, %v2237
    %v2241 = vsel %vm32, %v2238, 0.0
    %2242 = vadd.xlane.f32.xlu0 %v2241
    %v2243 = vpop.xlane.xlu0 %2242
    %v2244 = vsel %vm32, %v2239, 0.0
    %2245 = vadd.xlane.f32.xlu0 %v2244
    %v2246 = vpop.xlane.xlu0 %2245
    %v2247 = vsel %vm32, %v2240, 0.0
    %2248 = vadd.xlane.f32.xlu0 %v2247
    %v2249 = vpop.xlane.xlu0 %2248
    %v2250 = vmul.f32 %v2243, %v42
    %v2251 = vmul.f32 %v2246, %v42
    %v2252 = vmul.f32 %v2249, %v42
    %v2253 = vadd.f32 %v2250, 1e-12
    %v2254 = vadd.f32 %v2251, 1e-12
    %v2255 = vadd.f32 %v2252, 1e-12
    %v2256 = vrsqrt.pop %v2253
    %v2257 = vrsqrt.pop %v2254
    %v2258 = vrsqrt.pop %v2255
    %v2259 = vmul.f32 %v2235, %v2256
    %v2260 = vmul.f32 %v2236, %v2257
    %v2261 = vmul.f32 %v2237, %v2258
    %v2262 = vlaneseq
    %v2263 = vshrl.u32 %v2262, 7
    %v2264 = vsub.s32 3, %v2263
    %v2265 = vrot.slane %v1363, %v2264
    %v2266 = vmul.f32 %v2259, %v2265
    %v2267 = vmul.f32 %v2260, %v2265
    %v2268 = vmul.f32 %v2261, %v2265
    %v2269 = vlaneseq
    %v2270 = vshrl.u32 %v2269, 7
    %v2271 = vsub.s32 4, %v2270
    %v2272 = vrot.slane %v1363, %v2271
    %v2273 = vadd.f32 %v2266, %v2272
    %v2274 = vadd.f32 %v2267, %v2272
    %v2275 = vadd.f32 %v2268, %v2272
    %v2276 = vpack.c.bf16 %v2274, %v2273
    %v2277 = vpack.c.bf16 %v2275, %v2275
    %v2278 = vlaneseq
    %v2279 = vshrl.u32 %v2278, 7
    %v2280 = vsub.s32 1, %v2279
    %v2281 = vrot.slane %v1363, %v2280
    %v2286 = vunpack.c.l.b16 %v1351
    %v2287 = vunpack.c.l.b16 %v1352
    %v2288 = vunpack.c.l.b16 %v1353
    %v2289 = vunpack.c.l.b16 %v1354
    %v2290 = vpack.c.b16 %v2287, %v2286
    %v2291 = vpack.c.b16 %v2289, %v2288
    %v2295 = vsel %vm32, %v2276, 0
    %v2298 = vsel %vm32, %v2277, 0
    %2300 = vmatprep.subr.bf16.mxu0 0
    %2301 = vmatpush1.bf16.msra.mxu0 %v2290
    %2302 = vmatprep.subr.bf16.mxu0 0
    %2303 = vmatpush1.bf16.msra.mxu0 %v2291
    %2304 = vmatprep.subr.bf16.mxu0 0
    %2305 = vmatpush1.bf16.msra.mxu0 0
    %2306 = vmatprep.subr.bf16.mxu0 0
    %2307 = vmatpush1.bf16.msra.mxu0 0
    %2308 = vmatprep.subr.bf16.mxu0 0
    %2309 = vmatpush1.bf16.msra.mxu0 0
    %2310 = vmatprep.subr.bf16.mxu0 0
    %2311 = vmatpush1.bf16.msra.mxu0 0
    %2312 = vmatprep.subr.bf16.mxu0 0
    %2313 = vmatpush1.bf16.msra.mxu0 0
    %2314 = vmatprep.subr.bf16.mxu0 0
    %2315 = vmatpush1.bf16.msra.mxu0 0
    %2316 = vmatprep.subr.bf16.mxu0 0
    %2317 = vmatpush1.bf16.msra.mxu0 0
    %2318 = vmatprep.subr.bf16.mxu0 0
    %2319 = vmatpush1.bf16.msra.mxu0 0
    %2320 = vmatprep.subr.bf16.mxu0 0
    %2321 = vmatpush1.bf16.msra.mxu0 0
    %2322 = vmatprep.subr.bf16.mxu0 0
    %2323 = vmatpush1.bf16.msra.mxu0 0
    %2324 = vmatprep.subr.bf16.mxu0 0
    %2325 = vmatpush1.bf16.msra.mxu0 0
    %2326 = vmatprep.subr.bf16.mxu0 0
    %2327 = vmatpush1.bf16.msra.mxu0 0
    %2328 = vmatprep.subr.bf16.mxu0 0
    %2329 = vmatpush1.bf16.msra.mxu0 0
    %2330 = vmatprep.subr.bf16.mxu0 0
    %2331 = vmatpush1.bf16.msra.mxu0 0
    %2332 = vmatprep.mubr.bf16.mxu0 0
    %2333 = vmatmul.mubr.bf16.gmra.mrb[0].mxu0 %v2295
    %v2334 = vpop.f32.mrb[0].mxu0
    %v2335 = vadd.f32 %v2281, %v2334
    %v2336 = vpop.f32.mrb[0].mxu0
    %v2337 = vpop.f32.mrb[0].mxu0
    %v2338 = vadd.f32 %v2281, %v2337
    %v2339 = vpop.f32.mrb[0].mxu0
    %2340 = vmatprep.mubr.bf16.mxu0 0
    %2341 = vmatmul.mubr.bf16.gmra.mrb[0].mxu0 %v2298
    %v2342 = vpop.f32.mrb[0].mxu0
    %v2343 = vadd.f32 %v2281, %v2342
    %v2344 = vpop.f32.mrb[0].mxu0
    %v2345 = vpop.f32.mrb[0].mxu0
    %v2346 = vpop.f32.mrb[0].mxu0
    %2347 = vdwg.mxu0
    %v2348 = vmul.f32 %v2335, 0.5
    %v2349 = vmul.f32 %v2338, 0.5
    %v2350 = vmul.f32 %v2343, 0.5
    %v2351 = vmul.f32 %v2335, 0.044715
    %v2352 = vmul.f32 %v2338, 0.044715
    %v2353 = vmul.f32 %v2343, 0.044715
    %v2354 = vmul.f32 %v2351, %v2335
    %v2355 = vmul.f32 %v2352, %v2338
    %v2356 = vmul.f32 %v2353, %v2343
    %v2357 = vmul.f32 %v2354, %v2335
    %v2358 = vmul.f32 %v2355, %v2338
    %v2359 = vmul.f32 %v2356, %v2343
    %v2360 = vadd.f32 %v2335, %v2357
    %v2361 = vadd.f32 %v2338, %v2358
    %v2362 = vadd.f32 %v2343, %v2359
    %v2363 = vmul.f32 %v2360, 0.7978846
    %v2364 = vmul.f32 %v2361, 0.7978846
    %v2365 = vmul.f32 %v2362, 0.7978846
    %v2366 = vtanh.pop %v2363
    %v2367 = vtanh.pop %v2364
    %v2368 = vtanh.pop %v2365
    %v2369 = vadd.f32 %v2366, 1.0
    %v2370 = vadd.f32 %v2367, 1.0
    %v2371 = vadd.f32 %v2368, 1.0
    %v2372 = vmul.f32 %v2348, %v2369
    %v2373 = vmul.f32 %v2349, %v2370
    %v2374 = vmul.f32 %v2350, %v2371
    %v2375 = vpack.c.bf16 %v2373, %v2372
    %v2376 = vpack.c.bf16 %v2374, %v2374
    %v2377 = vlaneseq
    %v2378 = vshrl.u32 %v2377, 7
    %v2379 = vsub.s32 5, %v2378
    %v2380 = vrot.slane %v1363, %v2379
    %v2389 = vunpack.c.l.b16 %v1355
    %v2390 = vunpack.c.l.b16 %v1356
    %v2391 = vunpack.c.l.b16 %v1357
    %v2392 = vunpack.c.l.b16 %v1358
    %v2393 = vunpack.c.l.b16 %v1359
    %v2394 = vunpack.c.l.b16 %v1360
    %v2395 = vunpack.c.l.b16 %v1361
    %v2396 = vunpack.c.l.b16 %v1362
    %v2397 = vpack.c.b16 %v2390, %v2389
    %v2398 = vpack.c.b16 %v2392, %v2391
    %v2399 = vpack.c.b16 %v2394, %v2393
    %v2400 = vpack.c.b16 %v2396, %v2395
    %v2406 = vsel %vm1232, %v2375, 0
    %v2409 = vsel %vm1232, %v2376, 0
    %2411 = vmatprep.subr.bf16.mxu0 0
    %2412 = vmatpush1.bf16.msra.mxu0 %v2397
    %2413 = vmatprep.subr.bf16.mxu0 0
    %2414 = vmatpush1.bf16.msra.mxu0 %v2398
    %2415 = vmatprep.subr.bf16.mxu0 0
    %2416 = vmatpush1.bf16.msra.mxu0 %v2399
    %2417 = vmatprep.subr.bf16.mxu0 0
    %2418 = vmatpush1.bf16.msra.mxu0 %v2400
    %2419 = vmatprep.subr.bf16.mxu0 0
    %2420 = vmatpush1.bf16.msra.mxu0 0
    %2421 = vmatprep.subr.bf16.mxu0 0
    %2422 = vmatpush1.bf16.msra.mxu0 0
    %2423 = vmatprep.subr.bf16.mxu0 0
    %2424 = vmatpush1.bf16.msra.mxu0 0
    %2425 = vmatprep.subr.bf16.mxu0 0
    %2426 = vmatpush1.bf16.msra.mxu0 0
    %2427 = vmatprep.subr.bf16.mxu0 0
    %2428 = vmatpush1.bf16.msra.mxu0 0
    %2429 = vmatprep.subr.bf16.mxu0 0
    %2430 = vmatpush1.bf16.msra.mxu0 0
    %2431 = vmatprep.subr.bf16.mxu0 0
    %2432 = vmatpush1.bf16.msra.mxu0 0
    %2433 = vmatprep.subr.bf16.mxu0 0
    %2434 = vmatpush1.bf16.msra.mxu0 0
    %2435 = vmatprep.subr.bf16.mxu0 0
    %2436 = vmatpush1.bf16.msra.mxu0 0
    %2437 = vmatprep.subr.bf16.mxu0 0
    %2438 = vmatpush1.bf16.msra.mxu0 0
    %2439 = vmatprep.subr.bf16.mxu0 0
    %2440 = vmatpush1.bf16.msra.mxu0 0
    %2441 = vmatprep.subr.bf16.mxu0 0
    %2442 = vmatpush1.bf16.msra.mxu0 0
    %2443 = vmatprep.mubr.bf16.mxu0 0
    %2444 = vmatmul.mubr.bf16.gmra.mrb[0].mxu0 %v2406
    %v2445 = vpop.f32.mrb[0].mxu0
    %v2446 = vadd.f32 %v2380, %v2445
    %v2447 = vpop.f32.mrb[0].mxu0
    %v2448 = vpop.f32.mrb[0].mxu0
    %v2449 = vadd.f32 %v2380, %v2448
    %v2450 = vpop.f32.mrb[0].mxu0
    %2451 = vmatprep.mubr.bf16.mxu0 0
    %2452 = vmatmul.mubr.bf16.gmra.mrb[0].mxu0 %v2409
    %v2453 = vpop.f32.mrb[0].mxu0
    %v2454 = vadd.f32 %v2380, %v2453
    %v2455 = vpop.f32.mrb[0].mxu0
    %v2456 = vpop.f32.mrb[0].mxu0
    %v2457 = vpop.f32.mrb[0].mxu0
    %2458 = vdwg.mxu0
    %v2459 = vadd.f32 %v2273, %v2446
    %v2460 = vadd.f32 %v2274, %v2449
    %v2461 = vadd.f32 %v2275, %v2454
    %v2462 = vsel %vm32, %v2459, 0.0
    %2463 = vadd.xlane.f32.xlu0 %v2462
    %v2464 = vpop.xlane.xlu0 %2463
    %v2465 = vsel %vm32, %v2460, 0.0
    %2466 = vadd.xlane.f32.xlu0 %v2465
    %v2467 = vpop.xlane.xlu0 %2466
    %v2468 = vsel %vm32, %v2461, 0.0
    %2469 = vadd.xlane.f32.xlu0 %v2468
    %v2470 = vpop.xlane.xlu0 %2469
    %v2471 = vmul.f32 %v2464, %v42
    %v2472 = vmul.f32 %v2467, %v42
    %v2473 = vmul.f32 %v2470, %v42
    %v2474 = vsub.f32 %v2459, %v2471
    %v2475 = vsub.f32 %v2460, %v2472
    %v2476 = vsub.f32 %v2461, %v2473
    %v2477 = vmul.f32 %v2474, %v2474
    %v2478 = vmul.f32 %v2475, %v2475
    %v2479 = vmul.f32 %v2476, %v2476
    %v2480 = vsel %vm32, %v2477, 0.0
    %2481 = vadd.xlane.f32.xlu0 %v2480
    %v2482 = vpop.xlane.xlu0 %2481
    %v2483 = vsel %vm32, %v2478, 0.0
    %2484 = vadd.xlane.f32.xlu0 %v2483
    %v2485 = vpop.xlane.xlu0 %2484
    %v2486 = vsel %vm32, %v2479, 0.0
    %2487 = vadd.xlane.f32.xlu0 %v2486
    %v2488 = vpop.xlane.xlu0 %2487
    %v2489 = vmul.f32 %v2482, %v42
    %v2490 = vmul.f32 %v2485, %v42
    %v2491 = vmul.f32 %v2488, %v42
    %v2492 = vadd.f32 %v2489, 1e-12
    %v2493 = vadd.f32 %v2490, 1e-12
    %v2494 = vadd.f32 %v2491, 1e-12
    %v2495 = vrsqrt.pop %v2492
    %v2496 = vrsqrt.pop %v2493
    %v2497 = vrsqrt.pop %v2494
    %v2498 = vmul.f32 %v2474, %v2495
    %v2499 = vmul.f32 %v2475, %v2496
    %v2500 = vmul.f32 %v2476, %v2497
    %v2501 = vlaneseq
    %v2502 = vshrl.u32 %v2501, 7
    %v2503 = vsub.s32 6, %v2502
    %v2504 = vrot.slane %v1363, %v2503
    %v2505 = vmul.f32 %v2498, %v2504
    %v2506 = vmul.f32 %v2499, %v2504
    %v2507 = vmul.f32 %v2500, %v2504
    %v2508 = vlaneseq
    %v2509 = vshrl.u32 %v2508, 7
    %v2510 = vsub.s32 7, %v2509
    %v2511 = vrot.slane %v1363, %v2510
    %v2512 = vadd.f32 %v2505, %v2511
    %v2513 = vadd.f32 %v2506, %v2511
    %v2514 = vadd.f32 %v2507, %v2511
    %v2515 = vld [vmem:[%s3 + $0x50] sm:$0x3]
    %v2516 = vpack.c.bf16 %v2515, %v2515
    %v2517 = vpack.c.bf16 %v2513, %v2512
    %v2518 = vpack.c.bf16 %v2514, %v2514
    %v2520 = vsel %vm333, %v2516, 0
    %v2523 = vsel %vm380, %v2518, 0
    %2525 = vmatprep.subr.bf16.mxu0 0
    %2526 = vmatpush1.bf16.msra.mxu0 %v2517
    %2527 = vmatprep.subr.bf16.mxu0 0
    %2528 = vmatpush1.bf16.msra.mxu0 %v2523
    %2529 = vmatprep.subr.bf16.mxu0 0
    %2530 = vmatpush1.bf16.msra.mxu0 0
    %2531 = vmatprep.subr.bf16.mxu0 0
    %2532 = vmatpush1.bf16.msra.mxu0 0
    %2533 = vmatprep.subr.bf16.mxu0 0
    %2534 = vmatpush1.bf16.msra.mxu0 0
    %2535 = vmatprep.subr.bf16.mxu0 0
    %2536 = vmatpush1.bf16.msra.mxu0 0
    %2537 = vmatprep.subr.bf16.mxu0 0
    %2538 = vmatpush1.bf16.msra.mxu0 0
    %2539 = vmatprep.subr.bf16.mxu0 0
    %2540 = vmatpush1.bf16.msra.mxu0 0
    %2541 = vmatprep.subr.bf16.mxu0 0
    %2542 = vmatpush1.bf16.msra.mxu0 0
    %2543 = vmatprep.subr.bf16.mxu0 0
    %2544 = vmatpush1.bf16.msra.mxu0 0
    %2545 = vmatprep.subr.bf16.mxu0 0
    %2546 = vmatpush1.bf16.msra.mxu0 0
    %2547 = vmatprep.subr.bf16.mxu0 0
    %2548 = vmatpush1.bf16.msra.mxu0 0
    %2549 = vmatprep.subr.bf16.mxu0 0
    %2550 = vmatpush1.bf16.msra.mxu0 0
    %2551 = vmatprep.subr.bf16.mxu0 0
    %2552 = vmatpush1.bf16.msra.mxu0 0
    %2553 = vmatprep.subr.bf16.mxu0 0
    %2554 = vmatpush1.bf16.msra.mxu0 0
    %2555 = vmatprep.subr.bf16.mxu0 0
    %2556 = vmatpush1.bf16.msra.mxu0 0
    %2557 = vmatprep.mubr.bf16.mxu0 0
    %2558 = vmatmul.mubr.bf16.gmra.mrb[0].mxu0 %v2520
    %v2559 = vpop.f32.mrb[0].mxu0
    %v2560 = vadd.f32 0.0, %v2559
    %v2561 = vpop.f32.mrb[0].mxu0
    %v2562 = vpop.f32.mrb[0].mxu0
    %v2563 = vpop.f32.mrb[0].mxu0
    %2564 = vdwg.mxu0
    %v2565 = vld [vmem:[%s3 + $0x68] sm:$0x3]
    %v2566 = vld [vmem:[%s2 + $0xa0] sm:$0xf]
    %v2567 = vld [vmem:[%s2 + $0xa4] sm:$0xf]
    %v2568 = vld [vmem:[%s2 + $0xa8] sm:$0xf]
    %v2569 = vld [vmem:[%s2 + $0xac] sm:$0xf]
    %v2570 = vld [vmem:[%s2 + $0xb0] sm:$0xf]
    %v2571 = vld [vmem:[%s2 + $0xb4] sm:$0xf]
    %v2572 = vld [vmem:[%s2 + $0xb8] sm:$0xf]
    %v2573 = vld [vmem:[%s2 + $0xbc] sm:$0xf]
    %v2574 = vpack.c.bf16 %v2560, %v2560
    %v2575 = vlaneseq
    %v2576 = vshrl.u32 %v2575, 7
    %v2577 = vsub.s32 0, %v2576
    %v2578 = vrot.slane %v2565, %v2577
    %v2583 = vunpack.c.l.b16 %v2566
    %v2584 = vunpack.c.l.b16 %v2567
    %v2585 = vunpack.c.l.b16 %v2568
    %v2586 = vunpack.c.l.b16 %v2569
    %v2587 = vpack.c.b16 %v2584, %v2583
    %v2588 = vpack.c.b16 %v2586, %v2585
    %v2592 = vsel %vm32, %v2574, 0
    %2594 = vmatprep.subr.bf16.mxu0 0
    %2595 = vmatpush1.bf16.msra.mxu0 %v2587
    %2596 = vmatprep.subr.bf16.mxu0 0
    %2597 = vmatpush1.bf16.msra.mxu0 %v2588
    %2598 = vmatprep.subr.bf16.mxu0 0
    %2599 = vmatpush1.bf16.msra.mxu0 0
    %2600 = vmatprep.subr.bf16.mxu0 0
    %2601 = vmatpush1.bf16.msra.mxu0 0
    %2602 = vmatprep.subr.bf16.mxu0 0
    %2603 = vmatpush1.bf16.msra.mxu0 0
    %2604 = vmatprep.subr.bf16.mxu0 0
    %2605 = vmatpush1.bf16.msra.mxu0 0
    %2606 = vmatprep.subr.bf16.mxu0 0
    %2607 = vmatpush1.bf16.msra.mxu0 0
    %2608 = vmatprep.subr.bf16.mxu0 0
    %2609 = vmatpush1.bf16.msra.mxu0 0
    %2610 = vmatprep.subr.bf16.mxu0 0
    %2611 = vmatpush1.bf16.msra.mxu0 0
    %2612 = vmatprep.subr.bf16.mxu0 0
    %2613 = vmatpush1.bf16.msra.mxu0 0
    %2614 = vmatprep.subr.bf16.mxu0 0
    %2615 = vmatpush1.bf16.msra.mxu0 0
    %2616 = vmatprep.subr.bf16.mxu0 0
    %2617 = vmatpush1.bf16.msra.mxu0 0
    %2618 = vmatprep.subr.bf16.mxu0 0
    %2619 = vmatpush1.bf16.msra.mxu0 0
    %2620 = vmatprep.subr.bf16.mxu0 0
    %2621 = vmatpush1.bf16.msra.mxu0 0
    %2622 = vmatprep.subr.bf16.mxu0 0
    %2623 = vmatpush1.bf16.msra.mxu0 0
    %2624 = vmatprep.subr.bf16.mxu0 0
    %2625 = vmatpush1.bf16.msra.mxu0 0
    %2626 = vmatprep.mubr.bf16.mxu0 0
    %2627 = vmatmul.mubr.bf16.gmra.mrb[0].mxu0 %v2592
    %v2628 = vpop.f32.mrb[0].mxu0
    %v2629 = vadd.f32 %v2578, %v2628
    %v2630 = vpop.f32.mrb[0].mxu0
    %v2631 = vpop.f32.mrb[0].mxu0
    %v2632 = vpop.f32.mrb[0].mxu0
    %2633 = vdwg.mxu0
    %v2634 = vtanh.pop %v2629
    %v2635 = vpack.c.bf16 %v2634, %v2634
    %v2636 = vlaneseq
    %v2637 = vshrl.u32 %v2636, 7
    %v2638 = vsub.s32 1, %v2637
    %v2639 = vrot.slane %v2565, %v2638
    %v2644 = vunpack.c.l.b16 %v2570
    %v2645 = vunpack.c.l.b16 %v2571
    %v2646 = vunpack.c.l.b16 %v2572
    %v2647 = vunpack.c.l.b16 %v2573
    %v2648 = vpack.c.b16 %v2645, %v2644
    %v2649 = vpack.c.b16 %v2647, %v2646
    %v2653 = vsel %vm32, %v2635, 0
    %2655 = vmatprep.subr.bf16.mxu0 0
    %2656 = vmatpush1.bf16.msra.mxu0 %v2648
    %2657 = vmatprep.subr.bf16.mxu0 0
    %2658 = vmatpush1.bf16.msra.mxu0 %v2649
    %2659 = vmatprep.subr.bf16.mxu0 0
    %2660 = vmatpush1.bf16.msra.mxu0 0
    %2661 = vmatprep.subr.bf16.mxu0 0
    %2662 = vmatpush1.bf16.msra.mxu0 0
    %2663 = vmatprep.subr.bf16.mxu0 0
    %2664 = vmatpush1.bf16.msra.mxu0 0
    %2665 = vmatprep.subr.bf16.mxu0 0
    %2666 = vmatpush1.bf16.msra.mxu0 0
    %2667 = vmatprep.subr.bf16.mxu0 0
    %2668 = vmatpush1.bf16.msra.mxu0 0
    %2669 = vmatprep.subr.bf16.mxu0 0
    %2670 = vmatpush1.bf16.msra.mxu0 0
    %2671 = vmatprep.subr.bf16.mxu0 0
    %2672 = vmatpush1.bf16.msra.mxu0 0
    %2673 = vmatprep.subr.bf16.mxu0 0
    %2674 = vmatpush1.bf16.msra.mxu0 0
    %2675 = vmatprep.subr.bf16.mxu0 0
    %2676 = vmatpush1.bf16.msra.mxu0 0
    %2677 = vmatprep.subr.bf16.mxu0 0
    %2678 = vmatpush1.bf16.msra.mxu0 0
    %2679 = vmatprep.subr.bf16.mxu0 0
    %2680 = vmatpush1.bf16.msra.mxu0 0
    %2681 = vmatprep.subr.bf16.mxu0 0
    %2682 = vmatpush1.bf16.msra.mxu0 0
    %2683 = vmatprep.subr.bf16.mxu0 0
    %2684 = vmatpush1.bf16.msra.mxu0 0
    %2685 = vmatprep.subr.bf16.mxu0 0
    %2686 = vmatpush1.bf16.msra.mxu0 0
    %2687 = vmatprep.mubr.bf16.mxu0 0
    %2688 = vmatmul.mubr.bf16.gmra.mrb[0].mxu0 %v2653
    %v2689 = vpop.f32.mrb[0].mxu0
    %v2690 = vadd.f32 %v2639, %v2689
    %v2691 = vpop.f32.mrb[0].mxu0
    %v2692 = vpop.f32.mrb[0].mxu0
    %v2693 = vpop.f32.mrb[0].mxu0
    %2694 = vdwg.mxu0
    %vm2695 = vcmask 17408
    %v2696 = vsel %vm2695, %v2690, -inf
    %2697 = vmax.xlane.f32.xlu0 %v2696
    %v2698 = vpop.xlane.xlu0 %2697
    %v2699 = vsub.f32 %v2690, %v2698
    %v2700 = vmul.f32 %v2699, 1.442695
    %v2701 = vpow.pop %v2700
    %v2702 = vsel %vm2695, %v2701, 0.0
    %2703 = vadd.xlane.f32.xlu0 %v2702
    %v2704 = vpop.xlane.xlu0 %2703
    %v2705 = vrcp.pop %v2704
    %v2706 = vmul.f32 %v2701, %v2705
    %2707 = vst.msk [vmem:[#allocation2] sm:$0x3] %vm2695, %v2706
    // Predicated region
    $region18: #{forward.1} parent=1 // pred_check
      _
    $region19: #{forward.1} parent=1 // pred_check_branch
      %2709 = sbr.rel (0) target = $region21
    $region20: #{forward.1} parent=1 // pred_region
      %s2711 = ssub.s32 32, 32
      %2712 = vsyncadd [#allocation3], %s2711
      %s2714 = sshll.u32 [#allocation2], 4
      %s2715 = int_to_ptr.vmem [resolvable:$true] %s2714
      %2717 = dma.vmem_to_hbm [thread:$0]  %s2715, 32, %s4, [#allocation3]
    $region21: #{forward.1} parent=1 // pred_fallthru
      _
    // Predicated region
    $region22: #{forward.1} parent=1 // pred_check
      _
    $region23: #{forward.1} parent=1 // pred_check_branch
      %2719 = sbr.rel (0) target = $region25
    $region24: #{forward.1} parent=1 // pred_region
      %2720 = dma.done [#allocation3], 32
    $region25: #{forward.1} parent=1 // pred_fallthru
      _
    %2721 = vsyncpa [#allocation3], 1

</llo_original>
